<compile_context>
chip_gen: v7x
topology: tpu7x:2x2x1
jax: 0.10.0
libtpu: 0.0.40
codegen_flags: <defaults>
</compile_context>

<pallas_src>
import functools

import numpy as np
import jax
import jax.numpy as jnp
from jax.experimental import pallas as pl
from jax.experimental.pallas import tpu as pltpu


# --------------------------- model configuration ----------------------------

INPUT_SHAPE = (1, 16, 16)                # (C, H, W)
CONV_FILTERS = [8, 16]
CONV_KERNELS = [3, 3]
CONV_STRIDES = [2, 2]
LATENT_DIM = 32
DEC_OUT_PAD = [1, 1]
NUM_LAYERS = len(CONV_FILTERS)

MAX_BATCH_BLOCK = 512                    # review: 256-512 rows per grid step


def _round_up(x, m):
    return ((x + m - 1) // m) * m


def _layer_geometry():
    """Static per-layer output geometry (h, w, c); padding=1 throughout."""
    h, w = INPUT_SHAPE[1], INPUT_SHAPE[2]
    enc = []
    for i in range(NUM_LAYERS):
        h = (h + 2 - CONV_KERNELS[i]) // CONV_STRIDES[i] + 1
        w = (w + 2 - CONV_KERNELS[i]) // CONV_STRIDES[i] + 1
        enc.append((h, w, CONV_FILTERS[i]))
    dec = []
    for i in range(NUM_LAYERS - 1, 0, -1):
        h = (h - 1) * CONV_STRIDES[i] - 2 + CONV_KERNELS[i] + DEC_OUT_PAD[i]
        w = (w - 1) * CONV_STRIDES[i] - 2 + CONV_KERNELS[i] + DEC_OUT_PAD[i]
        dec.append((h, w, CONV_FILTERS[i - 1]))
    h = (h - 1) * CONV_STRIDES[0] - 2 + CONV_KERNELS[0] + DEC_OUT_PAD[0]
    w = (w - 1) * CONV_STRIDES[0] - 2 + CONV_KERNELS[0] + DEC_OUT_PAD[0]
    return tuple(enc), tuple(dec), (h, w, 1)


ENC_GEOM, DEC_GEOM, OUT_GEOM = _layer_geometry()
SBB_SHAPE = (ENC_GEOM[-1][2], ENC_GEOM[-1][0], ENC_GEOM[-1][1])   # (C,H,W) = (16,4,4)
SBB = SBB_SHAPE[0] * SBB_SHAPE[1] * SBB_SHAPE[2]                  # 256


# --------------- static layout of the packed small-vector array --------------

def _build_cfgs():
    rows = {}
    r = 0

    def add(name):
        nonlocal r
        rows[name] = r
        r += 1

    enc_cfg = []
    for i in range(NUM_LAYERS):
        h, w, c = ENC_GEOM[i]
        add(f"enc{i}_bias"); add(f"enc{i}_gamma"); add(f"enc{i}_beta")
        enc_cfg.append((h * w, c, rows[f"enc{i}_bias"],
                        rows[f"enc{i}_gamma"], rows[f"enc{i}_beta"]))
    add("enc_fc_bias"); add("dec_fc_bias")
    fc_cfg = (LATENT_DIM, SBB, rows["enc_fc_bias"], rows["dec_fc_bias"])
    dec_cfg = []
    for idx, i in enumerate(range(NUM_LAYERS - 1, 0, -1)):
        h, w, c = DEC_GEOM[idx]
        add(f"dec{i}_bias"); add(f"dec{i}_gamma"); add(f"dec{i}_beta")
        dec_cfg.append((h * w, c, rows[f"dec{i}_bias"],
                        rows[f"dec{i}_gamma"], rows[f"dec{i}_beta"]))
    add("dec0_bias")
    ho, wo, co = OUT_GEOM
    last_cfg = (ho * wo * co, rows["dec0_bias"])
    widths = [p * c for (p, c, *_rest) in enc_cfg + dec_cfg]
    widths += [LATENT_DIM, SBB, ho * wo * co]
    packed_width = _round_up(max(widths), 128)
    return tuple(enc_cfg), fc_cfg, tuple(dec_cfg), last_cfg, rows, r, packed_width


ENC_CFG, FC_CFG, DEC_CFG, LAST_CFG, PACKED_ROWS, NUM_PACKED, PACKED_WIDTH = _build_cfgs()


# ------------------------------- parameters ---------------------------------

def init_params(key):
    """PyTorch-layout parameters (Conv2d: (Co,Ci,kh,kw), ConvT: (Ci,Co,kh,kw),
    Linear: (out,in))."""
    p = {}
    keys = iter(jax.random.split(key, 32))

    def w(shape, scale=0.1):
        return scale * jax.random.normal(next(keys), shape, jnp.float32)

    in_c = INPUT_SHAPE[0]
    for i in range(NUM_LAYERS):
        p[f"enc_conv{i}_w"] = w((CONV_FILTERS[i], in_c, CONV_KERNELS[i], CONV_KERNELS[i]))
        p[f"enc_conv{i}_b"] = w((CONV_FILTERS[i],))
        p[f"enc_bn{i}_g"] = jnp.ones((CONV_FILTERS[i],), jnp.float32)
        p[f"enc_bn{i}_b"] = jnp.zeros((CONV_FILTERS[i],), jnp.float32)
        in_c = CONV_FILTERS[i]
    p["enc_fc_w"] = w((LATENT_DIM, SBB))
    p["enc_fc_b"] = w((LATENT_DIM,))

    p["dec_fc_w"] = w((SBB, LATENT_DIM))
    p["dec_fc_b"] = w((SBB,))
    in_c = CONV_FILTERS[-1]
    for i in range(NUM_LAYERS - 1, 0, -1):
        out_c = CONV_FILTERS[i - 1]
        p[f"dec_convT{i}_w"] = w((in_c, out_c, CONV_KERNELS[i], CONV_KERNELS[i]))
        p[f"dec_convT{i}_b"] = w((out_c,))
        p[f"dec_bn{i}_g"] = jnp.ones((out_c,), jnp.float32)
        p[f"dec_bn{i}_b"] = jnp.zeros((out_c,), jnp.float32)
        in_c = out_c
    p["dec_convT0_w"] = w((CONV_FILTERS[0], 1, CONV_KERNELS[0], CONV_KERNELS[0]))
    p["dec_convT0_b"] = w((1,))
    return p


# ------------------- init-time weight pre-transformation --------------------
# (host-side numpy; runs once per parameter set, never in the forward path)

def _conv_toeplitz(w_oihw, h_in, w_in, stride, pad):
    """Dense T s.t. flat_out = flat_in @ T reproduces PyTorch Conv2d.
    Flat layout: index = (h * W + w) * C + c (channels minor)."""
    c_out, c_in, kh, kw = w_oihw.shape
    h_out = (h_in + 2 * pad - kh) // stride + 1
    w_out = (w_in + 2 * pad - kw) // stride + 1
    t = np.zeros((h_in * w_in * c_in, h_out * w_out * c_out), np.float32)
    for ho in range(h_out):
        for wo in range(w_out):
            col0 = (ho * w_out + wo) * c_out
            for ki in range(kh):
                for kj in range(kw):
                    hi = ho * stride - pad + ki
                    wi = wo * stride - pad + kj
                    if 0 <= hi < h_in and 0 <= wi < w_in:
                        row0 = (hi * w_in + wi) * c_in
                        t[row0:row0 + c_in, col0:col0 + c_out] += w_oihw[:, :, ki, kj].T
    return t, h_out, w_out


def _conv_transpose_toeplitz(w_iohw, h_in, w_in, stride, pad, out_pad):
    """Dense T s.t. flat_out = flat_in @ T reproduces PyTorch ConvTranspose2d."""
    c_in, c_out, kh, kw = w_iohw.shape
    h_out = (h_in - 1) * stride - 2 * pad + kh + out_pad
    w_out = (w_in - 1) * stride - 2 * pad + kw + out_pad
    t = np.zeros((h_in * w_in * c_in, h_out * w_out * c_out), np.float32)
    for hi in range(h_in):
        for wi in range(w_in):
            row0 = (hi * w_in + wi) * c_in
            for ki in range(kh):
                for kj in range(kw):
                    ho = hi * stride - pad + ki
                    wo = wi * stride - pad + kj
                    if 0 <= ho < h_out and 0 <= wo < w_out:
                        col0 = (ho * w_out + wo) * c_out
                        t[row0:row0 + c_in, col0:col0 + c_out] += w_iohw[:, :, ki, kj]
    return t, h_out, w_out


def _bn_selection(p, c):
    """S (P*C, C): flat column p*C + c' belongs to channel c'."""
    return np.tile(np.eye(c, dtype=np.float32), (p, 1))


def prepare_params(params):
    """One-time transform of PyTorch-layout params into the fused-kernel
    operand tuple: bf16 Toeplitz conv matrices / FC weights / BN selection
    matrices, plus ONE packed f32 array holding all small per-channel vectors."""
    mxu_dtype = jnp.bfloat16            # review: bf16 MXU operands (exact for 0/1 S)
    weights = []
    packed = np.zeros((NUM_PACKED, PACKED_WIDTH), np.float32)

    def put(name, v):
        v = np.asarray(v, np.float32).reshape(-1)
        packed[PACKED_ROWS[name], :v.shape[0]] = v

    # ----- encoder conv stages -----
    h, w = INPUT_SHAPE[1], INPUT_SHAPE[2]
    for i in range(NUM_LAYERS):
        wmat = np.asarray(params[f"enc_conv{i}_w"], np.float32)
        t, h, w = _conv_toeplitz(wmat, h, w, CONV_STRIDES[i], 1)
        c = CONV_FILTERS[i]
        sel = _bn_selection(h * w, c)
        weights += [jnp.asarray(t, mxu_dtype),
                    jnp.asarray(sel, mxu_dtype),
                    jnp.asarray(np.ascontiguousarray(sel.T), mxu_dtype)]
        put(f"enc{i}_bias", np.tile(np.asarray(params[f"enc_conv{i}_b"], np.float32), h * w))
        put(f"enc{i}_gamma", params[f"enc_bn{i}_g"])
        put(f"enc{i}_beta", params[f"enc_bn{i}_b"])

    # ----- bottleneck linears (match PyTorch NCHW flatten / unflatten order) -----
    c_s, h_s, w_s = SBB_SHAPE
    perm = np.zeros(SBB, np.int64)          # perm[hwc index] = PyTorch chw index
    for c in range(c_s):
        for hh in range(h_s):
            for ww in range(w_s):
                perm[(hh * w_s + ww) * c_s + c] = c * h_s * w_s + hh * w_s + ww
    w_enc = np.asarray(params["enc_fc_w"], np.float32).T[perm, :]   # (SBB_hwc, LATENT)
    w_dec = np.asarray(params["dec_fc_w"], np.float32)[perm, :].T   # (LATENT, SBB_hwc)
    weights += [jnp.asarray(w_enc, mxu_dtype), jnp.asarray(w_dec, mxu_dtype)]
    put("enc_fc_bias", params["enc_fc_b"])
    put("dec_fc_bias", np.asarray(params["dec_fc_b"], np.float32)[perm])

    # ----- decoder transposed-conv stages (ConvT -> ReLU -> BN) -----
    h, w = h_s, w_s
    for i in range(NUM_LAYERS - 1, 0, -1):
        wmat = np.asarray(params[f"dec_convT{i}_w"], np.float32)
        t, h, w = _conv_transpose_toeplitz(wmat, h, w, CONV_STRIDES[i], 1, DEC_OUT_PAD[i])
        c = CONV_FILTERS[i - 1]
        sel = _bn_selection(h * w, c)
        weights += [jnp.asarray(t, mxu_dtype),
                    jnp.asarray(sel, mxu_dtype),
                    jnp.asarray(np.ascontiguousarray(sel.T), mxu_dtype)]
        put(f"dec{i}_bias", np.tile(np.asarray(params[f"dec_convT{i}_b"], np.float32), h * w))
        put(f"dec{i}_gamma", params[f"dec_bn{i}_g"])
        put(f"dec{i}_beta", params[f"dec_bn{i}_b"])

    # ----- final transposed conv (sigmoid applied in-kernel) -----
    wmat = np.asarray(params["dec_convT0_w"], np.float32)
    t, h, w = _conv_transpose_toeplitz(wmat, h, w, CONV_STRIDES[0], 1, DEC_OUT_PAD[0])
    weights += [jnp.asarray(t, mxu_dtype)]
    put("dec0_bias", np.tile(np.asarray(params["dec_convT0_b"], np.float32), h * w))

    return tuple(weights) + (jnp.asarray(packed),)


# ------------------------------ fused kernel ---------------------------------

def _fused_forward_kernel(*refs, n_total, block_n, enc_cfg, fc_cfg, dec_cfg,
                          last_cfg, eps):
    """Whole autoencoder forward for one batch block, fully VMEM-resident.

    refs = (x,
            [T, S, S^T] * num_enc,
            W_enc_fc, W_dec_fc,
            [T, S, S^T] * num_dec_bn,
            T_last,
            packed_small_vectors,
            out)
    """
    x_ref = refs[0]
    out_ref = refs[-1]
    packed_ref = refs[-2]
    wit = iter(refs[1:-2])

    # valid rows of this batch block (training-mode BN over the valid rows only)
    blk = pl.program_id(0)
    valid = jnp.minimum(n_total - blk * block_n, block_n)
    row_ids = jax.lax.broadcasted_iota(jnp.int32, (block_n, 1), 0)
    row_mask = (row_ids < valid).astype(jnp.float32)
    valid_f = valid.astype(jnp.float32)

    def vec(row, length):                       # (1, length) slice of the packed array
        return packed_ref[row:row + 1, 0:length]

    def dense(a, w_ref, bias_row, bias_len):
        # bf16 x bf16 on the MXU, f32 accumulation, f32 bias add.
        y = jnp.dot(a.astype(jnp.bfloat16), w_ref[...],
                    preferred_element_type=jnp.float32)
        return y + vec(bias_row, bias_len)

    def batchnorm(x, s_ref, st_ref, p, c, g_row, b_row):
        # Training-mode BN over (valid rows, spatial) per channel.  Channel c'
        # owns flat columns p*C + c'; per-channel reduce / broadcast go through
        # 0/1 selection matrices on the MXU.  Stats stay f32 (review note);
        # colsum/colsumsq and scale/shift are stacked -> 2 matmuls per layer.
        xm = x * row_mask
        stats = jnp.concatenate(
            [jnp.sum(xm, axis=0, keepdims=True),
             jnp.sum(xm * xm, axis=0, keepdims=True)], axis=0)          # (2, P*C)
        inv_count = 1.0 / (valid_f * float(p))
        ch = jnp.dot(stats, s_ref[...].astype(jnp.float32),
                     preferred_element_type=jnp.float32) * inv_count    # (2, C)
        mean = ch[0:1, :]
        var = jnp.maximum(ch[1:2, :] - mean * mean, 0.0)                # clamp
        inv_std = jax.lax.rsqrt(var + eps)
        scale = vec(g_row, c) * inv_std
        shift = vec(b_row, c) - mean * scale
        cols = jnp.dot(jnp.concatenate([scale, shift], axis=0),
                       st_ref[...].astype(jnp.float32),
                       preferred_element_type=jnp.float32)              # (2, P*C)
        return x * cols[0:1, :] + cols[1:2, :]

    a = x_ref[...]

    # encoder: [Conv2d -> ReLU -> BatchNorm2d] * num_enc
    for (p, c, b_row, g_row, be_row) in enc_cfg:
        t_ref = next(wit); s_ref = next(wit); st_ref = next(wit)
        a = jnp.maximum(dense(a, t_ref, b_row, p * c), 0.0)
        a = batchnorm(a, s_ref, st_ref, p, c, g_row, be_row)

    # bottleneck: Flatten -> Linear -> latent -> Linear -> Unflatten
    latent_dim, sbb, fc_enc_b, fc_dec_b = fc_cfg
    w_enc_ref = next(wit); w_dec_ref = next(wit)
    latent = dense(a, w_enc_ref, fc_enc_b, latent_dim)
    a = dense(latent, w_dec_ref, fc_dec_b, sbb)

    # decoder: [ConvTranspose2d -> ReLU -> BatchNorm2d] * num_dec_bn
    for (p, c, b_row, g_row, be_row) in dec_cfg:
        t_ref = next(wit); s_ref = next(wit); st_ref = next(wit)
        a = jnp.maximum(dense(a, t_ref, b_row, p * c), 0.0)
        a = batchnorm(a, s_ref, st_ref, p, c, g_row, be_row)

    # final ConvTranspose2d -> Sigmoid (exact, stable tanh formulation -> EUP)
    out_pc, b_row = last_cfg
    t_ref = next(wit)
    y = dense(a, t_ref, b_row, out_pc)
    out_ref[...] = 0.5 * (jnp.tanh(0.5 * y) + 1.0)


@jax.jit
def autoencoder_forward(x_nchw, operands):
    """Forward pass matching the PyTorch module.  x: (N, C, H, W) -> (N, 1, H, W)."""
    n = x_nchw.shape[0]
    ho, wo, co = OUT_GEOM
    in_pc = INPUT_SHAPE[0] * INPUT_SHAPE[1] * INPUT_SHAPE[2]
    out_pc = ho * wo * co

    # NCHW -> flattened channels-minor layout: column = (h*W + w)*C + c
    x_flat = jnp.transpose(x_nchw, (0, 2, 3, 1)).reshape(n, -1)

    # Batch grid: rows are streamed in blocks; weights stay VMEM-resident.
    block_n = min(MAX_BATCH_BLOCK, _round_up(n, 8))
    n_pad = _round_up(n, block_n)
    if n_pad != n:
        x_flat = jnp.pad(x_flat, ((0, n_pad - n), (0, 0)))
    grid = (n_pad // block_n,)

    kernel = functools.partial(
        _fused_forward_kernel,
        n_total=n, block_n=block_n,
        enc_cfg=ENC_CFG, fc_cfg=FC_CFG, dec_cfg=DEC_CFG, last_cfg=LAST_CFG,
        eps=1e-5)

    # Weight operands: full-array blocks, index_map -> (0, 0) (resident).
    weight_specs = [pl.BlockSpec(op.shape, lambda i: (0, 0)) for op in operands]

    out_flat = pl.pallas_call(
        kernel,
        out_shape=jax.ShapeDtypeStruct((n_pad, out_pc), jnp.float32),
        grid=grid,
        in_specs=[pl.BlockSpec((block_n, in_pc), lambda i: (i, 0))] + weight_specs,
        out_specs=pl.BlockSpec((block_n, out_pc), lambda i: (i, 0)),
        compiler_params=pltpu.CompilerParams(
            dimension_semantics=("parallel",),          # shards batch blocks on v7x's 2 TCs
            vmem_limit_bytes=32 * 1024 * 1024),          # explicit (v5e default is 16 MiB)
    )(x_flat, *operands)

    out = out_flat[:n].reshape(n, ho, wo, co)
    return jnp.transpose(out, (0, 3, 1, 2))


# ------------------------ pure-JAX reference (no Pallas) ---------------------

def _reference_forward(params, x):
    """Straightforward NCHW reference mirroring the PyTorch module (f32)."""
    prec = jax.lax.Precision.HIGHEST
    dn = ("NCHW", "OIHW", "NCHW")

    def bn(h, g, b, eps=1e-5):
        mean = jnp.mean(h, axis=(0, 2, 3), keepdims=True)
        var = jnp.mean((h - mean) ** 2, axis=(0, 2, 3), keepdims=True)
        return (h - mean) * jax.lax.rsqrt(var + eps) * g[None, :, None, None] + b[None, :, None, None]

    h = x
    for i in range(NUM_LAYERS):
        h = jax.lax.conv_general_dilated(
            h, params[f"enc_conv{i}_w"], (CONV_STRIDES[i],) * 2, [(1, 1), (1, 1)],
            dimension_numbers=dn, precision=prec)
        h = jnp.maximum(h + params[f"enc_conv{i}_b"][None, :, None, None], 0.0)
        h = bn(h, params[f"enc_bn{i}_g"], params[f"enc_bn{i}_b"])

    n = x.shape[0]
    flat = h.reshape(n, -1)
    z = jnp.dot(flat, params["enc_fc_w"].T, precision=prec) + params["enc_fc_b"]
    h = jnp.dot(z, params["dec_fc_w"].T, precision=prec) + params["dec_fc_b"]
    h = h.reshape(n, *SBB_SHAPE)

    for i in range(NUM_LAYERS - 1, 0, -1):
        k, s, op = CONV_KERNELS[i], CONV_STRIDES[i], DEC_OUT_PAD[i]
        wc = jnp.transpose(params[f"dec_convT{i}_w"], (1, 0, 2, 3))[:, :, ::-1, ::-1]
        h = jax.lax.conv_general_dilated(
            h, wc, (1, 1), [(k - 2, k - 2 + op)] * 2, lhs_dilation=(s, s),
            dimension_numbers=dn, precision=prec)
        h = jnp.maximum(h + params[f"dec_convT{i}_b"][None, :, None, None], 0.0)
        h = bn(h, params[f"dec_bn{i}_g"], params[f"dec_bn{i}_b"])

    k, s, op = CONV_KERNELS[0], CONV_STRIDES[0], DEC_OUT_PAD[0]
    wc = jnp.transpose(params["dec_convT0_w"], (1, 0, 2, 3))[:, :, ::-1, ::-1]
    h = jax.lax.conv_general_dilated(
        h, wc, (1, 1), [(k - 2, k - 2 + op)] * 2, lhs_dilation=(s, s),
        dimension_numbers=dn, precision=prec)
    h = h + params["dec_convT0_b"][None, :, None, None]
    return jax.nn.sigmoid(h)


# ----------------------------------- main ------------------------------------

if __name__ == "__main__":
    key = jax.random.PRNGKey(0)
    kp, kx = jax.random.split(key)

    params = init_params(kp)
    operands = prepare_params(params)              # one-time weight pre-transform
    x = jax.random.normal(kx, (2, *INPUT_SHAPE), jnp.float32)

    out = jax.block_until_ready(autoencoder_forward(x, operands))

    assert out.shape == (2, 1, INPUT_SHAPE[1], INPUT_SHAPE[2]), out.shape
    assert bool(jnp.all(jnp.isfinite(out)))
    assert bool(jnp.all((out >= 0.0) & (out <= 1.0)))       # sigmoid output range

    ref = jax.block_until_ready(_reference_forward(params, x))
    err = float(jnp.max(jnp.abs(out - ref)))
    # bf16 MXU operands (per perf review) vs an f32 reference: tolerance 2.5e-2.
    assert err < 2.5e-2, f"mismatch vs pure-JAX reference: max abs err {err}"

    print("KERNEL_OK")
</pallas_src>

<mosaic_0001>
module attributes {stable_mosaic.version = 11 : i64} {
  func.func @_fused_forward_kernel(%arg0: i32, %arg1: memref<8x256xf32, #tpu.memory_space<vmem>>, %arg2: memref<256x512xbf16, #tpu.memory_space<vmem>>, %arg3: memref<512x8xbf16, #tpu.memory_space<vmem>>, %arg4: memref<8x512xbf16, #tpu.memory_space<vmem>>, %arg5: memref<512x256xbf16, #tpu.memory_space<vmem>>, %arg6: memref<256x16xbf16, #tpu.memory_space<vmem>>, %arg7: memref<16x256xbf16, #tpu.memory_space<vmem>>, %arg8: memref<256x32xbf16, #tpu.memory_space<vmem>>, %arg9: memref<32x256xbf16, #tpu.memory_space<vmem>>, %arg10: memref<256x512xbf16, #tpu.memory_space<vmem>>, %arg11: memref<512x8xbf16, #tpu.memory_space<vmem>>, %arg12: memref<8x512xbf16, #tpu.memory_space<vmem>>, %arg13: memref<512x256xbf16, #tpu.memory_space<vmem>>, %arg14: memref<12x512xf32, #tpu.memory_space<vmem>>, %arg15: memref<8x256xf32, #tpu.memory_space<vmem>>) attributes {dimension_semantics = [#tpu.dimension_semantics<parallel>], iteration_bounds = array<i64: 1>, scalar_prefetch = 0 : i64, scratch_operands = 0 : i64, tpu.core_type = #tpu.core_type<tc>, window_params = [{transform_indices = @transform_0, window_bounds = array<i64: 8, 256>}, {pipeline_mode = #tpu.pipeline_mode<synchronous>, transform_indices = @transform_1, window_bounds = array<i64: 256, 512>}, {pipeline_mode = #tpu.pipeline_mode<synchronous>, transform_indices = @transform_2, window_bounds = array<i64: 512, 8>}, {pipeline_mode = #tpu.pipeline_mode<synchronous>, transform_indices = @transform_3, window_bounds = array<i64: 8, 512>}, {pipeline_mode = #tpu.pipeline_mode<synchronous>, transform_indices = @transform_4, window_bounds = array<i64: 512, 256>}, {pipeline_mode = #tpu.pipeline_mode<synchronous>, transform_indices = @transform_5, window_bounds = array<i64: 256, 16>}, {pipeline_mode = #tpu.pipeline_mode<synchronous>, transform_indices = @transform_6, window_bounds = array<i64: 16, 256>}, {pipeline_mode = #tpu.pipeline_mode<synchronous>, transform_indices = @transform_7, window_bounds = array<i64: 256, 32>}, {pipeline_mode = #tpu.pipeline_mode<synchronous>, transform_indices = @transform_8, window_bounds = array<i64: 32, 256>}, {pipeline_mode = #tpu.pipeline_mode<synchronous>, transform_indices = @transform_9, window_bounds = array<i64: 256, 512>}, {pipeline_mode = #tpu.pipeline_mode<synchronous>, transform_indices = @transform_10, window_bounds = array<i64: 512, 8>}, {pipeline_mode = #tpu.pipeline_mode<synchronous>, transform_indices = @transform_11, window_bounds = array<i64: 8, 512>}, {pipeline_mode = #tpu.pipeline_mode<synchronous>, transform_indices = @transform_12, window_bounds = array<i64: 512, 256>}, {pipeline_mode = #tpu.pipeline_mode<synchronous>, transform_indices = @transform_13, window_bounds = array<i64: 12, 512>}, {transform_indices = @transform_14, window_bounds = array<i64: 8, 256>}]} {
    %c8_i32 = arith.constant 8 : i32
    %0 = arith.muli %arg0, %c8_i32 : i32
    %c2_i32 = arith.constant 2 : i32
    %1 = arith.subi %c2_i32, %0 : i32
    %c8_i32_0 = arith.constant 8 : i32
    %2 = arith.minsi %1, %c8_i32_0 : i32
    %3 = tpu.iota {dimensions = array<i32: 0>} : vector<8x1xi32>
    %4 = vector.broadcast %2 : i32 to vector<8x1xi32>
    %5 = arith.cmpi slt, %3, %4 : vector<8x1xi32>
    %6 = arith.extui %5 : vector<8x1xi1> to vector<8x1xi32>
    %7 = arith.sitofp %6 : vector<8x1xi32> to vector<8x1xf32>
    %8 = arith.sitofp %2 : i32 to f32
    %c0 = arith.constant 0 : index
    %c0_1 = arith.constant 0 : index
    %9 = vector.load %arg1[%c0, %c0_1] : memref<8x256xf32, #tpu.memory_space<vmem>>, vector<8x256xf32>
    %10 = arith.truncf %9 : vector<8x256xf32> to vector<8x256xbf16>
    %c0_2 = arith.constant 0 : index
    %c0_3 = arith.constant 0 : index
    %11 = vector.load %arg2[%c0_2, %c0_3] : memref<256x512xbf16, #tpu.memory_space<vmem>>, vector<256x512xbf16>
    %cst = arith.constant dense<0.000000e+00> : vector<8x512xf32>
    %12 = tpu.matmul %10, %11, %cst {dimension_numbers = #tpu.dot_dimension_numbers<[1], [0], [0], [1], [0, 0, 1, 1], [], []>} : vector<8x256xbf16>, vector<256x512xbf16>, vector<8x512xf32> -> vector<8x512xf32>
    %c0_4 = arith.constant 0 : index
    %c0_5 = arith.constant 0 : index
    %13 = vector.load %arg14[%c0_4, %c0_5] : memref<12x512xf32, #tpu.memory_space<vmem>>, vector<1x512xf32>
    %14 = vector.broadcast %13 : vector<1x512xf32> to vector<8x512xf32>
    %15 = arith.addf %12, %14 : vector<8x512xf32>
    %cst_6 = arith.constant 0.000000e+00 : f32
    %16 = vector.broadcast %cst_6 : f32 to vector<8x512xf32>
    %17 = arith.maximumf %15, %16 : vector<8x512xf32>
    %18 = vector.broadcast %7 : vector<8x1xf32> to vector<8x512xf32>
    %19 = arith.mulf %17, %18 : vector<8x512xf32>
    %cst_7 = arith.constant dense<0.000000e+00> : vector<512xf32>
    %20 = vector.multi_reduction <add>, %19, %cst_7 [0] : vector<8x512xf32> to vector<512xf32>
    %21 = vector.shape_cast %20 : vector<512xf32> to vector<1x512xf32>
    %22 = arith.mulf %19, %19 : vector<8x512xf32>
    %cst_8 = arith.constant dense<0.000000e+00> : vector<512xf32>
    %23 = vector.multi_reduction <add>, %22, %cst_8 [0] : vector<8x512xf32> to vector<512xf32>
    %24 = vector.shape_cast %23 : vector<512xf32> to vector<1x512xf32>
    %25 = tpu.concatenate %21, %24 in 0 : vector<1x512xf32>, vector<1x512xf32> -> vector<2x512xf32>
    %cst_9 = arith.constant 6.400000e+01 : f32
    %26 = arith.mulf %8, %cst_9 : f32
    %cst_10 = arith.constant 1.000000e+00 : f32
    %27 = arith.divf %cst_10, %26 : f32
    %c0_11 = arith.constant 0 : index
    %c0_12 = arith.constant 0 : index
    %28 = vector.load %arg3[%c0_11, %c0_12] : memref<512x8xbf16, #tpu.memory_space<vmem>>, vector<512x8xbf16>
    %29 = arith.extf %28 : vector<512x8xbf16> to vector<512x8xf32>
    %cst_13 = arith.constant dense<0.000000e+00> : vector<2x8xf32>
    %30 = tpu.matmul %25, %29, %cst_13 {dimension_numbers = #tpu.dot_dimension_numbers<[1], [0], [0], [1], [0, 0, 1, 1], [], []>} : vector<2x512xf32>, vector<512x8xf32>, vector<2x8xf32> -> vector<2x8xf32>
    %31 = vector.broadcast %27 : f32 to vector<2x8xf32>
    %32 = arith.mulf %30, %31 : vector<2x8xf32>
    %33 = vector.extract_strided_slice %32 {offsets = [0, 0], sizes = [1, 8], strides = [1, 1]} : vector<2x8xf32> to vector<1x8xf32>
    %34 = vector.extract_strided_slice %32 {offsets = [1, 0], sizes = [1, 8], strides = [1, 1]} : vector<2x8xf32> to vector<1x8xf32>
    %35 = arith.mulf %33, %33 : vector<1x8xf32>
    %36 = arith.subf %34, %35 : vector<1x8xf32>
    %cst_14 = arith.constant 0.000000e+00 : f32
    %37 = vector.broadcast %cst_14 : f32 to vector<1x8xf32>
    %38 = arith.maximumf %36, %37 : vector<1x8xf32>
    %cst_15 = arith.constant 9.99999974E-6 : f32
    %39 = vector.broadcast %cst_15 : f32 to vector<1x8xf32>
    %40 = arith.addf %38, %39 : vector<1x8xf32>
    %41 = math.rsqrt %40 : vector<1x8xf32>
    %c1 = arith.constant 1 : index
    %c0_16 = arith.constant 0 : index
    %42 = vector.load %arg14[%c1, %c0_16] : memref<12x512xf32, #tpu.memory_space<vmem>>, vector<1x8xf32>
    %43 = arith.mulf %42, %41 : vector<1x8xf32>
    %c2 = arith.constant 2 : index
    %c0_17 = arith.constant 0 : index
    %44 = vector.load %arg14[%c2, %c0_17] : memref<12x512xf32, #tpu.memory_space<vmem>>, vector<1x8xf32>
    %45 = arith.mulf %33, %43 : vector<1x8xf32>
    %46 = arith.subf %44, %45 : vector<1x8xf32>
    %47 = tpu.concatenate %43, %46 in 0 : vector<1x8xf32>, vector<1x8xf32> -> vector<2x8xf32>
    %c0_18 = arith.constant 0 : index
    %c0_19 = arith.constant 0 : index
    %48 = vector.load %arg4[%c0_18, %c0_19] : memref<8x512xbf16, #tpu.memory_space<vmem>>, vector<8x512xbf16>
    %49 = arith.extf %48 : vector<8x512xbf16> to vector<8x512xf32>
    %cst_20 = arith.constant dense<0.000000e+00> : vector<2x512xf32>
    %50 = tpu.matmul %47, %49, %cst_20 {dimension_numbers = #tpu.dot_dimension_numbers<[1], [0], [0], [1], [0, 0, 1, 1], [], []>} : vector<2x8xf32>, vector<8x512xf32>, vector<2x512xf32> -> vector<2x512xf32>
    %51 = vector.extract_strided_slice %50 {offsets = [0, 0], sizes = [1, 512], strides = [1, 1]} : vector<2x512xf32> to vector<1x512xf32>
    %52 = vector.broadcast %51 : vector<1x512xf32> to vector<8x512xf32>
    %53 = arith.mulf %17, %52 : vector<8x512xf32>
    %54 = vector.extract_strided_slice %50 {offsets = [1, 0], sizes = [1, 512], strides = [1, 1]} : vector<2x512xf32> to vector<1x512xf32>
    %55 = vector.broadcast %54 : vector<1x512xf32> to vector<8x512xf32>
    %56 = arith.addf %53, %55 : vector<8x512xf32>
    %57 = arith.truncf %56 : vector<8x512xf32> to vector<8x512xbf16>
    %c0_21 = arith.constant 0 : index
    %c0_22 = arith.constant 0 : index
    %58 = vector.load %arg5[%c0_21, %c0_22] : memref<512x256xbf16, #tpu.memory_space<vmem>>, vector<512x256xbf16>
    %cst_23 = arith.constant dense<0.000000e+00> : vector<8x256xf32>
    %59 = tpu.matmul %57, %58, %cst_23 {dimension_numbers = #tpu.dot_dimension_numbers<[1], [0], [0], [1], [0, 0, 1, 1], [], []>} : vector<8x512xbf16>, vector<512x256xbf16>, vector<8x256xf32> -> vector<8x256xf32>
    %c3 = arith.constant 3 : index
    %c0_24 = arith.constant 0 : index
    %60 = vector.load %arg14[%c3, %c0_24] : memref<12x512xf32, #tpu.memory_space<vmem>>, vector<1x256xf32>
    %61 = vector.broadcast %60 : vector<1x256xf32> to vector<8x256xf32>
    %62 = arith.addf %59, %61 : vector<8x256xf32>
    %cst_25 = arith.constant 0.000000e+00 : f32
    %63 = vector.broadcast %cst_25 : f32 to vector<8x256xf32>
    %64 = arith.maximumf %62, %63 : vector<8x256xf32>
    %65 = vector.broadcast %7 : vector<8x1xf32> to vector<8x256xf32>
    %66 = arith.mulf %64, %65 : vector<8x256xf32>
    %cst_26 = arith.constant dense<0.000000e+00> : vector<256xf32>
    %67 = vector.multi_reduction <add>, %66, %cst_26 [0] : vector<8x256xf32> to vector<256xf32>
    %68 = vector.shape_cast %67 : vector<256xf32> to vector<1x256xf32>
    %69 = arith.mulf %66, %66 : vector<8x256xf32>
    %cst_27 = arith.constant dense<0.000000e+00> : vector<256xf32>
    %70 = vector.multi_reduction <add>, %69, %cst_27 [0] : vector<8x256xf32> to vector<256xf32>
    %71 = vector.shape_cast %70 : vector<256xf32> to vector<1x256xf32>
    %72 = tpu.concatenate %68, %71 in 0 : vector<1x256xf32>, vector<1x256xf32> -> vector<2x256xf32>
    %cst_28 = arith.constant 1.600000e+01 : f32
    %73 = arith.mulf %8, %cst_28 : f32
    %cst_29 = arith.constant 1.000000e+00 : f32
    %74 = arith.divf %cst_29, %73 : f32
    %c0_30 = arith.constant 0 : index
    %c0_31 = arith.constant 0 : index
    %75 = vector.load %arg6[%c0_30, %c0_31] : memref<256x16xbf16, #tpu.memory_space<vmem>>, vector<256x16xbf16>
    %76 = arith.extf %75 : vector<256x16xbf16> to vector<256x16xf32>
    %cst_32 = arith.constant dense<0.000000e+00> : vector<2x16xf32>
    %77 = tpu.matmul %72, %76, %cst_32 {dimension_numbers = #tpu.dot_dimension_numbers<[1], [0], [0], [1], [0, 0, 1, 1], [], []>} : vector<2x256xf32>, vector<256x16xf32>, vector<2x16xf32> -> vector<2x16xf32>
    %78 = vector.broadcast %74 : f32 to vector<2x16xf32>
    %79 = arith.mulf %77, %78 : vector<2x16xf32>
    %80 = vector.extract_strided_slice %79 {offsets = [0, 0], sizes = [1, 16], strides = [1, 1]} : vector<2x16xf32> to vector<1x16xf32>
    %81 = vector.extract_strided_slice %79 {offsets = [1, 0], sizes = [1, 16], strides = [1, 1]} : vector<2x16xf32> to vector<1x16xf32>
    %82 = arith.mulf %80, %80 : vector<1x16xf32>
    %83 = arith.subf %81, %82 : vector<1x16xf32>
    %cst_33 = arith.constant 0.000000e+00 : f32
    %84 = vector.broadcast %cst_33 : f32 to vector<1x16xf32>
    %85 = arith.maximumf %83, %84 : vector<1x16xf32>
    %cst_34 = arith.constant 9.99999974E-6 : f32
    %86 = vector.broadcast %cst_34 : f32 to vector<1x16xf32>
    %87 = arith.addf %85, %86 : vector<1x16xf32>
    %88 = math.rsqrt %87 : vector<1x16xf32>
    %c4 = arith.constant 4 : index
    %c0_35 = arith.constant 0 : index
    %89 = vector.load %arg14[%c4, %c0_35] : memref<12x512xf32, #tpu.memory_space<vmem>>, vector<1x16xf32>
    %90 = arith.mulf %89, %88 : vector<1x16xf32>
    %c5 = arith.constant 5 : index
    %c0_36 = arith.constant 0 : index
    %91 = vector.load %arg14[%c5, %c0_36] : memref<12x512xf32, #tpu.memory_space<vmem>>, vector<1x16xf32>
    %92 = arith.mulf %80, %90 : vector<1x16xf32>
    %93 = arith.subf %91, %92 : vector<1x16xf32>
    %94 = tpu.concatenate %90, %93 in 0 : vector<1x16xf32>, vector<1x16xf32> -> vector<2x16xf32>
    %c0_37 = arith.constant 0 : index
    %c0_38 = arith.constant 0 : index
    %95 = vector.load %arg7[%c0_37, %c0_38] : memref<16x256xbf16, #tpu.memory_space<vmem>>, vector<16x256xbf16>
    %96 = arith.extf %95 : vector<16x256xbf16> to vector<16x256xf32>
    %cst_39 = arith.constant dense<0.000000e+00> : vector<2x256xf32>
    %97 = tpu.matmul %94, %96, %cst_39 {dimension_numbers = #tpu.dot_dimension_numbers<[1], [0], [0], [1], [0, 0, 1, 1], [], []>} : vector<2x16xf32>, vector<16x256xf32>, vector<2x256xf32> -> vector<2x256xf32>
    %98 = vector.extract_strided_slice %97 {offsets = [0, 0], sizes = [1, 256], strides = [1, 1]} : vector<2x256xf32> to vector<1x256xf32>
    %99 = vector.broadcast %98 : vector<1x256xf32> to vector<8x256xf32>
    %100 = arith.mulf %64, %99 : vector<8x256xf32>
    %101 = vector.extract_strided_slice %97 {offsets = [1, 0], sizes = [1, 256], strides = [1, 1]} : vector<2x256xf32> to vector<1x256xf32>
    %102 = vector.broadcast %101 : vector<1x256xf32> to vector<8x256xf32>
    %103 = arith.addf %100, %102 : vector<8x256xf32>
    %104 = arith.truncf %103 : vector<8x256xf32> to vector<8x256xbf16>
    %c0_40 = arith.constant 0 : index
    %c0_41 = arith.constant 0 : index
    %105 = vector.load %arg8[%c0_40, %c0_41] : memref<256x32xbf16, #tpu.memory_space<vmem>>, vector<256x32xbf16>
    %cst_42 = arith.constant dense<0.000000e+00> : vector<8x32xf32>
    %106 = tpu.matmul %104, %105, %cst_42 {dimension_numbers = #tpu.dot_dimension_numbers<[1], [0], [0], [1], [0, 0, 1, 1], [], []>} : vector<8x256xbf16>, vector<256x32xbf16>, vector<8x32xf32> -> vector<8x32xf32>
    %c6 = arith.constant 6 : index
    %c0_43 = arith.constant 0 : index
    %107 = vector.load %arg14[%c6, %c0_43] : memref<12x512xf32, #tpu.memory_space<vmem>>, vector<1x32xf32>
    %108 = vector.broadcast %107 : vector<1x32xf32> to vector<8x32xf32>
    %109 = arith.addf %106, %108 : vector<8x32xf32>
    %110 = arith.truncf %109 : vector<8x32xf32> to vector<8x32xbf16>
    %c0_44 = arith.constant 0 : index
    %c0_45 = arith.constant 0 : index
    %111 = vector.load %arg9[%c0_44, %c0_45] : memref<32x256xbf16, #tpu.memory_space<vmem>>, vector<32x256xbf16>
    %cst_46 = arith.constant dense<0.000000e+00> : vector<8x256xf32>
    %112 = tpu.matmul %110, %111, %cst_46 {dimension_numbers = #tpu.dot_dimension_numbers<[1], [0], [0], [1], [0, 0, 1, 1], [], []>} : vector<8x32xbf16>, vector<32x256xbf16>, vector<8x256xf32> -> vector<8x256xf32>
    %c7 = arith.constant 7 : index
    %c0_47 = arith.constant 0 : index
    %113 = vector.load %arg14[%c7, %c0_47] : memref<12x512xf32, #tpu.memory_space<vmem>>, vector<1x256xf32>
    %114 = vector.broadcast %113 : vector<1x256xf32> to vector<8x256xf32>
    %115 = arith.addf %112, %114 : vector<8x256xf32>
    %116 = arith.truncf %115 : vector<8x256xf32> to vector<8x256xbf16>
    %c0_48 = arith.constant 0 : index
    %c0_49 = arith.constant 0 : index
    %117 = vector.load %arg10[%c0_48, %c0_49] : memref<256x512xbf16, #tpu.memory_space<vmem>>, vector<256x512xbf16>
    %cst_50 = arith.constant dense<0.000000e+00> : vector<8x512xf32>
    %118 = tpu.matmul %116, %117, %cst_50 {dimension_numbers = #tpu.dot_dimension_numbers<[1], [0], [0], [1], [0, 0, 1, 1], [], []>} : vector<8x256xbf16>, vector<256x512xbf16>, vector<8x512xf32> -> vector<8x512xf32>
    %c8 = arith.constant 8 : index
    %c0_51 = arith.constant 0 : index
    %119 = vector.load %arg14[%c8, %c0_51] : memref<12x512xf32, #tpu.memory_space<vmem>>, vector<1x512xf32>
    %120 = vector.broadcast %119 : vector<1x512xf32> to vector<8x512xf32>
    %121 = arith.addf %118, %120 : vector<8x512xf32>
    %cst_52 = arith.constant 0.000000e+00 : f32
    %122 = vector.broadcast %cst_52 : f32 to vector<8x512xf32>
    %123 = arith.maximumf %121, %122 : vector<8x512xf32>
    %124 = vector.broadcast %7 : vector<8x1xf32> to vector<8x512xf32>
    %125 = arith.mulf %123, %124 : vector<8x512xf32>
    %cst_53 = arith.constant dense<0.000000e+00> : vector<512xf32>
    %126 = vector.multi_reduction <add>, %125, %cst_53 [0] : vector<8x512xf32> to vector<512xf32>
    %127 = vector.shape_cast %126 : vector<512xf32> to vector<1x512xf32>
    %128 = arith.mulf %125, %125 : vector<8x512xf32>
    %cst_54 = arith.constant dense<0.000000e+00> : vector<512xf32>
    %129 = vector.multi_reduction <add>, %128, %cst_54 [0] : vector<8x512xf32> to vector<512xf32>
    %130 = vector.shape_cast %129 : vector<512xf32> to vector<1x512xf32>
    %131 = tpu.concatenate %127, %130 in 0 : vector<1x512xf32>, vector<1x512xf32> -> vector<2x512xf32>
    %cst_55 = arith.constant 6.400000e+01 : f32
    %132 = arith.mulf %8, %cst_55 : f32
    %cst_56 = arith.constant 1.000000e+00 : f32
    %133 = arith.divf %cst_56, %132 : f32
    %c0_57 = arith.constant 0 : index
    %c0_58 = arith.constant 0 : index
    %134 = vector.load %arg11[%c0_57, %c0_58] : memref<512x8xbf16, #tpu.memory_space<vmem>>, vector<512x8xbf16>
    %135 = arith.extf %134 : vector<512x8xbf16> to vector<512x8xf32>
    %cst_59 = arith.constant dense<0.000000e+00> : vector<2x8xf32>
    %136 = tpu.matmul %131, %135, %cst_59 {dimension_numbers = #tpu.dot_dimension_numbers<[1], [0], [0], [1], [0, 0, 1, 1], [], []>} : vector<2x512xf32>, vector<512x8xf32>, vector<2x8xf32> -> vector<2x8xf32>
    %137 = vector.broadcast %133 : f32 to vector<2x8xf32>
    %138 = arith.mulf %136, %137 : vector<2x8xf32>
    %139 = vector.extract_strided_slice %138 {offsets = [0, 0], sizes = [1, 8], strides = [1, 1]} : vector<2x8xf32> to vector<1x8xf32>
    %140 = vector.extract_strided_slice %138 {offsets = [1, 0], sizes = [1, 8], strides = [1, 1]} : vector<2x8xf32> to vector<1x8xf32>
    %141 = arith.mulf %139, %139 : vector<1x8xf32>
    %142 = arith.subf %140, %141 : vector<1x8xf32>
    %cst_60 = arith.constant 0.000000e+00 : f32
    %143 = vector.broadcast %cst_60 : f32 to vector<1x8xf32>
    %144 = arith.maximumf %142, %143 : vector<1x8xf32>
    %cst_61 = arith.constant 9.99999974E-6 : f32
    %145 = vector.broadcast %cst_61 : f32 to vector<1x8xf32>
    %146 = arith.addf %144, %145 : vector<1x8xf32>
    %147 = math.rsqrt %146 : vector<1x8xf32>
    %c9 = arith.constant 9 : index
    %c0_62 = arith.constant 0 : index
    %148 = vector.load %arg14[%c9, %c0_62] : memref<12x512xf32, #tpu.memory_space<vmem>>, vector<1x8xf32>
    %149 = arith.mulf %148, %147 : vector<1x8xf32>
    %c10 = arith.constant 10 : index
    %c0_63 = arith.constant 0 : index
    %150 = vector.load %arg14[%c10, %c0_63] : memref<12x512xf32, #tpu.memory_space<vmem>>, vector<1x8xf32>
    %151 = arith.mulf %139, %149 : vector<1x8xf32>
    %152 = arith.subf %150, %151 : vector<1x8xf32>
    %153 = tpu.concatenate %149, %152 in 0 : vector<1x8xf32>, vector<1x8xf32> -> vector<2x8xf32>
    %c0_64 = arith.constant 0 : index
    %c0_65 = arith.constant 0 : index
    %154 = vector.load %arg12[%c0_64, %c0_65] : memref<8x512xbf16, #tpu.memory_space<vmem>>, vector<8x512xbf16>
    %155 = arith.extf %154 : vector<8x512xbf16> to vector<8x512xf32>
    %cst_66 = arith.constant dense<0.000000e+00> : vector<2x512xf32>
    %156 = tpu.matmul %153, %155, %cst_66 {dimension_numbers = #tpu.dot_dimension_numbers<[1], [0], [0], [1], [0, 0, 1, 1], [], []>} : vector<2x8xf32>, vector<8x512xf32>, vector<2x512xf32> -> vector<2x512xf32>
    %157 = vector.extract_strided_slice %156 {offsets = [0, 0], sizes = [1, 512], strides = [1, 1]} : vector<2x512xf32> to vector<1x512xf32>
    %158 = vector.broadcast %157 : vector<1x512xf32> to vector<8x512xf32>
    %159 = arith.mulf %123, %158 : vector<8x512xf32>
    %160 = vector.extract_strided_slice %156 {offsets = [1, 0], sizes = [1, 512], strides = [1, 1]} : vector<2x512xf32> to vector<1x512xf32>
    %161 = vector.broadcast %160 : vector<1x512xf32> to vector<8x512xf32>
    %162 = arith.addf %159, %161 : vector<8x512xf32>
    %163 = arith.truncf %162 : vector<8x512xf32> to vector<8x512xbf16>
    %c0_67 = arith.constant 0 : index
    %c0_68 = arith.constant 0 : index
    %164 = vector.load %arg13[%c0_67, %c0_68] : memref<512x256xbf16, #tpu.memory_space<vmem>>, vector<512x256xbf16>
    %cst_69 = arith.constant dense<0.000000e+00> : vector<8x256xf32>
    %165 = tpu.matmul %163, %164, %cst_69 {dimension_numbers = #tpu.dot_dimension_numbers<[1], [0], [0], [1], [0, 0, 1, 1], [], []>} : vector<8x512xbf16>, vector<512x256xbf16>, vector<8x256xf32> -> vector<8x256xf32>
    %c11 = arith.constant 11 : index
    %c0_70 = arith.constant 0 : index
    %166 = vector.load %arg14[%c11, %c0_70] : memref<12x512xf32, #tpu.memory_space<vmem>>, vector<1x256xf32>
    %167 = vector.broadcast %166 : vector<1x256xf32> to vector<8x256xf32>
    %168 = arith.addf %165, %167 : vector<8x256xf32>
    %cst_71 = arith.constant 5.000000e-01 : f32
    %169 = vector.broadcast %cst_71 : f32 to vector<8x256xf32>
    %170 = arith.mulf %169, %168 : vector<8x256xf32>
    %171 = math.tanh %170 : vector<8x256xf32>
    %cst_72 = arith.constant 1.000000e+00 : f32
    %172 = vector.broadcast %cst_72 : f32 to vector<8x256xf32>
    %173 = arith.addf %171, %172 : vector<8x256xf32>
    %cst_73 = arith.constant 5.000000e-01 : f32
    %174 = vector.broadcast %cst_73 : f32 to vector<8x256xf32>
    %175 = arith.mulf %174, %173 : vector<8x256xf32>
    %c0_74 = arith.constant 0 : index
    %c0_75 = arith.constant 0 : index
    %176 = vector.load %arg15[%c0_74, %c0_75] : memref<8x256xf32, #tpu.memory_space<vmem>>, vector<8x256xf32>
    tpu.vector_store %arg15[%c0_74, %c0_75], %175 {strides = array<i32>} : memref<8x256xf32, #tpu.memory_space<vmem>>, vector<8x256xf32>,
    return
  }
  func.func @transform_0(%arg0: i32) -> (i32, i32) {
    %c0_i32 = arith.constant 0 : i32
    %c0_i32_0 = arith.constant 0 : i32
    return %arg0, %c0_i32 : i32, i32
  }
  func.func @transform_1(%arg0: i32) -> (i32, i32) {
    %c0_i32 = arith.constant 0 : i32
    %c0_i32_0 = arith.constant 0 : i32
    %c0_i32_1 = arith.constant 0 : i32
    return %c0_i32, %c0_i32_0 : i32, i32
  }
  func.func @transform_2(%arg0: i32) -> (i32, i32) {
    %c0_i32 = arith.constant 0 : i32
    %c0_i32_0 = arith.constant 0 : i32
    %c0_i32_1 = arith.constant 0 : i32
    return %c0_i32, %c0_i32_0 : i32, i32
  }
  func.func @transform_3(%arg0: i32) -> (i32, i32) {
    %c0_i32 = arith.constant 0 : i32
    %c0_i32_0 = arith.constant 0 : i32
    %c0_i32_1 = arith.constant 0 : i32
    return %c0_i32, %c0_i32_0 : i32, i32
  }
  func.func @transform_4(%arg0: i32) -> (i32, i32) {
    %c0_i32 = arith.constant 0 : i32
    %c0_i32_0 = arith.constant 0 : i32
    %c0_i32_1 = arith.constant 0 : i32
    return %c0_i32, %c0_i32_0 : i32, i32
  }
  func.func @transform_5(%arg0: i32) -> (i32, i32) {
    %c0_i32 = arith.constant 0 : i32
    %c0_i32_0 = arith.constant 0 : i32
    %c0_i32_1 = arith.constant 0 : i32
    return %c0_i32, %c0_i32_0 : i32, i32
  }
  func.func @transform_6(%arg0: i32) -> (i32, i32) {
    %c0_i32 = arith.constant 0 : i32
    %c0_i32_0 = arith.constant 0 : i32
    %c0_i32_1 = arith.constant 0 : i32
    return %c0_i32, %c0_i32_0 : i32, i32
  }
  func.func @transform_7(%arg0: i32) -> (i32, i32) {
    %c0_i32 = arith.constant 0 : i32
    %c0_i32_0 = arith.constant 0 : i32
    %c0_i32_1 = arith.constant 0 : i32
    return %c0_i32, %c0_i32_0 : i32, i32
  }
  func.func @transform_8(%arg0: i32) -> (i32, i32) {
    %c0_i32 = arith.constant 0 : i32
    %c0_i32_0 = arith.constant 0 : i32
    %c0_i32_1 = arith.constant 0 : i32
    return %c0_i32, %c0_i32_0 : i32, i32
  }
  func.func @transform_9(%arg0: i32) -> (i32, i32) {
    %c0_i32 = arith.constant 0 : i32
    %c0_i32_0 = arith.constant 0 : i32
    %c0_i32_1 = arith.constant 0 : i32
    return %c0_i32, %c0_i32_0 : i32, i32
  }
  func.func @transform_10(%arg0: i32) -> (i32, i32) {
    %c0_i32 = arith.constant 0 : i32
    %c0_i32_0 = arith.constant 0 : i32
    %c0_i32_1 = arith.constant 0 : i32
    return %c0_i32, %c0_i32_0 : i32, i32
  }
  func.func @transform_11(%arg0: i32) -> (i32, i32) {
    %c0_i32 = arith.constant 0 : i32
    %c0_i32_0 = arith.constant 0 : i32
    %c0_i32_1 = arith.constant 0 : i32
    return %c0_i32, %c0_i32_0 : i32, i32
  }
  func.func @transform_12(%arg0: i32) -> (i32, i32) {
    %c0_i32 = arith.constant 0 : i32
    %c0_i32_0 = arith.constant 0 : i32
    %c0_i32_1 = arith.constant 0 : i32
    return %c0_i32, %c0_i32_0 : i32, i32
  }
  func.func @transform_13(%arg0: i32) -> (i32, i32) {
    %c0_i32 = arith.constant 0 : i32
    %c0_i32_0 = arith.constant 0 : i32
    %c0_i32_1 = arith.constant 0 : i32
    return %c0_i32, %c0_i32_0 : i32, i32
  }
  func.func @transform_14(%arg0: i32) -> (i32, i32) {
    %c0_i32 = arith.constant 0 : i32
    %c0_i32_0 = arith.constant 0 : i32
    return %arg0, %c0_i32 : i32, i32
  }
}

</mosaic_0001>

<llo_original>
// kernel: autoencoder_forward.1
$region0: #{autoencoder_forward.1}
  #allocation0 [shape = 'u32[]', space=smem, size = 0x4, offset = 0x4, fixed_abs, tag = 'smem constant byte address 0x4 - core index']
  #allocation1 [shape = 'u32[144,128]{1,0:T(1,128)}', space=vmem, size = 0x12000, scoped, tag = 'internal scratch']
  %s0 = inlined_call_operand.vmem [shape: f32[8,256], index: 0, kind: input, shape index: {}]
  %s1 = inlined_call_operand.vmem [shape: bf16[256,512], index: 1, kind: input, shape index: {}]
  %s2 = inlined_call_operand.vmem [shape: bf16[512,8], index: 2, kind: input, shape index: {}]
  %s3 = inlined_call_operand.vmem [shape: bf16[8,512], index: 3, kind: input, shape index: {}]
  %s4 = inlined_call_operand.hbm [shape: bf16[512,256], index: 4, kind: input, shape index: {}]
  %s5 = inlined_call_operand.vmem [shape: bf16[256,16], index: 5, kind: input, shape index: {}]
  %s6 = inlined_call_operand.vmem [shape: bf16[16,256], index: 6, kind: input, shape index: {}]
  %s7 = inlined_call_operand.vmem [shape: bf16[256,32], index: 7, kind: input, shape index: {}]
  %s8 = inlined_call_operand.vmem [shape: bf16[32,256], index: 8, kind: input, shape index: {}]
  %s9 = inlined_call_operand.hbm [shape: bf16[256,512], index: 9, kind: input, shape index: {}]
  %s10 = inlined_call_operand.vmem [shape: bf16[512,8], index: 10, kind: input, shape index: {}]
  %s11 = inlined_call_operand.vmem [shape: bf16[8,512], index: 11, kind: input, shape index: {}]
  %s12 = inlined_call_operand.hbm [shape: bf16[512,256], index: 12, kind: input, shape index: {}]
  %s13 = inlined_call_operand.vmem [shape: f32[12,512], index: 13, kind: input, shape index: {}]
  %s14 = inlined_call_operand.vmem [shape: f32[8,256], index: 14, kind: output, shape index: {}]
  %s15 = sld [smem:[#allocation0]]
  $region78: #{autoencoder_forward.1} parent=0
    _
  %s17 = ssub.s32 1, %s15
  %s18 = scalar_select 0, %s17, %s15
  $region1: #{autoencoder_forward.1} parent=0
    #allocation2 [shape = 'u8[262144]{0}', space=vmem, size = 0x40000, scoped, tag = 'input window, operand 4, single buffered']
    #allocation3 [shape = 's32[1]{0}', space=sflag, size = 0x4, scoped, tag = 'scoped memory for autoencoder_forward.1']
    #allocation4 [shape = 'u8[262144]{0}', space=vmem, size = 0x40000, scoped, tag = 'input window, operand 9, single buffered']
    #allocation5 [shape = 's32[1]{0}', space=sflag, size = 0x4, scoped, tag = 'scoped memory for autoencoder_forward.1']
    #allocation6 [shape = 'u8[262144]{0}', space=vmem, size = 0x40000, scoped, tag = 'input window, operand 12, single buffered']
    %19 = vsyncpa [#allocation3], 0
    %20 = vsyncpa [#allocation5], 0
    // Predicated region
    $region2: #{autoencoder_forward.1} parent=1 // pred_check
      _
    $region3: #{autoencoder_forward.1} parent=1 // pred_check_branch
      %22 = sbr.rel (0) target = $region5
    $region4: #{autoencoder_forward.1} parent=1 // pred_region
      _
    $region5: #{autoencoder_forward.1} parent=1 // pred_fallthru
      _
    // Predicated region
    $region6: #{autoencoder_forward.1} parent=1 // pred_check
      _
    $region7: #{autoencoder_forward.1} parent=1 // pred_check_branch
      %24 = sbr.rel (0) target = $region9
    $region8: #{autoencoder_forward.1} parent=1 // pred_region
      _
    $region9: #{autoencoder_forward.1} parent=1 // pred_fallthru
      _
    // Predicated region
    $region10: #{autoencoder_forward.1} parent=1 // pred_check
      _
    $region11: #{autoencoder_forward.1} parent=1 // pred_check_branch
      %26 = sbr.rel (0) target = $region13
    $region12: #{autoencoder_forward.1} parent=1 // pred_region
      _
    $region13: #{autoencoder_forward.1} parent=1 // pred_fallthru
      _
    // Predicated region
    $region14: #{autoencoder_forward.1} parent=1 // pred_check
      _
    $region15: #{autoencoder_forward.1} parent=1 // pred_check_branch
      %28 = sbr.rel (0) target = $region17
    $region16: #{autoencoder_forward.1} parent=1 // pred_region
      _
    $region17: #{autoencoder_forward.1} parent=1 // pred_fallthru
      _
    // Predicated region
    $region18: #{autoencoder_forward.1} parent=1 // pred_check
      _
    $region19: #{autoencoder_forward.1} parent=1 // pred_check_branch
      %30 = sbr.rel (0) target = $region21
    $region20: #{autoencoder_forward.1} parent=1 // pred_region
      %s32 = ssub.s32 8192, 8192
      %33 = vsyncadd [#allocation3], %s32
      %s34 = sshll.u32 [#allocation2], 4
      %s35 = int_to_ptr.vmem [resolvable:$true] %s34
      %40 = dma.hbm_to_vmem [thread:$0]  %s4, 8192, %s35, [#allocation3], 128, 128, 8
    $region21: #{autoencoder_forward.1} parent=1 // pred_fallthru
      _
    // Predicated region
    $region22: #{autoencoder_forward.1} parent=1 // pred_check
      _
    $region23: #{autoencoder_forward.1} parent=1 // pred_check_branch
      %42 = sbr.rel (0) target = $region25
    $region24: #{autoencoder_forward.1} parent=1 // pred_region
      _
    $region25: #{autoencoder_forward.1} parent=1 // pred_fallthru
      _
    // Predicated region
    $region26: #{autoencoder_forward.1} parent=1 // pred_check
      _
    $region27: #{autoencoder_forward.1} parent=1 // pred_check_branch
      %44 = sbr.rel (0) target = $region29
    $region28: #{autoencoder_forward.1} parent=1 // pred_region
      _
    $region29: #{autoencoder_forward.1} parent=1 // pred_fallthru
      _
    // Predicated region
    $region30: #{autoencoder_forward.1} parent=1 // pred_check
      _
    $region31: #{autoencoder_forward.1} parent=1 // pred_check_branch
      %46 = sbr.rel (0) target = $region33
    $region32: #{autoencoder_forward.1} parent=1 // pred_region
      _
    $region33: #{autoencoder_forward.1} parent=1 // pred_fallthru
      _
    // Predicated region
    $region34: #{autoencoder_forward.1} parent=1 // pred_check
      _
    $region35: #{autoencoder_forward.1} parent=1 // pred_check_branch
      %48 = sbr.rel (0) target = $region37
    $region36: #{autoencoder_forward.1} parent=1 // pred_region
      _
    $region37: #{autoencoder_forward.1} parent=1 // pred_fallthru
      _
    // Predicated region
    $region38: #{autoencoder_forward.1} parent=1 // pred_check
      _
    $region39: #{autoencoder_forward.1} parent=1 // pred_check_branch
      %50 = sbr.rel (0) target = $region41
    $region40: #{autoencoder_forward.1} parent=1 // pred_region
      %s52 = ssub.s32 8192, 8192
      %53 = vsyncadd [#allocation5], %s52
      %s54 = sshll.u32 [#allocation4], 4
      %s55 = int_to_ptr.vmem [resolvable:$true] %s54
      %60 = dma.hbm_to_vmem [thread:$0]  %s9, 8192, %s55, [#allocation5], 256, 256, 16
    $region41: #{autoencoder_forward.1} parent=1 // pred_fallthru
      _
    // Predicated region
    $region42: #{autoencoder_forward.1} parent=1 // pred_check
      _
    $region43: #{autoencoder_forward.1} parent=1 // pred_check_branch
      %62 = sbr.rel (0) target = $region45
    $region44: #{autoencoder_forward.1} parent=1 // pred_region
      _
    $region45: #{autoencoder_forward.1} parent=1 // pred_fallthru
      _
    // Predicated region
    $region46: #{autoencoder_forward.1} parent=1 // pred_check
      _
    $region47: #{autoencoder_forward.1} parent=1 // pred_check_branch
      %64 = sbr.rel (0) target = $region49
    $region48: #{autoencoder_forward.1} parent=1 // pred_region
      _
    $region49: #{autoencoder_forward.1} parent=1 // pred_fallthru
      _
    // Predicated region
    $region50: #{autoencoder_forward.1} parent=1 // pred_check
      _
    $region51: #{autoencoder_forward.1} parent=1 // pred_check_branch
      %66 = sbr.rel (0) target = $region53
    $region52: #{autoencoder_forward.1} parent=1 // pred_region
      %s68 = ssub.s32 8192, 8192
      %69 = vsyncadd [#allocation5], %s68
      %s70 = sshll.u32 [#allocation6], 4
      %s71 = int_to_ptr.vmem [resolvable:$true] %s70
      %76 = dma.hbm_to_vmem [thread:$0]  %s12, 8192, %s71, [#allocation5], 128, 128, 8
    $region53: #{autoencoder_forward.1} parent=1 // pred_fallthru
      _
    // Predicated region
    $region54: #{autoencoder_forward.1} parent=1 // pred_check
      _
    $region55: #{autoencoder_forward.1} parent=1 // pred_check_branch
      %78 = sbr.rel (0) target = $region57
    $region56: #{autoencoder_forward.1} parent=1 // pred_region
      _
    $region57: #{autoencoder_forward.1} parent=1 // pred_fallthru
      _
    // Predicated region
    $region58: #{autoencoder_forward.1} parent=1 // pred_check
      _
    $region59: #{autoencoder_forward.1} parent=1 // pred_check_branch
      %80 = sbr.rel (0) target = $region61
    $region60: #{autoencoder_forward.1} parent=1 // pred_region
      %81 = dma.done [#allocation3], 8192
    $region61: #{autoencoder_forward.1} parent=1 // pred_fallthru
      _
    // Predicated region
    $region62: #{autoencoder_forward.1} parent=1 // pred_check
      _
    $region63: #{autoencoder_forward.1} parent=1 // pred_check_branch
      %83 = sbr.rel (0) target = $region65
    $region64: #{autoencoder_forward.1} parent=1 // pred_region
      %84 = dma.done [#allocation5], 8192
    $region65: #{autoencoder_forward.1} parent=1 // pred_fallthru
      _
    // Predicated region
    $region66: #{autoencoder_forward.1} parent=1 // pred_check
      _
    $region67: #{autoencoder_forward.1} parent=1 // pred_check_branch
      %86 = sbr.rel (0) target = $region69
    $region68: #{autoencoder_forward.1} parent=1 // pred_region
      %87 = dma.done [#allocation5], 8192
    $region69: #{autoencoder_forward.1} parent=1 // pred_fallthru
      _
    %s89 = smul.u32 0, 8
    %s90 = ssub.s32 2, %s89
    %p91 = scmp.lt.s32.totalorder %s90, 8
    %s92 = scalar_select %p91, %s90, 8
    %v93 = vlaneseq
    %v94 = vshrl.u32 %v93, 7
    %v95 = vstv %s92
    %vm96 = vcmp.lt.s32.totalorder %v94, %v95
    %v97 = vsel %vm96, 1, 0
    %v98 = vcvt.s32.f32 %v97
    %s99 = scvt.s32.f32 %s92
    %v100 = vld [vmem:[%s0] sm:$0xff]
    %v101 = vld [vmem:[%s0 + $0x8] sm:$0xff]
    %v102 = vpack.c.bf16 %v100, %v100
    %v103 = vpack.c.bf16 %v101, %v101
    %v104 = vld [vmem:[%s1] sm:$0xff]
    %v105 = vld [vmem:[%s1 + $0x8] sm:$0xff]
    %v106 = vld [vmem:[%s1 + $0x10] sm:$0xff]
    %v107 = vld [vmem:[%s1 + $0x18] sm:$0xff]
    %v108 = vld [vmem:[%s1 + $0x20] sm:$0xff]
    %v109 = vld [vmem:[%s1 + $0x28] sm:$0xff]
    %v110 = vld [vmem:[%s1 + $0x30] sm:$0xff]
    %v111 = vld [vmem:[%s1 + $0x38] sm:$0xff]
    %v112 = vld [vmem:[%s1 + $0x40] sm:$0xff]
    %v113 = vld [vmem:[%s1 + $0x48] sm:$0xff]
    %v114 = vld [vmem:[%s1 + $0x50] sm:$0xff]
    %v115 = vld [vmem:[%s1 + $0x58] sm:$0xff]
    %v116 = vld [vmem:[%s1 + $0x60] sm:$0xff]
    %v117 = vld [vmem:[%s1 + $0x68] sm:$0xff]
    %v118 = vld [vmem:[%s1 + $0x70] sm:$0xff]
    %v119 = vld [vmem:[%s1 + $0x78] sm:$0xff]
    %v120 = vld [vmem:[%s1 + $0x80] sm:$0xff]
    %v121 = vld [vmem:[%s1 + $0x88] sm:$0xff]
    %v122 = vld [vmem:[%s1 + $0x90] sm:$0xff]
    %v123 = vld [vmem:[%s1 + $0x98] sm:$0xff]
    %v124 = vld [vmem:[%s1 + $0xa0] sm:$0xff]
    %v125 = vld [vmem:[%s1 + $0xa8] sm:$0xff]
    %v126 = vld [vmem:[%s1 + $0xb0] sm:$0xff]
    %v127 = vld [vmem:[%s1 + $0xb8] sm:$0xff]
    %v128 = vld [vmem:[%s1 + $0xc0] sm:$0xff]
    %v129 = vld [vmem:[%s1 + $0xc8] sm:$0xff]
    %v130 = vld [vmem:[%s1 + $0xd0] sm:$0xff]
    %v131 = vld [vmem:[%s1 + $0xd8] sm:$0xff]
    %v132 = vld [vmem:[%s1 + $0xe0] sm:$0xff]
    %v133 = vld [vmem:[%s1 + $0xe8] sm:$0xff]
    %v134 = vld [vmem:[%s1 + $0xf0] sm:$0xff]
    %v135 = vld [vmem:[%s1 + $0xf8] sm:$0xff]
    %v136 = vld [vmem:[%s1 + $0x100] sm:$0xff]
    %v137 = vld [vmem:[%s1 + $0x108] sm:$0xff]
    %v138 = vld [vmem:[%s1 + $0x110] sm:$0xff]
    %v139 = vld [vmem:[%s1 + $0x118] sm:$0xff]
    %v140 = vld [vmem:[%s1 + $0x120] sm:$0xff]
    %v141 = vld [vmem:[%s1 + $0x128] sm:$0xff]
    %v142 = vld [vmem:[%s1 + $0x130] sm:$0xff]
    %v143 = vld [vmem:[%s1 + $0x138] sm:$0xff]
    %v144 = vld [vmem:[%s1 + $0x140] sm:$0xff]
    %v145 = vld [vmem:[%s1 + $0x148] sm:$0xff]
    %v146 = vld [vmem:[%s1 + $0x150] sm:$0xff]
    %v147 = vld [vmem:[%s1 + $0x158] sm:$0xff]
    %v148 = vld [vmem:[%s1 + $0x160] sm:$0xff]
    %v149 = vld [vmem:[%s1 + $0x168] sm:$0xff]
    %v150 = vld [vmem:[%s1 + $0x170] sm:$0xff]
    %v151 = vld [vmem:[%s1 + $0x178] sm:$0xff]
    %v152 = vld [vmem:[%s1 + $0x180] sm:$0xff]
    %v153 = vld [vmem:[%s1 + $0x188] sm:$0xff]
    %v154 = vld [vmem:[%s1 + $0x190] sm:$0xff]
    %v155 = vld [vmem:[%s1 + $0x198] sm:$0xff]
    %v156 = vld [vmem:[%s1 + $0x1a0] sm:$0xff]
    %v157 = vld [vmem:[%s1 + $0x1a8] sm:$0xff]
    %v158 = vld [vmem:[%s1 + $0x1b0] sm:$0xff]
    %v159 = vld [vmem:[%s1 + $0x1b8] sm:$0xff]
    %v160 = vld [vmem:[%s1 + $0x1c0] sm:$0xff]
    %v161 = vld [vmem:[%s1 + $0x1c8] sm:$0xff]
    %v162 = vld [vmem:[%s1 + $0x1d0] sm:$0xff]
    %v163 = vld [vmem:[%s1 + $0x1d8] sm:$0xff]
    %v164 = vld [vmem:[%s1 + $0x1e0] sm:$0xff]
    %v165 = vld [vmem:[%s1 + $0x1e8] sm:$0xff]
    %v166 = vld [vmem:[%s1 + $0x1f0] sm:$0xff]
    %v167 = vld [vmem:[%s1 + $0x1f8] sm:$0xff]
    %v168 = vld [vmem:[%s13] ss:$8 sm:$0xf]
    %v170 = vlaneseq
    %v171 = vshrl.u32 %v170, 7
    %v172 = vsub.s32 0, %v171
    %v173 = vrot.slane %v168, %v172
    %v174 = vlaneseq
    %v175 = vshrl.u32 %v174, 7
    %v176 = vsub.s32 1, %v175
    %v177 = vrot.slane %v168, %v176
    %v178 = vlaneseq
    %v179 = vshrl.u32 %v178, 7
    %v180 = vsub.s32 2, %v179
    %v181 = vrot.slane %v168, %v180
    %v182 = vlaneseq
    %v183 = vshrl.u32 %v182, 7
    %v184 = vsub.s32 3, %v183
    %v185 = vrot.slane %v168, %v184
    %v254 = vunpack.c.l.b16 %v104
    %v255 = vunpack.c.h.b16 %v104
    %v256 = vunpack.c.l.b16 %v105
    %v257 = vunpack.c.h.b16 %v105
    %v258 = vunpack.c.l.b16 %v106
    %v259 = vunpack.c.h.b16 %v106
    %v260 = vunpack.c.l.b16 %v107
    %v261 = vunpack.c.h.b16 %v107
    %v262 = vunpack.c.l.b16 %v108
    %v263 = vunpack.c.h.b16 %v108
    %v264 = vunpack.c.l.b16 %v109
    %v265 = vunpack.c.h.b16 %v109
    %v266 = vunpack.c.l.b16 %v110
    %v267 = vunpack.c.h.b16 %v110
    %v268 = vunpack.c.l.b16 %v111
    %v269 = vunpack.c.h.b16 %v111
    %v270 = vunpack.c.l.b16 %v112
    %v271 = vunpack.c.h.b16 %v112
    %v272 = vunpack.c.l.b16 %v113
    %v273 = vunpack.c.h.b16 %v113
    %v274 = vunpack.c.l.b16 %v114
    %v275 = vunpack.c.h.b16 %v114
    %v276 = vunpack.c.l.b16 %v115
    %v277 = vunpack.c.h.b16 %v115
    %v278 = vunpack.c.l.b16 %v116
    %v279 = vunpack.c.h.b16 %v116
    %v280 = vunpack.c.l.b16 %v117
    %v281 = vunpack.c.h.b16 %v117
    %v282 = vunpack.c.l.b16 %v118
    %v283 = vunpack.c.h.b16 %v118
    %v284 = vunpack.c.l.b16 %v119
    %v285 = vunpack.c.h.b16 %v119
    %v286 = vunpack.c.l.b16 %v120
    %v287 = vunpack.c.h.b16 %v120
    %v288 = vunpack.c.l.b16 %v121
    %v289 = vunpack.c.h.b16 %v121
    %v290 = vunpack.c.l.b16 %v122
    %v291 = vunpack.c.h.b16 %v122
    %v292 = vunpack.c.l.b16 %v123
    %v293 = vunpack.c.h.b16 %v123
    %v294 = vunpack.c.l.b16 %v124
    %v295 = vunpack.c.h.b16 %v124
    %v296 = vunpack.c.l.b16 %v125
    %v297 = vunpack.c.h.b16 %v125
    %v298 = vunpack.c.l.b16 %v126
    %v299 = vunpack.c.h.b16 %v126
    %v300 = vunpack.c.l.b16 %v127
    %v301 = vunpack.c.h.b16 %v127
    %v302 = vunpack.c.l.b16 %v128
    %v303 = vunpack.c.h.b16 %v128
    %v304 = vunpack.c.l.b16 %v129
    %v305 = vunpack.c.h.b16 %v129
    %v306 = vunpack.c.l.b16 %v130
    %v307 = vunpack.c.h.b16 %v130
    %v308 = vunpack.c.l.b16 %v131
    %v309 = vunpack.c.h.b16 %v131
    %v310 = vunpack.c.l.b16 %v132
    %v311 = vunpack.c.h.b16 %v132
    %v312 = vunpack.c.l.b16 %v133
    %v313 = vunpack.c.h.b16 %v133
    %v314 = vunpack.c.l.b16 %v134
    %v315 = vunpack.c.h.b16 %v134
    %v316 = vunpack.c.l.b16 %v135
    %v317 = vunpack.c.h.b16 %v135
    %v318 = vunpack.c.l.b16 %v136
    %v319 = vunpack.c.h.b16 %v136
    %v320 = vunpack.c.l.b16 %v137
    %v321 = vunpack.c.h.b16 %v137
    %v322 = vunpack.c.l.b16 %v138
    %v323 = vunpack.c.h.b16 %v138
    %v324 = vunpack.c.l.b16 %v139
    %v325 = vunpack.c.h.b16 %v139
    %v326 = vunpack.c.l.b16 %v140
    %v327 = vunpack.c.h.b16 %v140
    %v328 = vunpack.c.l.b16 %v141
    %v329 = vunpack.c.h.b16 %v141
    %v330 = vunpack.c.l.b16 %v142
    %v331 = vunpack.c.h.b16 %v142
    %v332 = vunpack.c.l.b16 %v143
    %v333 = vunpack.c.h.b16 %v143
    %v334 = vunpack.c.l.b16 %v144
    %v335 = vunpack.c.h.b16 %v144
    %v336 = vunpack.c.l.b16 %v145
    %v337 = vunpack.c.h.b16 %v145
    %v338 = vunpack.c.l.b16 %v146
    %v339 = vunpack.c.h.b16 %v146
    %v340 = vunpack.c.l.b16 %v147
    %v341 = vunpack.c.h.b16 %v147
    %v342 = vunpack.c.l.b16 %v148
    %v343 = vunpack.c.h.b16 %v148
    %v344 = vunpack.c.l.b16 %v149
    %v345 = vunpack.c.h.b16 %v149
    %v346 = vunpack.c.l.b16 %v150
    %v347 = vunpack.c.h.b16 %v150
    %v348 = vunpack.c.l.b16 %v151
    %v349 = vunpack.c.h.b16 %v151
    %v350 = vunpack.c.l.b16 %v152
    %v351 = vunpack.c.h.b16 %v152
    %v352 = vunpack.c.l.b16 %v153
    %v353 = vunpack.c.h.b16 %v153
    %v354 = vunpack.c.l.b16 %v154
    %v355 = vunpack.c.h.b16 %v154
    %v356 = vunpack.c.l.b16 %v155
    %v357 = vunpack.c.h.b16 %v155
    %v358 = vunpack.c.l.b16 %v156
    %v359 = vunpack.c.h.b16 %v156
    %v360 = vunpack.c.l.b16 %v157
    %v361 = vunpack.c.h.b16 %v157
    %v362 = vunpack.c.l.b16 %v158
    %v363 = vunpack.c.h.b16 %v158
    %v364 = vunpack.c.l.b16 %v159
    %v365 = vunpack.c.h.b16 %v159
    %v366 = vunpack.c.l.b16 %v160
    %v367 = vunpack.c.h.b16 %v160
    %v368 = vunpack.c.l.b16 %v161
    %v369 = vunpack.c.h.b16 %v161
    %v370 = vunpack.c.l.b16 %v162
    %v371 = vunpack.c.h.b16 %v162
    %v372 = vunpack.c.l.b16 %v163
    %v373 = vunpack.c.h.b16 %v163
    %v374 = vunpack.c.l.b16 %v164
    %v375 = vunpack.c.h.b16 %v164
    %v376 = vunpack.c.l.b16 %v165
    %v377 = vunpack.c.h.b16 %v165
    %v378 = vunpack.c.l.b16 %v166
    %v379 = vunpack.c.h.b16 %v166
    %v380 = vunpack.c.l.b16 %v167
    %v381 = vunpack.c.h.b16 %v167
    %v382 = vpack.c.b16 %v258, %v254
    %v383 = vpack.c.b16 %v259, %v255
    %v384 = vpack.c.b16 %v260, %v256
    %v385 = vpack.c.b16 %v261, %v257
    %v386 = vpack.c.b16 %v266, %v262
    %v387 = vpack.c.b16 %v267, %v263
    %v388 = vpack.c.b16 %v268, %v264
    %v389 = vpack.c.b16 %v269, %v265
    %v390 = vpack.c.b16 %v274, %v270
    %v391 = vpack.c.b16 %v275, %v271
    %v392 = vpack.c.b16 %v276, %v272
    %v393 = vpack.c.b16 %v277, %v273
    %v394 = vpack.c.b16 %v282, %v278
    %v395 = vpack.c.b16 %v283, %v279
    %v396 = vpack.c.b16 %v284, %v280
    %v397 = vpack.c.b16 %v285, %v281
    %v398 = vpack.c.b16 %v290, %v286
    %v399 = vpack.c.b16 %v291, %v287
    %v400 = vpack.c.b16 %v292, %v288
    %v401 = vpack.c.b16 %v293, %v289
    %v402 = vpack.c.b16 %v298, %v294
    %v403 = vpack.c.b16 %v299, %v295
    %v404 = vpack.c.b16 %v300, %v296
    %v405 = vpack.c.b16 %v301, %v297
    %v406 = vpack.c.b16 %v306, %v302
    %v407 = vpack.c.b16 %v307, %v303
    %v408 = vpack.c.b16 %v308, %v304
    %v409 = vpack.c.b16 %v309, %v305
    %v410 = vpack.c.b16 %v314, %v310
    %v411 = vpack.c.b16 %v315, %v311
    %v412 = vpack.c.b16 %v316, %v312
    %v413 = vpack.c.b16 %v317, %v313
    %v414 = vpack.c.b16 %v322, %v318
    %v415 = vpack.c.b16 %v323, %v319
    %v416 = vpack.c.b16 %v324, %v320
    %v417 = vpack.c.b16 %v325, %v321
    %v418 = vpack.c.b16 %v330, %v326
    %v419 = vpack.c.b16 %v331, %v327
    %v420 = vpack.c.b16 %v332, %v328
    %v421 = vpack.c.b16 %v333, %v329
    %v422 = vpack.c.b16 %v338, %v334
    %v423 = vpack.c.b16 %v339, %v335
    %v424 = vpack.c.b16 %v340, %v336
    %v425 = vpack.c.b16 %v341, %v337
    %v426 = vpack.c.b16 %v346, %v342
    %v427 = vpack.c.b16 %v347, %v343
    %v428 = vpack.c.b16 %v348, %v344
    %v429 = vpack.c.b16 %v349, %v345
    %v430 = vpack.c.b16 %v354, %v350
    %v431 = vpack.c.b16 %v355, %v351
    %v432 = vpack.c.b16 %v356, %v352
    %v433 = vpack.c.b16 %v357, %v353
    %v434 = vpack.c.b16 %v362, %v358
    %v435 = vpack.c.b16 %v363, %v359
    %v436 = vpack.c.b16 %v364, %v360
    %v437 = vpack.c.b16 %v365, %v361
    %v438 = vpack.c.b16 %v370, %v366
    %v439 = vpack.c.b16 %v371, %v367
    %v440 = vpack.c.b16 %v372, %v368
    %v441 = vpack.c.b16 %v373, %v369
    %v442 = vpack.c.b16 %v378, %v374
    %v443 = vpack.c.b16 %v379, %v375
    %v444 = vpack.c.b16 %v380, %v376
    %v445 = vpack.c.b16 %v381, %v377
    %510 = vmatprep.subr.bf16.mxu0 %v383
    %511 = vmatpush1.bf16.msra.mxu0 %v382
    %512 = vmatprep.subr.bf16.mxu0 %v387
    %513 = vmatpush1.bf16.msra.mxu0 %v386
    %514 = vmatprep.subr.bf16.mxu0 %v391
    %515 = vmatpush1.bf16.msra.mxu0 %v390
    %516 = vmatprep.subr.bf16.mxu0 %v395
    %517 = vmatpush1.bf16.msra.mxu0 %v394
    %518 = vmatprep.subr.bf16.mxu0 %v399
    %519 = vmatpush1.bf16.msra.mxu0 %v398
    %520 = vmatprep.subr.bf16.mxu0 %v403
    %521 = vmatpush1.bf16.msra.mxu0 %v402
    %522 = vmatprep.subr.bf16.mxu0 %v407
    %523 = vmatpush1.bf16.msra.mxu0 %v406
    %524 = vmatprep.subr.bf16.mxu0 %v411
    %525 = vmatpush1.bf16.msra.mxu0 %v410
    %526 = vmatprep.subr.bf16.mxu0 %v415
    %527 = vmatpush1.bf16.msra.mxu0 %v414
    %528 = vmatprep.subr.bf16.mxu0 %v419
    %529 = vmatpush1.bf16.msra.mxu0 %v418
    %530 = vmatprep.subr.bf16.mxu0 %v423
    %531 = vmatpush1.bf16.msra.mxu0 %v422
    %532 = vmatprep.subr.bf16.mxu0 %v427
    %533 = vmatpush1.bf16.msra.mxu0 %v426
    %534 = vmatprep.subr.bf16.mxu0 %v431
    %535 = vmatpush1.bf16.msra.mxu0 %v430
    %536 = vmatprep.subr.bf16.mxu0 %v435
    %537 = vmatpush1.bf16.msra.mxu0 %v434
    %538 = vmatprep.subr.bf16.mxu0 %v439
    %539 = vmatpush1.bf16.msra.mxu0 %v438
    %540 = vmatprep.subr.bf16.mxu0 %v443
    %541 = vmatpush1.bf16.msra.mxu0 %v442
    %542 = vmatprep.mubr.bf16.mxu0 %v103
    %543 = vmatmul.mubr.bf16.gmra.mrb[0].mxu0 %v102
    %v544 = vpop.f32.mrb[0].mxu0
    %v545 = vadd.f32 %v173, %v544
    %v546 = vpop.f32.mrb[0].mxu0
    %v547 = vadd.f32 %v177, %v546
    %v548 = vpop.f32.mrb[0].mxu0
    %v549 = vpop.f32.mrb[0].mxu0
    %550 = vdwg.mxu0
    %551 = vmatprep.subr.bf16.mxu0 %v385
    %552 = vmatpush1.bf16.msra.mxu0 %v384
    %553 = vmatprep.subr.bf16.mxu0 %v389
    %554 = vmatpush1.bf16.msra.mxu0 %v388
    %555 = vmatprep.subr.bf16.mxu0 %v393
    %556 = vmatpush1.bf16.msra.mxu0 %v392
    %557 = vmatprep.subr.bf16.mxu0 %v397
    %558 = vmatpush1.bf16.msra.mxu0 %v396
    %559 = vmatprep.subr.bf16.mxu0 %v401
    %560 = vmatpush1.bf16.msra.mxu0 %v400
    %561 = vmatprep.subr.bf16.mxu0 %v405
    %562 = vmatpush1.bf16.msra.mxu0 %v404
    %563 = vmatprep.subr.bf16.mxu0 %v409
    %564 = vmatpush1.bf16.msra.mxu0 %v408
    %565 = vmatprep.subr.bf16.mxu0 %v413
    %566 = vmatpush1.bf16.msra.mxu0 %v412
    %567 = vmatprep.subr.bf16.mxu0 %v417
    %568 = vmatpush1.bf16.msra.mxu0 %v416
    %569 = vmatprep.subr.bf16.mxu0 %v421
    %570 = vmatpush1.bf16.msra.mxu0 %v420
    %571 = vmatprep.subr.bf16.mxu0 %v425
    %572 = vmatpush1.bf16.msra.mxu0 %v424
    %573 = vmatprep.subr.bf16.mxu0 %v429
    %574 = vmatpush1.bf16.msra.mxu0 %v428
    %575 = vmatprep.subr.bf16.mxu0 %v433
    %576 = vmatpush1.bf16.msra.mxu0 %v432
    %577 = vmatprep.subr.bf16.mxu0 %v437
    %578 = vmatpush1.bf16.msra.mxu0 %v436
    %579 = vmatprep.subr.bf16.mxu0 %v441
    %580 = vmatpush1.bf16.msra.mxu0 %v440
    %581 = vmatprep.subr.bf16.mxu0 %v445
    %582 = vmatpush1.bf16.msra.mxu0 %v444
    %583 = vmatprep.mubr.bf16.mxu0 %v103
    %584 = vmatmul.mubr.bf16.gmra.mrb[0].mxu0 %v102
    %v585 = vpop.f32.mrb[0].mxu0
    %v586 = vadd.f32 %v181, %v585
    %v587 = vpop.f32.mrb[0].mxu0
    %v588 = vadd.f32 %v185, %v587
    %v589 = vpop.f32.mrb[0].mxu0
    %v590 = vpop.f32.mrb[0].mxu0
    %591 = vdwg.mxu0
    %v592 = vmax.f32 %v545, 0.0
    %v593 = vmax.f32 %v547, 0.0
    %v594 = vmax.f32 %v586, 0.0
    %v595 = vmax.f32 %v588, 0.0
    %v596 = vmul.f32 %v592, %v98
    %v597 = vmul.f32 %v593, %v98
    %v598 = vmul.f32 %v594, %v98
    %v599 = vmul.f32 %v595, %v98
    %v600 = vrot.slane %v596, 4
    %v601 = vadd.f32 %v596, %v600
    %v602 = vrot.slane %v601, 2
    %v603 = vadd.f32 %v601, %v602
    %v604 = vrot.slane %v603, 1
    %v605 = vadd.f32 %v603, %v604
    %v606 = vrot.slane %v597, 4
    %v607 = vadd.f32 %v597, %v606
    %v608 = vrot.slane %v607, 2
    %v609 = vadd.f32 %v607, %v608
    %v610 = vrot.slane %v609, 1
    %v611 = vadd.f32 %v609, %v610
    %v612 = vrot.slane %v598, 4
    %v613 = vadd.f32 %v598, %v612
    %v614 = vrot.slane %v613, 2
    %v615 = vadd.f32 %v613, %v614
    %v616 = vrot.slane %v615, 1
    %v617 = vadd.f32 %v615, %v616
    %v618 = vrot.slane %v599, 4
    %v619 = vadd.f32 %v599, %v618
    %v620 = vrot.slane %v619, 2
    %v621 = vadd.f32 %v619, %v620
    %v622 = vrot.slane %v621, 1
    %v623 = vadd.f32 %v621, %v622
    %v624 = vmul.f32 %v596, %v596
    %v625 = vmul.f32 %v597, %v597
    %v626 = vmul.f32 %v598, %v598
    %v627 = vmul.f32 %v599, %v599
    %v628 = vrot.slane %v624, 4
    %v629 = vadd.f32 %v624, %v628
    %v630 = vrot.slane %v629, 2
    %v631 = vadd.f32 %v629, %v630
    %v632 = vrot.slane %v631, 1
    %v633 = vadd.f32 %v631, %v632
    %v634 = vrot.slane %v625, 4
    %v635 = vadd.f32 %v625, %v634
    %v636 = vrot.slane %v635, 2
    %v637 = vadd.f32 %v635, %v636
    %v638 = vrot.slane %v637, 1
    %v639 = vadd.f32 %v637, %v638
    %v640 = vrot.slane %v626, 4
    %v641 = vadd.f32 %v626, %v640
    %v642 = vrot.slane %v641, 2
    %v643 = vadd.f32 %v641, %v642
    %v644 = vrot.slane %v643, 1
    %v645 = vadd.f32 %v643, %v644
    %v646 = vrot.slane %v627, 4
    %v647 = vadd.f32 %v627, %v646
    %v648 = vrot.slane %v647, 2
    %v649 = vadd.f32 %v647, %v648
    %v650 = vrot.slane %v649, 1
    %v651 = vadd.f32 %v649, %v650
    %vm652 = vcmask 1040384
    %v653 = vsel %vm652, %v605, %v633
    %v654 = vsel %vm652, %v611, %v639
    %v655 = vsel %vm652, %v617, %v645
    %v656 = vsel %vm652, %v623, %v651
    %s657 = smul.f32 %s99, 64.0
    %v658 = vstv %s657
    %v659 = vrcp.pop %v658
    %s660 = vtos %v659
    %v661 = vld [vmem:[%s2] sm:$0xf]
    %v662 = vld [vmem:[%s2 + $0x4] sm:$0xf]
    %v663 = vld [vmem:[%s2 + $0x8] sm:$0xf]
    %v664 = vld [vmem:[%s2 + $0xc] sm:$0xf]
    %v665 = vld [vmem:[%s2 + $0x10] sm:$0xf]
    %v666 = vld [vmem:[%s2 + $0x14] sm:$0xf]
    %v667 = vld [vmem:[%s2 + $0x18] sm:$0xf]
    %v668 = vld [vmem:[%s2 + $0x1c] sm:$0xf]
    %v669 = vld [vmem:[%s2 + $0x20] sm:$0xf]
    %v670 = vld [vmem:[%s2 + $0x24] sm:$0xf]
    %v671 = vld [vmem:[%s2 + $0x28] sm:$0xf]
    %v672 = vld [vmem:[%s2 + $0x2c] sm:$0xf]
    %v673 = vld [vmem:[%s2 + $0x30] sm:$0xf]
    %v674 = vld [vmem:[%s2 + $0x34] sm:$0xf]
    %v675 = vld [vmem:[%s2 + $0x38] sm:$0xf]
    %v676 = vld [vmem:[%s2 + $0x3c] sm:$0xf]
    %v677 = vld [vmem:[%s2 + $0x40] sm:$0xf]
    %v678 = vld [vmem:[%s2 + $0x44] sm:$0xf]
    %v679 = vld [vmem:[%s2 + $0x48] sm:$0xf]
    %v680 = vld [vmem:[%s2 + $0x4c] sm:$0xf]
    %v681 = vld [vmem:[%s2 + $0x50] sm:$0xf]
    %v682 = vld [vmem:[%s2 + $0x54] sm:$0xf]
    %v683 = vld [vmem:[%s2 + $0x58] sm:$0xf]
    %v684 = vld [vmem:[%s2 + $0x5c] sm:$0xf]
    %v685 = vld [vmem:[%s2 + $0x60] sm:$0xf]
    %v686 = vld [vmem:[%s2 + $0x64] sm:$0xf]
    %v687 = vld [vmem:[%s2 + $0x68] sm:$0xf]
    %v688 = vld [vmem:[%s2 + $0x6c] sm:$0xf]
    %v689 = vld [vmem:[%s2 + $0x70] sm:$0xf]
    %v690 = vld [vmem:[%s2 + $0x74] sm:$0xf]
    %v691 = vld [vmem:[%s2 + $0x78] sm:$0xf]
    %v692 = vld [vmem:[%s2 + $0x7c] sm:$0xf]
    %v693 = vld [vmem:[%s2 + $0x80] sm:$0xf]
    %v694 = vld [vmem:[%s2 + $0x84] sm:$0xf]
    %v695 = vld [vmem:[%s2 + $0x88] sm:$0xf]
    %v696 = vld [vmem:[%s2 + $0x8c] sm:$0xf]
    %v697 = vld [vmem:[%s2 + $0x90] sm:$0xf]
    %v698 = vld [vmem:[%s2 + $0x94] sm:$0xf]
    %v699 = vld [vmem:[%s2 + $0x98] sm:$0xf]
    %v700 = vld [vmem:[%s2 + $0x9c] sm:$0xf]
    %v701 = vld [vmem:[%s2 + $0xa0] sm:$0xf]
    %v702 = vld [vmem:[%s2 + $0xa4] sm:$0xf]
    %v703 = vld [vmem:[%s2 + $0xa8] sm:$0xf]
    %v704 = vld [vmem:[%s2 + $0xac] sm:$0xf]
    %v705 = vld [vmem:[%s2 + $0xb0] sm:$0xf]
    %v706 = vld [vmem:[%s2 + $0xb4] sm:$0xf]
    %v707 = vld [vmem:[%s2 + $0xb8] sm:$0xf]
    %v708 = vld [vmem:[%s2 + $0xbc] sm:$0xf]
    %v709 = vld [vmem:[%s2 + $0xc0] sm:$0xf]
    %v710 = vld [vmem:[%s2 + $0xc4] sm:$0xf]
    %v711 = vld [vmem:[%s2 + $0xc8] sm:$0xf]
    %v712 = vld [vmem:[%s2 + $0xcc] sm:$0xf]
    %v713 = vld [vmem:[%s2 + $0xd0] sm:$0xf]
    %v714 = vld [vmem:[%s2 + $0xd4] sm:$0xf]
    %v715 = vld [vmem:[%s2 + $0xd8] sm:$0xf]
    %v716 = vld [vmem:[%s2 + $0xdc] sm:$0xf]
    %v717 = vld [vmem:[%s2 + $0xe0] sm:$0xf]
    %v718 = vld [vmem:[%s2 + $0xe4] sm:$0xf]
    %v719 = vld [vmem:[%s2 + $0xe8] sm:$0xf]
    %v720 = vld [vmem:[%s2 + $0xec] sm:$0xf]
    %v721 = vld [vmem:[%s2 + $0xf0] sm:$0xf]
    %v722 = vld [vmem:[%s2 + $0xf4] sm:$0xf]
    %v723 = vld [vmem:[%s2 + $0xf8] sm:$0xf]
    %v724 = vld [vmem:[%s2 + $0xfc] sm:$0xf]
    %v725 = vunpack.c.l.bf16 %v661
    %v726 = vunpack.c.l.bf16 %v662
    %v727 = vunpack.c.l.bf16 %v663
    %v728 = vunpack.c.l.bf16 %v664
    %v729 = vunpack.c.l.bf16 %v665
    %v730 = vunpack.c.l.bf16 %v666
    %v731 = vunpack.c.l.bf16 %v667
    %v732 = vunpack.c.l.bf16 %v668
    %v733 = vunpack.c.l.bf16 %v669
    %v734 = vunpack.c.l.bf16 %v670
    %v735 = vunpack.c.l.bf16 %v671
    %v736 = vunpack.c.l.bf16 %v672
    %v737 = vunpack.c.l.bf16 %v673
    %v738 = vunpack.c.l.bf16 %v674
    %v739 = vunpack.c.l.bf16 %v675
    %v740 = vunpack.c.l.bf16 %v676
    %v741 = vunpack.c.l.bf16 %v677
    %v742 = vunpack.c.l.bf16 %v678
    %v743 = vunpack.c.l.bf16 %v679
    %v744 = vunpack.c.l.bf16 %v680
    %v745 = vunpack.c.l.bf16 %v681
    %v746 = vunpack.c.l.bf16 %v682
    %v747 = vunpack.c.l.bf16 %v683
    %v748 = vunpack.c.l.bf16 %v684
    %v749 = vunpack.c.l.bf16 %v685
    %v750 = vunpack.c.l.bf16 %v686
    %v751 = vunpack.c.l.bf16 %v687
    %v752 = vunpack.c.l.bf16 %v688
    %v753 = vunpack.c.l.bf16 %v689
    %v754 = vunpack.c.l.bf16 %v690
    %v755 = vunpack.c.l.bf16 %v691
    %v756 = vunpack.c.l.bf16 %v692
    %v757 = vunpack.c.l.bf16 %v693
    %v758 = vunpack.c.l.bf16 %v694
    %v759 = vunpack.c.l.bf16 %v695
    %v760 = vunpack.c.l.bf16 %v696
    %v761 = vunpack.c.l.bf16 %v697
    %v762 = vunpack.c.l.bf16 %v698
    %v763 = vunpack.c.l.bf16 %v699
    %v764 = vunpack.c.l.bf16 %v700
    %v765 = vunpack.c.l.bf16 %v701
    %v766 = vunpack.c.l.bf16 %v702
    %v767 = vunpack.c.l.bf16 %v703
    %v768 = vunpack.c.l.bf16 %v704
    %v769 = vunpack.c.l.bf16 %v705
    %v770 = vunpack.c.l.bf16 %v706
    %v771 = vunpack.c.l.bf16 %v707
    %v772 = vunpack.c.l.bf16 %v708
    %v773 = vunpack.c.l.bf16 %v709
    %v774 = vunpack.c.l.bf16 %v710
    %v775 = vunpack.c.l.bf16 %v711
    %v776 = vunpack.c.l.bf16 %v712
    %v777 = vunpack.c.l.bf16 %v713
    %v778 = vunpack.c.l.bf16 %v714
    %v779 = vunpack.c.l.bf16 %v715
    %v780 = vunpack.c.l.bf16 %v716
    %v781 = vunpack.c.l.bf16 %v717
    %v782 = vunpack.c.l.bf16 %v718
    %v783 = vunpack.c.l.bf16 %v719
    %v784 = vunpack.c.l.bf16 %v720
    %v785 = vunpack.c.l.bf16 %v721
    %v786 = vunpack.c.l.bf16 %v722
    %v787 = vunpack.c.l.bf16 %v723
    %v788 = vunpack.c.l.bf16 %v724
    %789 = vmatprep.subr.mxu0 0.0
    %790 = vmatpush1.msra.mxu0 %v725
    %791 = vmatprep.subr.mxu0 0.0
    %792 = vmatpush1.msra.mxu0 %v726
    %793 = vmatprep.subr.mxu0 0.0
    %794 = vmatpush1.msra.mxu0 %v727
    %795 = vmatprep.subr.mxu0 0.0
    %796 = vmatpush1.msra.mxu0 %v728
    %797 = vmatprep.subr.mxu0 0.0
    %798 = vmatpush1.msra.mxu0 %v729
    %799 = vmatprep.subr.mxu0 0.0
    %800 = vmatpush1.msra.mxu0 %v730
    %801 = vmatprep.subr.mxu0 0.0
    %802 = vmatpush1.msra.mxu0 %v731
    %803 = vmatprep.subr.mxu0 0.0
    %804 = vmatpush1.msra.mxu0 %v732
    %805 = vmatprep.subr.mxu0 0.0
    %806 = vmatpush1.msra.mxu0 %v733
    %807 = vmatprep.subr.mxu0 0.0
    %808 = vmatpush1.msra.mxu0 %v734
    %809 = vmatprep.subr.mxu0 0.0
    %810 = vmatpush1.msra.mxu0 %v735
    %811 = vmatprep.subr.mxu0 0.0
    %812 = vmatpush1.msra.mxu0 %v736
    %813 = vmatprep.subr.mxu0 0.0
    %814 = vmatpush1.msra.mxu0 %v737
    %815 = vmatprep.subr.mxu0 0.0
    %816 = vmatpush1.msra.mxu0 %v738
    %817 = vmatprep.subr.mxu0 0.0
    %818 = vmatpush1.msra.mxu0 %v739
    %819 = vmatprep.subr.mxu0 0.0
    %820 = vmatpush1.msra.mxu0 %v740
    %821 = vmatprep.subr.mxu0 0.0
    %822 = vmatpush1.msra.mxu0 %v741
    %823 = vmatprep.subr.mxu0 0.0
    %824 = vmatpush1.msra.mxu0 %v742
    %825 = vmatprep.subr.mxu0 0.0
    %826 = vmatpush1.msra.mxu0 %v743
    %827 = vmatprep.subr.mxu0 0.0
    %828 = vmatpush1.msra.mxu0 %v744
    %829 = vmatprep.subr.mxu0 0.0
    %830 = vmatpush1.msra.mxu0 %v745
    %831 = vmatprep.subr.mxu0 0.0
    %832 = vmatpush1.msra.mxu0 %v746
    %833 = vmatprep.subr.mxu0 0.0
    %834 = vmatpush1.msra.mxu0 %v747
    %835 = vmatprep.subr.mxu0 0.0
    %836 = vmatpush1.msra.mxu0 %v748
    %837 = vmatprep.subr.mxu0 0.0
    %838 = vmatpush1.msra.mxu0 %v749
    %839 = vmatprep.subr.mxu0 0.0
    %840 = vmatpush1.msra.mxu0 %v750
    %841 = vmatprep.subr.mxu0 0.0
    %842 = vmatpush1.msra.mxu0 %v751
    %843 = vmatprep.subr.mxu0 0.0
    %844 = vmatpush1.msra.mxu0 %v752
    %845 = vmatprep.subr.mxu0 0.0
    %846 = vmatpush1.msra.mxu0 %v753
    %847 = vmatprep.subr.mxu0 0.0
    %848 = vmatpush1.msra.mxu0 %v754
    %849 = vmatprep.subr.mxu0 0.0
    %850 = vmatpush1.msra.mxu0 %v755
    %851 = vmatprep.subr.mxu0 0.0
    %852 = vmatpush1.msra.mxu0 %v756
    %853 = vmatprep.mubr.f32.mxu0 %v654
    %854 = vmatmul.mubr.f32.gmra.mrb[0].mxu0 %v653
    %v855 = vpop.f32.mrb[0].mxu0
    %v856 = vadd.f32 0.0, %v855
    %v857 = vpop.f32.mrb[0].mxu0
    %858 = vdwg.mxu0
    %859 = vmatprep.subr.mxu0 0.0
    %860 = vmatpush1.msra.mxu0 %v757
    %861 = vmatprep.subr.mxu0 0.0
    %862 = vmatpush1.msra.mxu0 %v758
    %863 = vmatprep.subr.mxu0 0.0
    %864 = vmatpush1.msra.mxu0 %v759
    %865 = vmatprep.subr.mxu0 0.0
    %866 = vmatpush1.msra.mxu0 %v760
    %867 = vmatprep.subr.mxu0 0.0
    %868 = vmatpush1.msra.mxu0 %v761
    %869 = vmatprep.subr.mxu0 0.0
    %870 = vmatpush1.msra.mxu0 %v762
    %871 = vmatprep.subr.mxu0 0.0
    %872 = vmatpush1.msra.mxu0 %v763
    %873 = vmatprep.subr.mxu0 0.0
    %874 = vmatpush1.msra.mxu0 %v764
    %875 = vmatprep.subr.mxu0 0.0
    %876 = vmatpush1.msra.mxu0 %v765
    %877 = vmatprep.subr.mxu0 0.0
    %878 = vmatpush1.msra.mxu0 %v766
    %879 = vmatprep.subr.mxu0 0.0
    %880 = vmatpush1.msra.mxu0 %v767
    %881 = vmatprep.subr.mxu0 0.0
    %882 = vmatpush1.msra.mxu0 %v768
    %883 = vmatprep.subr.mxu0 0.0
    %884 = vmatpush1.msra.mxu0 %v769
    %885 = vmatprep.subr.mxu0 0.0
    %886 = vmatpush1.msra.mxu0 %v770
    %887 = vmatprep.subr.mxu0 0.0
    %888 = vmatpush1.msra.mxu0 %v771
    %889 = vmatprep.subr.mxu0 0.0
    %890 = vmatpush1.msra.mxu0 %v772
    %891 = vmatprep.subr.mxu0 0.0
    %892 = vmatpush1.msra.mxu0 %v773
    %893 = vmatprep.subr.mxu0 0.0
    %894 = vmatpush1.msra.mxu0 %v774
    %895 = vmatprep.subr.mxu0 0.0
    %896 = vmatpush1.msra.mxu0 %v775
    %897 = vmatprep.subr.mxu0 0.0
    %898 = vmatpush1.msra.mxu0 %v776
    %899 = vmatprep.subr.mxu0 0.0
    %900 = vmatpush1.msra.mxu0 %v777
    %901 = vmatprep.subr.mxu0 0.0
    %902 = vmatpush1.msra.mxu0 %v778
    %903 = vmatprep.subr.mxu0 0.0
    %904 = vmatpush1.msra.mxu0 %v779
    %905 = vmatprep.subr.mxu0 0.0
    %906 = vmatpush1.msra.mxu0 %v780
    %907 = vmatprep.subr.mxu0 0.0
    %908 = vmatpush1.msra.mxu0 %v781
    %909 = vmatprep.subr.mxu0 0.0
    %910 = vmatpush1.msra.mxu0 %v782
    %911 = vmatprep.subr.mxu0 0.0
    %912 = vmatpush1.msra.mxu0 %v783
    %913 = vmatprep.subr.mxu0 0.0
    %914 = vmatpush1.msra.mxu0 %v784
    %915 = vmatprep.subr.mxu0 0.0
    %916 = vmatpush1.msra.mxu0 %v785
    %917 = vmatprep.subr.mxu0 0.0
    %918 = vmatpush1.msra.mxu0 %v786
    %919 = vmatprep.subr.mxu0 0.0
    %920 = vmatpush1.msra.mxu0 %v787
    %921 = vmatprep.subr.mxu0 0.0
    %922 = vmatpush1.msra.mxu0 %v788
    %923 = vmatprep.mubr.f32.mxu0 %v656
    %924 = vmatmul.mubr.f32.gmra.mrb[0].mxu0 %v655
    %v925 = vpop.f32.mrb[0].mxu0
    %v926 = vadd.f32 %v856, %v925
    %v927 = vpop.f32.mrb[0].mxu0
    %928 = vdwg.mxu0
    %v929 = vstv %s660
    %v930 = vmul.f32 %v926, %v929
    %v931 = vmul.f32 %v930, %v930
    %v933 = vrot.slane %v931, 7
    %v935 = vsub.f32 %v930, %v933
    %v936 = vmax.f32 %v935, 0.0
    %v937 = vadd.f32 %v936, 1e-05
    %v938 = vrsqrt.pop %v937
    %v939 = vld [vmem:[%s13 + $0x1] ss:$0 sm:$0xff]
    %v940 = vmul.f32 %v939, %v938
    %v941 = vld [vmem:[%s13 + $0x2] ss:$0 sm:$0xff]
    %v943 = vrot.slane %v940, 1
    %v945 = vmul.f32 %v930, %v943
    %v946 = vsub.f32 %v941, %v945
    %v948 = vrot.slane %v946, 7
    %v950 = vsel %vm652, %v943, %v948
    %v951 = vld [vmem:[%s3] sm:$0xff]
    %v952 = vld [vmem:[%s3 + $0x8] sm:$0xff]
    %v953 = vunpack.c.l.bf16 %v951
    %v954 = vunpack.c.h.bf16 %v951
    %v955 = vunpack.c.l.bf16 %v952
    %v956 = vunpack.c.h.bf16 %v952
    %vm957 = vcmask 64512
    %v959 = vsel %vm957, %v950, 0
    %961 = vmatprep.subr.mxu0 %v954
    %962 = vmatpush1.msra.mxu0 %v953
    %963 = vmatprep.subr.mxu0 0.0
    %964 = vmatpush1.msra.mxu0 0.0
    %965 = vmatprep.subr.mxu0 0.0
    %966 = vmatpush1.msra.mxu0 0.0
    %967 = vmatprep.subr.mxu0 0.0
    %968 = vmatpush1.msra.mxu0 0.0
    %969 = vmatprep.subr.mxu0 0.0
    %970 = vmatpush1.msra.mxu0 0.0
    %971 = vmatprep.subr.mxu0 0.0
    %972 = vmatpush1.msra.mxu0 0.0
    %973 = vmatprep.subr.mxu0 0.0
    %974 = vmatpush1.msra.mxu0 0.0
    %975 = vmatprep.subr.mxu0 0.0
    %976 = vmatpush1.msra.mxu0 0.0
    %977 = vmatprep.subr.mxu0 0.0
    %978 = vmatpush1.msra.mxu0 0.0
    %979 = vmatprep.subr.mxu0 0.0
    %980 = vmatpush1.msra.mxu0 0.0
    %981 = vmatprep.subr.mxu0 0.0
    %982 = vmatpush1.msra.mxu0 0.0
    %983 = vmatprep.subr.mxu0 0.0
    %984 = vmatpush1.msra.mxu0 0.0
    %985 = vmatprep.subr.mxu0 0.0
    %986 = vmatpush1.msra.mxu0 0.0
    %987 = vmatprep.subr.mxu0 0.0
    %988 = vmatpush1.msra.mxu0 0.0
    %989 = vmatprep.subr.mxu0 0.0
    %990 = vmatpush1.msra.mxu0 0.0
    %991 = vmatprep.subr.mxu0 0.0
    %992 = vmatpush1.msra.mxu0 0.0
    %993 = vmatprep.subr.mxu0 0.0
    %994 = vmatpush1.msra.mxu0 0.0
    %995 = vmatprep.subr.mxu0 0.0
    %996 = vmatpush1.msra.mxu0 0.0
    %997 = vmatprep.subr.mxu0 0.0
    %998 = vmatpush1.msra.mxu0 0.0
    %999 = vmatprep.subr.mxu0 0.0
    %1000 = vmatpush1.msra.mxu0 0.0
    %1001 = vmatprep.subr.mxu0 0.0
    %1002 = vmatpush1.msra.mxu0 0.0
    %1003 = vmatprep.subr.mxu0 0.0
    %1004 = vmatpush1.msra.mxu0 0.0
    %1005 = vmatprep.subr.mxu0 0.0
    %1006 = vmatpush1.msra.mxu0 0.0
    %1007 = vmatprep.subr.mxu0 0.0
    %1008 = vmatpush1.msra.mxu0 0.0
    %1009 = vmatprep.subr.mxu0 0.0
    %1010 = vmatpush1.msra.mxu0 0.0
    %1011 = vmatprep.subr.mxu0 0.0
    %1012 = vmatpush1.msra.mxu0 0.0
    %1013 = vmatprep.subr.mxu0 0.0
    %1014 = vmatpush1.msra.mxu0 0.0
    %1015 = vmatprep.subr.mxu0 0.0
    %1016 = vmatpush1.msra.mxu0 0.0
    %1017 = vmatprep.subr.mxu0 0.0
    %1018 = vmatpush1.msra.mxu0 0.0
    %1019 = vmatprep.subr.mxu0 0.0
    %1020 = vmatpush1.msra.mxu0 0.0
    %1021 = vmatprep.subr.mxu0 0.0
    %1022 = vmatpush1.msra.mxu0 0.0
    %1023 = vmatprep.subr.mxu0 0.0
    %1024 = vmatpush1.msra.mxu0 0.0
    %1025 = vmatprep.mubr.f32.mxu0 0.0
    %1026 = vmatmul.mubr.f32.gmra.mrb[0].mxu0 %v959
    %v1027 = vpop.f32.mrb[0].mxu0
    %v1028 = vadd.f32 0.0, %v1027
    %v1029 = vpop.f32.mrb[0].mxu0
    %v1030 = vadd.f32 0.0, %v1029
    %1031 = vdwg.mxu0
    %1032 = vmatprep.subr.mxu0 %v956
    %1033 = vmatpush1.msra.mxu0 %v955
    %1034 = vmatprep.subr.mxu0 0.0
    %1035 = vmatpush1.msra.mxu0 0.0
    %1036 = vmatprep.subr.mxu0 0.0
    %1037 = vmatpush1.msra.mxu0 0.0
    %1038 = vmatprep.subr.mxu0 0.0
    %1039 = vmatpush1.msra.mxu0 0.0
    %1040 = vmatprep.subr.mxu0 0.0
    %1041 = vmatpush1.msra.mxu0 0.0
    %1042 = vmatprep.subr.mxu0 0.0
    %1043 = vmatpush1.msra.mxu0 0.0
    %1044 = vmatprep.subr.mxu0 0.0
    %1045 = vmatpush1.msra.mxu0 0.0
    %1046 = vmatprep.subr.mxu0 0.0
    %1047 = vmatpush1.msra.mxu0 0.0
    %1048 = vmatprep.subr.mxu0 0.0
    %1049 = vmatpush1.msra.mxu0 0.0
    %1050 = vmatprep.subr.mxu0 0.0
    %1051 = vmatpush1.msra.mxu0 0.0
    %1052 = vmatprep.subr.mxu0 0.0
    %1053 = vmatpush1.msra.mxu0 0.0
    %1054 = vmatprep.subr.mxu0 0.0
    %1055 = vmatpush1.msra.mxu0 0.0
    %1056 = vmatprep.subr.mxu0 0.0
    %1057 = vmatpush1.msra.mxu0 0.0
    %1058 = vmatprep.subr.mxu0 0.0
    %1059 = vmatpush1.msra.mxu0 0.0
    %1060 = vmatprep.subr.mxu0 0.0
    %1061 = vmatpush1.msra.mxu0 0.0
    %1062 = vmatprep.subr.mxu0 0.0
    %1063 = vmatpush1.msra.mxu0 0.0
    %1064 = vmatprep.subr.mxu0 0.0
    %1065 = vmatpush1.msra.mxu0 0.0
    %1066 = vmatprep.subr.mxu0 0.0
    %1067 = vmatpush1.msra.mxu0 0.0
    %1068 = vmatprep.subr.mxu0 0.0
    %1069 = vmatpush1.msra.mxu0 0.0
    %1070 = vmatprep.subr.mxu0 0.0
    %1071 = vmatpush1.msra.mxu0 0.0
    %1072 = vmatprep.subr.mxu0 0.0
    %1073 = vmatpush1.msra.mxu0 0.0
    %1074 = vmatprep.subr.mxu0 0.0
    %1075 = vmatpush1.msra.mxu0 0.0
    %1076 = vmatprep.subr.mxu0 0.0
    %1077 = vmatpush1.msra.mxu0 0.0
    %1078 = vmatprep.subr.mxu0 0.0
    %1079 = vmatpush1.msra.mxu0 0.0
    %1080 = vmatprep.subr.mxu0 0.0
    %1081 = vmatpush1.msra.mxu0 0.0
    %1082 = vmatprep.subr.mxu0 0.0
    %1083 = vmatpush1.msra.mxu0 0.0
    %1084 = vmatprep.subr.mxu0 0.0
    %1085 = vmatpush1.msra.mxu0 0.0
    %1086 = vmatprep.subr.mxu0 0.0
    %1087 = vmatpush1.msra.mxu0 0.0
    %1088 = vmatprep.subr.mxu0 0.0
    %1089 = vmatpush1.msra.mxu0 0.0
    %1090 = vmatprep.subr.mxu0 0.0
    %1091 = vmatpush1.msra.mxu0 0.0
    %1092 = vmatprep.subr.mxu0 0.0
    %1093 = vmatpush1.msra.mxu0 0.0
    %1094 = vmatprep.subr.mxu0 0.0
    %1095 = vmatpush1.msra.mxu0 0.0
    %1096 = vmatprep.mubr.f32.mxu0 0.0
    %1097 = vmatmul.mubr.f32.gmra.mrb[0].mxu0 %v959
    %v1098 = vpop.f32.mrb[0].mxu0
    %v1099 = vadd.f32 0.0, %v1098
    %v1100 = vpop.f32.mrb[0].mxu0
    %v1101 = vadd.f32 0.0, %v1100
    %1102 = vdwg.mxu0
    %v1103 = vlaneseq
    %v1104 = vshrl.u32 %v1103, 7
    %v1105 = vsub.s32 0, %v1104
    %v1106 = vrot.slane %v1028, %v1105
    %v1107 = vlaneseq
    %v1108 = vshrl.u32 %v1107, 7
    %v1109 = vsub.s32 0, %v1108
    %v1110 = vrot.slane %v1030, %v1109
    %v1111 = vlaneseq
    %v1112 = vshrl.u32 %v1111, 7
    %v1113 = vsub.s32 0, %v1112
    %v1114 = vrot.slane %v1099, %v1113
    %v1115 = vlaneseq
    %v1116 = vshrl.u32 %v1115, 7
    %v1117 = vsub.s32 0, %v1116
    %v1118 = vrot.slane %v1101, %v1117
    %v1119 = vmul.f32 %v592, %v1106
    %v1120 = vmul.f32 %v593, %v1110
    %v1121 = vmul.f32 %v594, %v1114
    %v1122 = vmul.f32 %v595, %v1118
    %v1123 = vlaneseq
    %v1124 = vshrl.u32 %v1123, 7
    %v1125 = vsub.s32 1, %v1124
    %v1126 = vrot.slane %v1028, %v1125
    %v1127 = vlaneseq
    %v1128 = vshrl.u32 %v1127, 7
    %v1129 = vsub.s32 1, %v1128
    %v1130 = vrot.slane %v1030, %v1129
    %v1131 = vlaneseq
    %v1132 = vshrl.u32 %v1131, 7
    %v1133 = vsub.s32 1, %v1132
    %v1134 = vrot.slane %v1099, %v1133
    %v1135 = vlaneseq
    %v1136 = vshrl.u32 %v1135, 7
    %v1137 = vsub.s32 1, %v1136
    %v1138 = vrot.slane %v1101, %v1137
    %v1139 = vadd.f32 %v1119, %v1126
    %v1140 = vadd.f32 %v1120, %v1130
    %v1141 = vadd.f32 %v1121, %v1134
    %v1142 = vadd.f32 %v1122, %v1138
    %v1143 = vpack.c.bf16 %v1139, %v1139
    %v1144 = vpack.c.bf16 %v1140, %v1140
    %v1145 = vpack.c.bf16 %v1141, %v1141
    %v1146 = vpack.c.bf16 %v1142, %v1142
    %v1147 = vld [vmem:[#allocation2] sm:$0xff]
    %v1148 = vld [vmem:[#allocation2 + $0x8] sm:$0xff]
    %v1149 = vld [vmem:[#allocation2 + $0x10] sm:$0xff]
    %v1150 = vld [vmem:[#allocation2 + $0x18] sm:$0xff]
    %v1151 = vld [vmem:[#allocation2 + $0x20] sm:$0xff]
    %v1152 = vld [vmem:[#allocation2 + $0x28] sm:$0xff]
    %v1153 = vld [vmem:[#allocation2 + $0x30] sm:$0xff]
    %v1154 = vld [vmem:[#allocation2 + $0x38] sm:$0xff]
    %v1155 = vld [vmem:[#allocation2 + $0x40] sm:$0xff]
    %v1156 = vld [vmem:[#allocation2 + $0x48] sm:$0xff]
    %v1157 = vld [vmem:[#allocation2 + $0x50] sm:$0xff]
    %v1158 = vld [vmem:[#allocation2 + $0x58] sm:$0xff]
    %v1159 = vld [vmem:[#allocation2 + $0x60] sm:$0xff]
    %v1160 = vld [vmem:[#allocation2 + $0x68] sm:$0xff]
    %v1161 = vld [vmem:[#allocation2 + $0x70] sm:$0xff]
    %v1162 = vld [vmem:[#allocation2 + $0x78] sm:$0xff]
    %v1163 = vld [vmem:[#allocation2 + $0x80] sm:$0xff]
    %v1164 = vld [vmem:[#allocation2 + $0x88] sm:$0xff]
    %v1165 = vld [vmem:[#allocation2 + $0x90] sm:$0xff]
    %v1166 = vld [vmem:[#allocation2 + $0x98] sm:$0xff]
    %v1167 = vld [vmem:[#allocation2 + $0xa0] sm:$0xff]
    %v1168 = vld [vmem:[#allocation2 + $0xa8] sm:$0xff]
    %v1169 = vld [vmem:[#allocation2 + $0xb0] sm:$0xff]
    %v1170 = vld [vmem:[#allocation2 + $0xb8] sm:$0xff]
    %v1171 = vld [vmem:[#allocation2 + $0xc0] sm:$0xff]
    %v1172 = vld [vmem:[#allocation2 + $0xc8] sm:$0xff]
    %v1173 = vld [vmem:[#allocation2 + $0xd0] sm:$0xff]
    %v1174 = vld [vmem:[#allocation2 + $0xd8] sm:$0xff]
    %v1175 = vld [vmem:[#allocation2 + $0xe0] sm:$0xff]
    %v1176 = vld [vmem:[#allocation2 + $0xe8] sm:$0xff]
    %v1177 = vld [vmem:[#allocation2 + $0xf0] sm:$0xff]
    %v1178 = vld [vmem:[#allocation2 + $0xf8] sm:$0xff]
    %v1179 = vld [vmem:[#allocation2 + $0x100] sm:$0xff]
    %v1180 = vld [vmem:[#allocation2 + $0x108] sm:$0xff]
    %v1181 = vld [vmem:[#allocation2 + $0x110] sm:$0xff]
    %v1182 = vld [vmem:[#allocation2 + $0x118] sm:$0xff]
    %v1183 = vld [vmem:[#allocation2 + $0x120] sm:$0xff]
    %v1184 = vld [vmem:[#allocation2 + $0x128] sm:$0xff]
    %v1185 = vld [vmem:[#allocation2 + $0x130] sm:$0xff]
    %v1186 = vld [vmem:[#allocation2 + $0x138] sm:$0xff]
    %v1187 = vld [vmem:[#allocation2 + $0x140] sm:$0xff]
    %v1188 = vld [vmem:[#allocation2 + $0x148] sm:$0xff]
    %v1189 = vld [vmem:[#allocation2 + $0x150] sm:$0xff]
    %v1190 = vld [vmem:[#allocation2 + $0x158] sm:$0xff]
    %v1191 = vld [vmem:[#allocation2 + $0x160] sm:$0xff]
    %v1192 = vld [vmem:[#allocation2 + $0x168] sm:$0xff]
    %v1193 = vld [vmem:[#allocation2 + $0x170] sm:$0xff]
    %v1194 = vld [vmem:[#allocation2 + $0x178] sm:$0xff]
    %v1195 = vld [vmem:[#allocation2 + $0x180] sm:$0xff]
    %v1196 = vld [vmem:[#allocation2 + $0x188] sm:$0xff]
    %v1197 = vld [vmem:[#allocation2 + $0x190] sm:$0xff]
    %v1198 = vld [vmem:[#allocation2 + $0x198] sm:$0xff]
    %v1199 = vld [vmem:[#allocation2 + $0x1a0] sm:$0xff]
    %v1200 = vld [vmem:[#allocation2 + $0x1a8] sm:$0xff]
    %v1201 = vld [vmem:[#allocation2 + $0x1b0] sm:$0xff]
    %v1202 = vld [vmem:[#allocation2 + $0x1b8] sm:$0xff]
    %v1203 = vld [vmem:[#allocation2 + $0x1c0] sm:$0xff]
    %v1204 = vld [vmem:[#allocation2 + $0x1c8] sm:$0xff]
    %v1205 = vld [vmem:[#allocation2 + $0x1d0] sm:$0xff]
    %v1206 = vld [vmem:[#allocation2 + $0x1d8] sm:$0xff]
    %v1207 = vld [vmem:[#allocation2 + $0x1e0] sm:$0xff]
    %v1208 = vld [vmem:[#allocation2 + $0x1e8] sm:$0xff]
    %v1209 = vld [vmem:[#allocation2 + $0x1f0] sm:$0xff]
    %v1210 = vld [vmem:[#allocation2 + $0x1f8] sm:$0xff]
    %s1211 = scalar_lea.vmem %s13, 3
    %v1212 = vld [vmem:[%s1211] ss:$8 sm:$0x3]
    %v1214 = vlaneseq
    %v1215 = vshrl.u32 %v1214, 7
    %v1216 = vsub.s32 0, %v1215
    %v1217 = vrot.slane %v1212, %v1216
    %v1218 = vlaneseq
    %v1219 = vshrl.u32 %v1218, 7
    %v1220 = vsub.s32 1, %v1219
    %v1221 = vrot.slane %v1212, %v1220
    %v1288 = vunpack.c.l.b16 %v1147
    %v1289 = vunpack.c.h.b16 %v1147
    %v1290 = vunpack.c.l.b16 %v1148
    %v1291 = vunpack.c.h.b16 %v1148
    %v1292 = vunpack.c.l.b16 %v1149
    %v1293 = vunpack.c.h.b16 %v1149
    %v1294 = vunpack.c.l.b16 %v1150
    %v1295 = vunpack.c.h.b16 %v1150
    %v1296 = vunpack.c.l.b16 %v1151
    %v1297 = vunpack.c.h.b16 %v1151
    %v1298 = vunpack.c.l.b16 %v1152
    %v1299 = vunpack.c.h.b16 %v1152
    %v1300 = vunpack.c.l.b16 %v1153
    %v1301 = vunpack.c.h.b16 %v1153
    %v1302 = vunpack.c.l.b16 %v1154
    %v1303 = vunpack.c.h.b16 %v1154
    %v1304 = vunpack.c.l.b16 %v1155
    %v1305 = vunpack.c.h.b16 %v1155
    %v1306 = vunpack.c.l.b16 %v1156
    %v1307 = vunpack.c.h.b16 %v1156
    %v1308 = vunpack.c.l.b16 %v1157
    %v1309 = vunpack.c.h.b16 %v1157
    %v1310 = vunpack.c.l.b16 %v1158
    %v1311 = vunpack.c.h.b16 %v1158
    %v1312 = vunpack.c.l.b16 %v1159
    %v1313 = vunpack.c.h.b16 %v1159
    %v1314 = vunpack.c.l.b16 %v1160
    %v1315 = vunpack.c.h.b16 %v1160
    %v1316 = vunpack.c.l.b16 %v1161
    %v1317 = vunpack.c.h.b16 %v1161
    %v1318 = vunpack.c.l.b16 %v1162
    %v1319 = vunpack.c.h.b16 %v1162
    %v1320 = vunpack.c.l.b16 %v1163
    %v1321 = vunpack.c.h.b16 %v1163
    %v1322 = vunpack.c.l.b16 %v1164
    %v1323 = vunpack.c.h.b16 %v1164
    %v1324 = vunpack.c.l.b16 %v1165
    %v1325 = vunpack.c.h.b16 %v1165
    %v1326 = vunpack.c.l.b16 %v1166
    %v1327 = vunpack.c.h.b16 %v1166
    %v1328 = vunpack.c.l.b16 %v1167
    %v1329 = vunpack.c.h.b16 %v1167
    %v1330 = vunpack.c.l.b16 %v1168
    %v1331 = vunpack.c.h.b16 %v1168
    %v1332 = vunpack.c.l.b16 %v1169
    %v1333 = vunpack.c.h.b16 %v1169
    %v1334 = vunpack.c.l.b16 %v1170
    %v1335 = vunpack.c.h.b16 %v1170
    %v1336 = vunpack.c.l.b16 %v1171
    %v1337 = vunpack.c.h.b16 %v1171
    %v1338 = vunpack.c.l.b16 %v1172
    %v1339 = vunpack.c.h.b16 %v1172
    %v1340 = vunpack.c.l.b16 %v1173
    %v1341 = vunpack.c.h.b16 %v1173
    %v1342 = vunpack.c.l.b16 %v1174
    %v1343 = vunpack.c.h.b16 %v1174
    %v1344 = vunpack.c.l.b16 %v1175
    %v1345 = vunpack.c.h.b16 %v1175
    %v1346 = vunpack.c.l.b16 %v1176
    %v1347 = vunpack.c.h.b16 %v1176
    %v1348 = vunpack.c.l.b16 %v1177
    %v1349 = vunpack.c.h.b16 %v1177
    %v1350 = vunpack.c.l.b16 %v1178
    %v1351 = vunpack.c.h.b16 %v1178
    %v1352 = vunpack.c.l.b16 %v1179
    %v1353 = vunpack.c.h.b16 %v1179
    %v1354 = vunpack.c.l.b16 %v1180
    %v1355 = vunpack.c.h.b16 %v1180
    %v1356 = vunpack.c.l.b16 %v1181
    %v1357 = vunpack.c.h.b16 %v1181
    %v1358 = vunpack.c.l.b16 %v1182
    %v1359 = vunpack.c.h.b16 %v1182
    %v1360 = vunpack.c.l.b16 %v1183
    %v1361 = vunpack.c.h.b16 %v1183
    %v1362 = vunpack.c.l.b16 %v1184
    %v1363 = vunpack.c.h.b16 %v1184
    %v1364 = vunpack.c.l.b16 %v1185
    %v1365 = vunpack.c.h.b16 %v1185
    %v1366 = vunpack.c.l.b16 %v1186
    %v1367 = vunpack.c.h.b16 %v1186
    %v1368 = vunpack.c.l.b16 %v1187
    %v1369 = vunpack.c.h.b16 %v1187
    %v1370 = vunpack.c.l.b16 %v1188
    %v1371 = vunpack.c.h.b16 %v1188
    %v1372 = vunpack.c.l.b16 %v1189
    %v1373 = vunpack.c.h.b16 %v1189
    %v1374 = vunpack.c.l.b16 %v1190
    %v1375 = vunpack.c.h.b16 %v1190
    %v1376 = vunpack.c.l.b16 %v1191
    %v1377 = vunpack.c.h.b16 %v1191
    %v1378 = vunpack.c.l.b16 %v1192
    %v1379 = vunpack.c.h.b16 %v1192
    %v1380 = vunpack.c.l.b16 %v1193
    %v1381 = vunpack.c.h.b16 %v1193
    %v1382 = vunpack.c.l.b16 %v1194
    %v1383 = vunpack.c.h.b16 %v1194
    %v1384 = vunpack.c.l.b16 %v1195
    %v1385 = vunpack.c.h.b16 %v1195
    %v1386 = vunpack.c.l.b16 %v1196
    %v1387 = vunpack.c.h.b16 %v1196
    %v1388 = vunpack.c.l.b16 %v1197
    %v1389 = vunpack.c.h.b16 %v1197
    %v1390 = vunpack.c.l.b16 %v1198
    %v1391 = vunpack.c.h.b16 %v1198
    %v1392 = vunpack.c.l.b16 %v1199
    %v1393 = vunpack.c.h.b16 %v1199
    %v1394 = vunpack.c.l.b16 %v1200
    %v1395 = vunpack.c.h.b16 %v1200
    %v1396 = vunpack.c.l.b16 %v1201
    %v1397 = vunpack.c.h.b16 %v1201
    %v1398 = vunpack.c.l.b16 %v1202
    %v1399 = vunpack.c.h.b16 %v1202
    %v1400 = vunpack.c.l.b16 %v1203
    %v1401 = vunpack.c.h.b16 %v1203
    %v1402 = vunpack.c.l.b16 %v1204
    %v1403 = vunpack.c.h.b16 %v1204
    %v1404 = vunpack.c.l.b16 %v1205
    %v1405 = vunpack.c.h.b16 %v1205
    %v1406 = vunpack.c.l.b16 %v1206
    %v1407 = vunpack.c.h.b16 %v1206
    %v1408 = vunpack.c.l.b16 %v1207
    %v1409 = vunpack.c.h.b16 %v1207
    %v1410 = vunpack.c.l.b16 %v1208
    %v1411 = vunpack.c.h.b16 %v1208
    %v1412 = vunpack.c.l.b16 %v1209
    %v1413 = vunpack.c.h.b16 %v1209
    %v1414 = vunpack.c.l.b16 %v1210
    %v1415 = vunpack.c.h.b16 %v1210
    %v1416 = vpack.c.b16 %v1290, %v1288
    %v1417 = vpack.c.b16 %v1291, %v1289
    %v1418 = vpack.c.b16 %v1294, %v1292
    %v1419 = vpack.c.b16 %v1295, %v1293
    %v1420 = vpack.c.b16 %v1298, %v1296
    %v1421 = vpack.c.b16 %v1299, %v1297
    %v1422 = vpack.c.b16 %v1302, %v1300
    %v1423 = vpack.c.b16 %v1303, %v1301
    %v1424 = vpack.c.b16 %v1306, %v1304
    %v1425 = vpack.c.b16 %v1307, %v1305
    %v1426 = vpack.c.b16 %v1310, %v1308
    %v1427 = vpack.c.b16 %v1311, %v1309
    %v1428 = vpack.c.b16 %v1314, %v1312
    %v1429 = vpack.c.b16 %v1315, %v1313
    %v1430 = vpack.c.b16 %v1318, %v1316
    %v1431 = vpack.c.b16 %v1319, %v1317
    %v1432 = vpack.c.b16 %v1322, %v1320
    %v1433 = vpack.c.b16 %v1323, %v1321
    %v1434 = vpack.c.b16 %v1326, %v1324
    %v1435 = vpack.c.b16 %v1327, %v1325
    %v1436 = vpack.c.b16 %v1330, %v1328
    %v1437 = vpack.c.b16 %v1331, %v1329
    %v1438 = vpack.c.b16 %v1334, %v1332
    %v1439 = vpack.c.b16 %v1335, %v1333
    %v1440 = vpack.c.b16 %v1338, %v1336
    %v1441 = vpack.c.b16 %v1339, %v1337
    %v1442 = vpack.c.b16 %v1342, %v1340
    %v1443 = vpack.c.b16 %v1343, %v1341
    %v1444 = vpack.c.b16 %v1346, %v1344
    %v1445 = vpack.c.b16 %v1347, %v1345
    %v1446 = vpack.c.b16 %v1350, %v1348
    %v1447 = vpack.c.b16 %v1351, %v1349
    %v1448 = vpack.c.b16 %v1354, %v1352
    %v1449 = vpack.c.b16 %v1355, %v1353
    %v1450 = vpack.c.b16 %v1358, %v1356
    %v1451 = vpack.c.b16 %v1359, %v1357
    %v1452 = vpack.c.b16 %v1362, %v1360
    %v1453 = vpack.c.b16 %v1363, %v1361
    %v1454 = vpack.c.b16 %v1366, %v1364
    %v1455 = vpack.c.b16 %v1367, %v1365
    %v1456 = vpack.c.b16 %v1370, %v1368
    %v1457 = vpack.c.b16 %v1371, %v1369
    %v1458 = vpack.c.b16 %v1374, %v1372
    %v1459 = vpack.c.b16 %v1375, %v1373
    %v1460 = vpack.c.b16 %v1378, %v1376
    %v1461 = vpack.c.b16 %v1379, %v1377
    %v1462 = vpack.c.b16 %v1382, %v1380
    %v1463 = vpack.c.b16 %v1383, %v1381
    %v1464 = vpack.c.b16 %v1386, %v1384
    %v1465 = vpack.c.b16 %v1387, %v1385
    %v1466 = vpack.c.b16 %v1390, %v1388
    %v1467 = vpack.c.b16 %v1391, %v1389
    %v1468 = vpack.c.b16 %v1394, %v1392
    %v1469 = vpack.c.b16 %v1395, %v1393
    %v1470 = vpack.c.b16 %v1398, %v1396
    %v1471 = vpack.c.b16 %v1399, %v1397
    %v1472 = vpack.c.b16 %v1402, %v1400
    %v1473 = vpack.c.b16 %v1403, %v1401
    %v1474 = vpack.c.b16 %v1406, %v1404
    %v1475 = vpack.c.b16 %v1407, %v1405
    %v1476 = vpack.c.b16 %v1410, %v1408
    %v1477 = vpack.c.b16 %v1411, %v1409
    %v1478 = vpack.c.b16 %v1414, %v1412
    %v1479 = vpack.c.b16 %v1415, %v1413
    %1544 = vmatprep.subr.bf16.mxu0 %v1417
    %1545 = vmatpush1.bf16.msra.mxu0 %v1416
    %1546 = vmatprep.subr.bf16.mxu0 %v1419
    %1547 = vmatpush1.bf16.msra.mxu0 %v1418
    %1548 = vmatprep.subr.bf16.mxu0 %v1421
    %1549 = vmatpush1.bf16.msra.mxu0 %v1420
    %1550 = vmatprep.subr.bf16.mxu0 %v1423
    %1551 = vmatpush1.bf16.msra.mxu0 %v1422
    %1552 = vmatprep.subr.bf16.mxu0 %v1425
    %1553 = vmatpush1.bf16.msra.mxu0 %v1424
    %1554 = vmatprep.subr.bf16.mxu0 %v1427
    %1555 = vmatpush1.bf16.msra.mxu0 %v1426
    %1556 = vmatprep.subr.bf16.mxu0 %v1429
    %1557 = vmatpush1.bf16.msra.mxu0 %v1428
    %1558 = vmatprep.subr.bf16.mxu0 %v1431
    %1559 = vmatpush1.bf16.msra.mxu0 %v1430
    %1560 = vmatprep.subr.bf16.mxu0 %v1433
    %1561 = vmatpush1.bf16.msra.mxu0 %v1432
    %1562 = vmatprep.subr.bf16.mxu0 %v1435
    %1563 = vmatpush1.bf16.msra.mxu0 %v1434
    %1564 = vmatprep.subr.bf16.mxu0 %v1437
    %1565 = vmatpush1.bf16.msra.mxu0 %v1436
    %1566 = vmatprep.subr.bf16.mxu0 %v1439
    %1567 = vmatpush1.bf16.msra.mxu0 %v1438
    %1568 = vmatprep.subr.bf16.mxu0 %v1441
    %1569 = vmatpush1.bf16.msra.mxu0 %v1440
    %1570 = vmatprep.subr.bf16.mxu0 %v1443
    %1571 = vmatpush1.bf16.msra.mxu0 %v1442
    %1572 = vmatprep.subr.bf16.mxu0 %v1445
    %1573 = vmatpush1.bf16.msra.mxu0 %v1444
    %1574 = vmatprep.subr.bf16.mxu0 %v1447
    %1575 = vmatpush1.bf16.msra.mxu0 %v1446
    %1576 = vmatprep.mubr.bf16.mxu0 %v1144
    %1577 = vmatmul.mubr.bf16.gmra.mrb[0].mxu0 %v1143
    %v1578 = vpop.f32.mrb[0].mxu0
    %v1579 = vadd.f32 %v1217, %v1578
    %v1580 = vpop.f32.mrb[0].mxu0
    %v1581 = vadd.f32 %v1221, %v1580
    %v1582 = vpop.f32.mrb[0].mxu0
    %v1583 = vpop.f32.mrb[0].mxu0
    %1584 = vdwg.mxu0
    %1585 = vmatprep.subr.bf16.mxu0 %v1449
    %1586 = vmatpush1.bf16.msra.mxu0 %v1448
    %1587 = vmatprep.subr.bf16.mxu0 %v1451
    %1588 = vmatpush1.bf16.msra.mxu0 %v1450
    %1589 = vmatprep.subr.bf16.mxu0 %v1453
    %1590 = vmatpush1.bf16.msra.mxu0 %v1452
    %1591 = vmatprep.subr.bf16.mxu0 %v1455
    %1592 = vmatpush1.bf16.msra.mxu0 %v1454
    %1593 = vmatprep.subr.bf16.mxu0 %v1457
    %1594 = vmatpush1.bf16.msra.mxu0 %v1456
    %1595 = vmatprep.subr.bf16.mxu0 %v1459
    %1596 = vmatpush1.bf16.msra.mxu0 %v1458
    %1597 = vmatprep.subr.bf16.mxu0 %v1461
    %1598 = vmatpush1.bf16.msra.mxu0 %v1460
    %1599 = vmatprep.subr.bf16.mxu0 %v1463
    %1600 = vmatpush1.bf16.msra.mxu0 %v1462
    %1601 = vmatprep.subr.bf16.mxu0 %v1465
    %1602 = vmatpush1.bf16.msra.mxu0 %v1464
    %1603 = vmatprep.subr.bf16.mxu0 %v1467
    %1604 = vmatpush1.bf16.msra.mxu0 %v1466
    %1605 = vmatprep.subr.bf16.mxu0 %v1469
    %1606 = vmatpush1.bf16.msra.mxu0 %v1468
    %1607 = vmatprep.subr.bf16.mxu0 %v1471
    %1608 = vmatpush1.bf16.msra.mxu0 %v1470
    %1609 = vmatprep.subr.bf16.mxu0 %v1473
    %1610 = vmatpush1.bf16.msra.mxu0 %v1472
    %1611 = vmatprep.subr.bf16.mxu0 %v1475
    %1612 = vmatpush1.bf16.msra.mxu0 %v1474
    %1613 = vmatprep.subr.bf16.mxu0 %v1477
    %1614 = vmatpush1.bf16.msra.mxu0 %v1476
    %1615 = vmatprep.subr.bf16.mxu0 %v1479
    %1616 = vmatpush1.bf16.msra.mxu0 %v1478
    %1617 = vmatprep.mubr.bf16.mxu0 %v1146
    %1618 = vmatmul.mubr.bf16.gmra.mrb[0].mxu0 %v1145
    %v1619 = vpop.f32.mrb[0].mxu0
    %v1620 = vadd.f32 %v1579, %v1619
    %v1621 = vpop.f32.mrb[0].mxu0
    %v1622 = vadd.f32 %v1581, %v1621
    %v1623 = vpop.f32.mrb[0].mxu0
    %v1624 = vpop.f32.mrb[0].mxu0
    %1625 = vdwg.mxu0
    %v1626 = vmax.f32 %v1620, 0.0
    %v1627 = vmax.f32 %v1622, 0.0
    %v1628 = vmul.f32 %v1626, %v98
    %v1629 = vmul.f32 %v1627, %v98
    %v1630 = vrot.slane %v1628, 4
    %v1631 = vadd.f32 %v1628, %v1630
    %v1632 = vrot.slane %v1631, 2
    %v1633 = vadd.f32 %v1631, %v1632
    %v1634 = vrot.slane %v1633, 1
    %v1635 = vadd.f32 %v1633, %v1634
    %v1636 = vrot.slane %v1629, 4
    %v1637 = vadd.f32 %v1629, %v1636
    %v1638 = vrot.slane %v1637, 2
    %v1639 = vadd.f32 %v1637, %v1638
    %v1640 = vrot.slane %v1639, 1
    %v1641 = vadd.f32 %v1639, %v1640
    %v1642 = vmul.f32 %v1628, %v1628
    %v1643 = vmul.f32 %v1629, %v1629
    %v1644 = vrot.slane %v1642, 4
    %v1645 = vadd.f32 %v1642, %v1644
    %v1646 = vrot.slane %v1645, 2
    %v1647 = vadd.f32 %v1645, %v1646
    %v1648 = vrot.slane %v1647, 1
    %v1649 = vadd.f32 %v1647, %v1648
    %v1650 = vrot.slane %v1643, 4
    %v1651 = vadd.f32 %v1643, %v1650
    %v1652 = vrot.slane %v1651, 2
    %v1653 = vadd.f32 %v1651, %v1652
    %v1654 = vrot.slane %v1653, 1
    %v1655 = vadd.f32 %v1653, %v1654
    %v1656 = vsel %vm652, %v1635, %v1649
    %v1657 = vsel %vm652, %v1641, %v1655
    %s1658 = smul.f32 %s99, 16.0
    %v1659 = vstv %s1658
    %v1660 = vrcp.pop %v1659
    %s1661 = vtos %v1660
    %v1662 = vld [vmem:[%s5] sm:$0xf]
    %v1663 = vld [vmem:[%s5 + $0x4] sm:$0xf]
    %v1664 = vld [vmem:[%s5 + $0x8] sm:$0xf]
    %v1665 = vld [vmem:[%s5 + $0xc] sm:$0xf]
    %v1666 = vld [vmem:[%s5 + $0x10] sm:$0xf]
    %v1667 = vld [vmem:[%s5 + $0x14] sm:$0xf]
    %v1668 = vld [vmem:[%s5 + $0x18] sm:$0xf]
    %v1669 = vld [vmem:[%s5 + $0x1c] sm:$0xf]
    %v1670 = vld [vmem:[%s5 + $0x20] sm:$0xf]
    %v1671 = vld [vmem:[%s5 + $0x24] sm:$0xf]
    %v1672 = vld [vmem:[%s5 + $0x28] sm:$0xf]
    %v1673 = vld [vmem:[%s5 + $0x2c] sm:$0xf]
    %v1674 = vld [vmem:[%s5 + $0x30] sm:$0xf]
    %v1675 = vld [vmem:[%s5 + $0x34] sm:$0xf]
    %v1676 = vld [vmem:[%s5 + $0x38] sm:$0xf]
    %v1677 = vld [vmem:[%s5 + $0x3c] sm:$0xf]
    %v1678 = vld [vmem:[%s5 + $0x40] sm:$0xf]
    %v1679 = vld [vmem:[%s5 + $0x44] sm:$0xf]
    %v1680 = vld [vmem:[%s5 + $0x48] sm:$0xf]
    %v1681 = vld [vmem:[%s5 + $0x4c] sm:$0xf]
    %v1682 = vld [vmem:[%s5 + $0x50] sm:$0xf]
    %v1683 = vld [vmem:[%s5 + $0x54] sm:$0xf]
    %v1684 = vld [vmem:[%s5 + $0x58] sm:$0xf]
    %v1685 = vld [vmem:[%s5 + $0x5c] sm:$0xf]
    %v1686 = vld [vmem:[%s5 + $0x60] sm:$0xf]
    %v1687 = vld [vmem:[%s5 + $0x64] sm:$0xf]
    %v1688 = vld [vmem:[%s5 + $0x68] sm:$0xf]
    %v1689 = vld [vmem:[%s5 + $0x6c] sm:$0xf]
    %v1690 = vld [vmem:[%s5 + $0x70] sm:$0xf]
    %v1691 = vld [vmem:[%s5 + $0x74] sm:$0xf]
    %v1692 = vld [vmem:[%s5 + $0x78] sm:$0xf]
    %v1693 = vld [vmem:[%s5 + $0x7c] sm:$0xf]
    %v1694 = vunpack.c.l.bf16 %v1662
    %v1695 = vunpack.c.l.bf16 %v1663
    %v1696 = vunpack.c.l.bf16 %v1664
    %v1697 = vunpack.c.l.bf16 %v1665
    %v1698 = vunpack.c.l.bf16 %v1666
    %v1699 = vunpack.c.l.bf16 %v1667
    %v1700 = vunpack.c.l.bf16 %v1668
    %v1701 = vunpack.c.l.bf16 %v1669
    %v1702 = vunpack.c.l.bf16 %v1670
    %v1703 = vunpack.c.l.bf16 %v1671
    %v1704 = vunpack.c.l.bf16 %v1672
    %v1705 = vunpack.c.l.bf16 %v1673
    %v1706 = vunpack.c.l.bf16 %v1674
    %v1707 = vunpack.c.l.bf16 %v1675
    %v1708 = vunpack.c.l.bf16 %v1676
    %v1709 = vunpack.c.l.bf16 %v1677
    %v1710 = vunpack.c.l.bf16 %v1678
    %v1711 = vunpack.c.l.bf16 %v1679
    %v1712 = vunpack.c.l.bf16 %v1680
    %v1713 = vunpack.c.l.bf16 %v1681
    %v1714 = vunpack.c.l.bf16 %v1682
    %v1715 = vunpack.c.l.bf16 %v1683
    %v1716 = vunpack.c.l.bf16 %v1684
    %v1717 = vunpack.c.l.bf16 %v1685
    %v1718 = vunpack.c.l.bf16 %v1686
    %v1719 = vunpack.c.l.bf16 %v1687
    %v1720 = vunpack.c.l.bf16 %v1688
    %v1721 = vunpack.c.l.bf16 %v1689
    %v1722 = vunpack.c.l.bf16 %v1690
    %v1723 = vunpack.c.l.bf16 %v1691
    %v1724 = vunpack.c.l.bf16 %v1692
    %v1725 = vunpack.c.l.bf16 %v1693
    %1726 = vmatprep.subr.mxu0 0.0
    %1727 = vmatpush1.msra.mxu0 %v1694
    %1728 = vmatprep.subr.mxu0 0.0
    %1729 = vmatpush1.msra.mxu0 %v1695
    %1730 = vmatprep.subr.mxu0 0.0
    %1731 = vmatpush1.msra.mxu0 %v1696
    %1732 = vmatprep.subr.mxu0 0.0
    %1733 = vmatpush1.msra.mxu0 %v1697
    %1734 = vmatprep.subr.mxu0 0.0
    %1735 = vmatpush1.msra.mxu0 %v1698
    %1736 = vmatprep.subr.mxu0 0.0
    %1737 = vmatpush1.msra.mxu0 %v1699
    %1738 = vmatprep.subr.mxu0 0.0
    %1739 = vmatpush1.msra.mxu0 %v1700
    %1740 = vmatprep.subr.mxu0 0.0
    %1741 = vmatpush1.msra.mxu0 %v1701
    %1742 = vmatprep.subr.mxu0 0.0
    %1743 = vmatpush1.msra.mxu0 %v1702
    %1744 = vmatprep.subr.mxu0 0.0
    %1745 = vmatpush1.msra.mxu0 %v1703
    %1746 = vmatprep.subr.mxu0 0.0
    %1747 = vmatpush1.msra.mxu0 %v1704
    %1748 = vmatprep.subr.mxu0 0.0
    %1749 = vmatpush1.msra.mxu0 %v1705
    %1750 = vmatprep.subr.mxu0 0.0
    %1751 = vmatpush1.msra.mxu0 %v1706
    %1752 = vmatprep.subr.mxu0 0.0
    %1753 = vmatpush1.msra.mxu0 %v1707
    %1754 = vmatprep.subr.mxu0 0.0
    %1755 = vmatpush1.msra.mxu0 %v1708
    %1756 = vmatprep.subr.mxu0 0.0
    %1757 = vmatpush1.msra.mxu0 %v1709
    %1758 = vmatprep.subr.mxu0 0.0
    %1759 = vmatpush1.msra.mxu0 %v1710
    %1760 = vmatprep.subr.mxu0 0.0
    %1761 = vmatpush1.msra.mxu0 %v1711
    %1762 = vmatprep.subr.mxu0 0.0
    %1763 = vmatpush1.msra.mxu0 %v1712
    %1764 = vmatprep.subr.mxu0 0.0
    %1765 = vmatpush1.msra.mxu0 %v1713
    %1766 = vmatprep.subr.mxu0 0.0
    %1767 = vmatpush1.msra.mxu0 %v1714
    %1768 = vmatprep.subr.mxu0 0.0
    %1769 = vmatpush1.msra.mxu0 %v1715
    %1770 = vmatprep.subr.mxu0 0.0
    %1771 = vmatpush1.msra.mxu0 %v1716
    %1772 = vmatprep.subr.mxu0 0.0
    %1773 = vmatpush1.msra.mxu0 %v1717
    %1774 = vmatprep.subr.mxu0 0.0
    %1775 = vmatpush1.msra.mxu0 %v1718
    %1776 = vmatprep.subr.mxu0 0.0
    %1777 = vmatpush1.msra.mxu0 %v1719
    %1778 = vmatprep.subr.mxu0 0.0
    %1779 = vmatpush1.msra.mxu0 %v1720
    %1780 = vmatprep.subr.mxu0 0.0
    %1781 = vmatpush1.msra.mxu0 %v1721
    %1782 = vmatprep.subr.mxu0 0.0
    %1783 = vmatpush1.msra.mxu0 %v1722
    %1784 = vmatprep.subr.mxu0 0.0
    %1785 = vmatpush1.msra.mxu0 %v1723
    %1786 = vmatprep.subr.mxu0 0.0
    %1787 = vmatpush1.msra.mxu0 %v1724
    %1788 = vmatprep.subr.mxu0 0.0
    %1789 = vmatpush1.msra.mxu0 %v1725
    %1790 = vmatprep.mubr.f32.mxu0 %v1657
    %1791 = vmatmul.mubr.f32.gmra.mrb[0].mxu0 %v1656
    %v1792 = vpop.f32.mrb[0].mxu0
    %v1793 = vadd.f32 0.0, %v1792
    %v1794 = vpop.f32.mrb[0].mxu0
    %1795 = vdwg.mxu0
    %v1796 = vstv %s1661
    %v1797 = vmul.f32 %v1793, %v1796
    %v1798 = vmul.f32 %v1797, %v1797
    %v1800 = vrot.slane %v1798, 7
    %v1802 = vsub.f32 %v1797, %v1800
    %v1803 = vmax.f32 %v1802, 0.0
    %v1804 = vadd.f32 %v1803, 1e-05
    %v1805 = vrsqrt.pop %v1804
    %v1806 = vld [vmem:[%s13 + $0x4] ss:$0 sm:$0xff]
    %v1807 = vmul.f32 %v1806, %v1805
    %v1808 = vld [vmem:[%s13 + $0x5] ss:$0 sm:$0xff]
    %v1810 = vrot.slane %v1807, 1
    %v1812 = vmul.f32 %v1797, %v1810
    %v1813 = vsub.f32 %v1808, %v1812
    %v1815 = vrot.slane %v1813, 7
    %v1817 = vsel %vm652, %v1810, %v1815
    %v1818 = vld [vmem:[%s6] sm:$0xff]
    %v1819 = vld [vmem:[%s6 + $0x8] sm:$0xff]
    %v1820 = vunpack.c.l.bf16 %v1818
    %v1821 = vunpack.c.h.bf16 %v1818
    %v1822 = vunpack.c.l.bf16 %v1819
    %v1823 = vunpack.c.h.bf16 %v1819
    %vm1824 = vcmask 130048
    %v1826 = vsel %vm1824, %v1817, 0
    %1828 = vmatprep.subr.mxu0 %v1821
    %1829 = vmatpush1.msra.mxu0 %v1820
    %1830 = vmatprep.subr.mxu0 %v1823
    %1831 = vmatpush1.msra.mxu0 %v1822
    %1832 = vmatprep.subr.mxu0 0.0
    %1833 = vmatpush1.msra.mxu0 0.0
    %1834 = vmatprep.subr.mxu0 0.0
    %1835 = vmatpush1.msra.mxu0 0.0
    %1836 = vmatprep.subr.mxu0 0.0
    %1837 = vmatpush1.msra.mxu0 0.0
    %1838 = vmatprep.subr.mxu0 0.0
    %1839 = vmatpush1.msra.mxu0 0.0
    %1840 = vmatprep.subr.mxu0 0.0
    %1841 = vmatpush1.msra.mxu0 0.0
    %1842 = vmatprep.subr.mxu0 0.0
    %1843 = vmatpush1.msra.mxu0 0.0
    %1844 = vmatprep.subr.mxu0 0.0
    %1845 = vmatpush1.msra.mxu0 0.0
    %1846 = vmatprep.subr.mxu0 0.0
    %1847 = vmatpush1.msra.mxu0 0.0
    %1848 = vmatprep.subr.mxu0 0.0
    %1849 = vmatpush1.msra.mxu0 0.0
    %1850 = vmatprep.subr.mxu0 0.0
    %1851 = vmatpush1.msra.mxu0 0.0
    %1852 = vmatprep.subr.mxu0 0.0
    %1853 = vmatpush1.msra.mxu0 0.0
    %1854 = vmatprep.subr.mxu0 0.0
    %1855 = vmatpush1.msra.mxu0 0.0
    %1856 = vmatprep.subr.mxu0 0.0
    %1857 = vmatpush1.msra.mxu0 0.0
    %1858 = vmatprep.subr.mxu0 0.0
    %1859 = vmatpush1.msra.mxu0 0.0
    %1860 = vmatprep.subr.mxu0 0.0
    %1861 = vmatpush1.msra.mxu0 0.0
    %1862 = vmatprep.subr.mxu0 0.0
    %1863 = vmatpush1.msra.mxu0 0.0
    %1864 = vmatprep.subr.mxu0 0.0
    %1865 = vmatpush1.msra.mxu0 0.0
    %1866 = vmatprep.subr.mxu0 0.0
    %1867 = vmatpush1.msra.mxu0 0.0
    %1868 = vmatprep.subr.mxu0 0.0
    %1869 = vmatpush1.msra.mxu0 0.0
    %1870 = vmatprep.subr.mxu0 0.0
    %1871 = vmatpush1.msra.mxu0 0.0
    %1872 = vmatprep.subr.mxu0 0.0
    %1873 = vmatpush1.msra.mxu0 0.0
    %1874 = vmatprep.subr.mxu0 0.0
    %1875 = vmatpush1.msra.mxu0 0.0
    %1876 = vmatprep.subr.mxu0 0.0
    %1877 = vmatpush1.msra.mxu0 0.0
    %1878 = vmatprep.subr.mxu0 0.0
    %1879 = vmatpush1.msra.mxu0 0.0
    %1880 = vmatprep.subr.mxu0 0.0
    %1881 = vmatpush1.msra.mxu0 0.0
    %1882 = vmatprep.subr.mxu0 0.0
    %1883 = vmatpush1.msra.mxu0 0.0
    %1884 = vmatprep.subr.mxu0 0.0
    %1885 = vmatpush1.msra.mxu0 0.0
    %1886 = vmatprep.subr.mxu0 0.0
    %1887 = vmatpush1.msra.mxu0 0.0
    %1888 = vmatprep.subr.mxu0 0.0
    %1889 = vmatpush1.msra.mxu0 0.0
    %1890 = vmatprep.subr.mxu0 0.0
    %1891 = vmatpush1.msra.mxu0 0.0
    %1892 = vmatprep.mubr.f32.mxu0 0.0
    %1893 = vmatmul.mubr.f32.gmra.mrb[0].mxu0 %v1826
    %v1894 = vpop.f32.mrb[0].mxu0
    %v1895 = vadd.f32 0.0, %v1894
    %v1896 = vpop.f32.mrb[0].mxu0
    %v1897 = vadd.f32 0.0, %v1896
    %1898 = vdwg.mxu0
    %v1899 = vlaneseq
    %v1900 = vshrl.u32 %v1899, 7
    %v1901 = vsub.s32 0, %v1900
    %v1902 = vrot.slane %v1895, %v1901
    %v1903 = vlaneseq
    %v1904 = vshrl.u32 %v1903, 7
    %v1905 = vsub.s32 0, %v1904
    %v1906 = vrot.slane %v1897, %v1905
    %v1907 = vmul.f32 %v1626, %v1902
    %v1908 = vmul.f32 %v1627, %v1906
    %v1909 = vlaneseq
    %v1910 = vshrl.u32 %v1909, 7
    %v1911 = vsub.s32 1, %v1910
    %v1912 = vrot.slane %v1895, %v1911
    %v1913 = vlaneseq
    %v1914 = vshrl.u32 %v1913, 7
    %v1915 = vsub.s32 1, %v1914
    %v1916 = vrot.slane %v1897, %v1915
    %v1917 = vadd.f32 %v1907, %v1912
    %v1918 = vadd.f32 %v1908, %v1916
    %v1919 = vpack.c.bf16 %v1917, %v1917
    %v1920 = vpack.c.bf16 %v1918, %v1918
    %v1921 = vld [vmem:[%s7] sm:$0xf]
    %v1922 = vld [vmem:[%s7 + $0x4] sm:$0xf]
    %v1923 = vld [vmem:[%s7 + $0x8] sm:$0xf]
    %v1924 = vld [vmem:[%s7 + $0xc] sm:$0xf]
    %v1925 = vld [vmem:[%s7 + $0x10] sm:$0xf]
    %v1926 = vld [vmem:[%s7 + $0x14] sm:$0xf]
    %v1927 = vld [vmem:[%s7 + $0x18] sm:$0xf]
    %v1928 = vld [vmem:[%s7 + $0x1c] sm:$0xf]
    %v1929 = vld [vmem:[%s7 + $0x20] sm:$0xf]
    %v1930 = vld [vmem:[%s7 + $0x24] sm:$0xf]
    %v1931 = vld [vmem:[%s7 + $0x28] sm:$0xf]
    %v1932 = vld [vmem:[%s7 + $0x2c] sm:$0xf]
    %v1933 = vld [vmem:[%s7 + $0x30] sm:$0xf]
    %v1934 = vld [vmem:[%s7 + $0x34] sm:$0xf]
    %v1935 = vld [vmem:[%s7 + $0x38] sm:$0xf]
    %v1936 = vld [vmem:[%s7 + $0x3c] sm:$0xf]
    %v1937 = vld [vmem:[%s7 + $0x40] sm:$0xf]
    %v1938 = vld [vmem:[%s7 + $0x44] sm:$0xf]
    %v1939 = vld [vmem:[%s7 + $0x48] sm:$0xf]
    %v1940 = vld [vmem:[%s7 + $0x4c] sm:$0xf]
    %v1941 = vld [vmem:[%s7 + $0x50] sm:$0xf]
    %v1942 = vld [vmem:[%s7 + $0x54] sm:$0xf]
    %v1943 = vld [vmem:[%s7 + $0x58] sm:$0xf]
    %v1944 = vld [vmem:[%s7 + $0x5c] sm:$0xf]
    %v1945 = vld [vmem:[%s7 + $0x60] sm:$0xf]
    %v1946 = vld [vmem:[%s7 + $0x64] sm:$0xf]
    %v1947 = vld [vmem:[%s7 + $0x68] sm:$0xf]
    %v1948 = vld [vmem:[%s7 + $0x6c] sm:$0xf]
    %v1949 = vld [vmem:[%s7 + $0x70] sm:$0xf]
    %v1950 = vld [vmem:[%s7 + $0x74] sm:$0xf]
    %v1951 = vld [vmem:[%s7 + $0x78] sm:$0xf]
    %v1952 = vld [vmem:[%s7 + $0x7c] sm:$0xf]
    %v1953 = vld [vmem:[%s13 + $0x6] ss:$0 sm:$0xff]
    %v1986 = vunpack.c.l.b16 %v1921
    %v1987 = vunpack.c.l.b16 %v1922
    %v1988 = vunpack.c.l.b16 %v1923
    %v1989 = vunpack.c.l.b16 %v1924
    %v1990 = vunpack.c.l.b16 %v1925
    %v1991 = vunpack.c.l.b16 %v1926
    %v1992 = vunpack.c.l.b16 %v1927
    %v1993 = vunpack.c.l.b16 %v1928
    %v1994 = vunpack.c.l.b16 %v1929
    %v1995 = vunpack.c.l.b16 %v1930
    %v1996 = vunpack.c.l.b16 %v1931
    %v1997 = vunpack.c.l.b16 %v1932
    %v1998 = vunpack.c.l.b16 %v1933
    %v1999 = vunpack.c.l.b16 %v1934
    %v2000 = vunpack.c.l.b16 %v1935
    %v2001 = vunpack.c.l.b16 %v1936
    %v2002 = vunpack.c.l.b16 %v1937
    %v2003 = vunpack.c.l.b16 %v1938
    %v2004 = vunpack.c.l.b16 %v1939
    %v2005 = vunpack.c.l.b16 %v1940
    %v2006 = vunpack.c.l.b16 %v1941
    %v2007 = vunpack.c.l.b16 %v1942
    %v2008 = vunpack.c.l.b16 %v1943
    %v2009 = vunpack.c.l.b16 %v1944
    %v2010 = vunpack.c.l.b16 %v1945
    %v2011 = vunpack.c.l.b16 %v1946
    %v2012 = vunpack.c.l.b16 %v1947
    %v2013 = vunpack.c.l.b16 %v1948
    %v2014 = vunpack.c.l.b16 %v1949
    %v2015 = vunpack.c.l.b16 %v1950
    %v2016 = vunpack.c.l.b16 %v1951
    %v2017 = vunpack.c.l.b16 %v1952
    %v2018 = vpack.c.b16 %v1987, %v1986
    %v2019 = vpack.c.b16 %v1989, %v1988
    %v2020 = vpack.c.b16 %v1991, %v1990
    %v2021 = vpack.c.b16 %v1993, %v1992
    %v2022 = vpack.c.b16 %v1995, %v1994
    %v2023 = vpack.c.b16 %v1997, %v1996
    %v2024 = vpack.c.b16 %v1999, %v1998
    %v2025 = vpack.c.b16 %v2001, %v2000
    %v2026 = vpack.c.b16 %v2003, %v2002
    %v2027 = vpack.c.b16 %v2005, %v2004
    %v2028 = vpack.c.b16 %v2007, %v2006
    %v2029 = vpack.c.b16 %v2009, %v2008
    %v2030 = vpack.c.b16 %v2011, %v2010
    %v2031 = vpack.c.b16 %v2013, %v2012
    %v2032 = vpack.c.b16 %v2015, %v2014
    %v2033 = vpack.c.b16 %v2017, %v2016
    %2050 = vmatprep.subr.bf16.mxu0 0
    %2051 = vmatpush1.bf16.msra.mxu0 %v2018
    %2052 = vmatprep.subr.bf16.mxu0 0
    %2053 = vmatpush1.bf16.msra.mxu0 %v2019
    %2054 = vmatprep.subr.bf16.mxu0 0
    %2055 = vmatpush1.bf16.msra.mxu0 %v2020
    %2056 = vmatprep.subr.bf16.mxu0 0
    %2057 = vmatpush1.bf16.msra.mxu0 %v2021
    %2058 = vmatprep.subr.bf16.mxu0 0
    %2059 = vmatpush1.bf16.msra.mxu0 %v2022
    %2060 = vmatprep.subr.bf16.mxu0 0
    %2061 = vmatpush1.bf16.msra.mxu0 %v2023
    %2062 = vmatprep.subr.bf16.mxu0 0
    %2063 = vmatpush1.bf16.msra.mxu0 %v2024
    %2064 = vmatprep.subr.bf16.mxu0 0
    %2065 = vmatpush1.bf16.msra.mxu0 %v2025
    %2066 = vmatprep.subr.bf16.mxu0 0
    %2067 = vmatpush1.bf16.msra.mxu0 %v2026
    %2068 = vmatprep.subr.bf16.mxu0 0
    %2069 = vmatpush1.bf16.msra.mxu0 %v2027
    %2070 = vmatprep.subr.bf16.mxu0 0
    %2071 = vmatpush1.bf16.msra.mxu0 %v2028
    %2072 = vmatprep.subr.bf16.mxu0 0
    %2073 = vmatpush1.bf16.msra.mxu0 %v2029
    %2074 = vmatprep.subr.bf16.mxu0 0
    %2075 = vmatpush1.bf16.msra.mxu0 %v2030
    %2076 = vmatprep.subr.bf16.mxu0 0
    %2077 = vmatpush1.bf16.msra.mxu0 %v2031
    %2078 = vmatprep.subr.bf16.mxu0 0
    %2079 = vmatpush1.bf16.msra.mxu0 %v2032
    %2080 = vmatprep.subr.bf16.mxu0 0
    %2081 = vmatpush1.bf16.msra.mxu0 %v2033
    %2082 = vmatprep.mubr.bf16.mxu0 %v1920
    %2083 = vmatmul.mubr.bf16.gmra.mrb[0].mxu0 %v1919
    %v2084 = vpop.f32.mrb[0].mxu0
    %v2085 = vadd.f32 %v1953, %v2084
    %v2086 = vpop.f32.mrb[0].mxu0
    %v2087 = vpop.f32.mrb[0].mxu0
    %v2088 = vpop.f32.mrb[0].mxu0
    %2089 = vdwg.mxu0
    %v2090 = vpack.c.bf16 %v2085, %v2085
    %v2091 = vld [vmem:[%s8] sm:$0xff]
    %v2092 = vld [vmem:[%s8 + $0x8] sm:$0xff]
    %v2093 = vld [vmem:[%s8 + $0x10] sm:$0xff]
    %v2094 = vld [vmem:[%s8 + $0x18] sm:$0xff]
    %s2095 = scalar_lea.vmem %s13, 7
    %v2096 = vld [vmem:[%s2095] ss:$8 sm:$0x3]
    %v2098 = vlaneseq
    %v2099 = vshrl.u32 %v2098, 7
    %v2100 = vsub.s32 0, %v2099
    %v2101 = vrot.slane %v2096, %v2100
    %v2102 = vlaneseq
    %v2103 = vshrl.u32 %v2102, 7
    %v2104 = vsub.s32 1, %v2103
    %v2105 = vrot.slane %v2096, %v2104
    %v2112 = vunpack.c.l.b16 %v2091
    %v2113 = vunpack.c.h.b16 %v2091
    %v2114 = vunpack.c.l.b16 %v2092
    %v2115 = vunpack.c.h.b16 %v2092
    %v2116 = vunpack.c.l.b16 %v2093
    %v2117 = vunpack.c.h.b16 %v2093
    %v2118 = vunpack.c.l.b16 %v2094
    %v2119 = vunpack.c.h.b16 %v2094
    %v2120 = vpack.c.b16 %v2114, %v2112
    %v2121 = vpack.c.b16 %v2115, %v2113
    %v2122 = vpack.c.b16 %v2118, %v2116
    %v2123 = vpack.c.b16 %v2119, %v2117
    %vm2128 = vcmask 261120
    %v2130 = vsel %vm2128, %v2090, 0
    %2132 = vmatprep.subr.bf16.mxu0 %v2121
    %2133 = vmatpush1.bf16.msra.mxu0 %v2120
    %2134 = vmatprep.subr.bf16.mxu0 %v2123
    %2135 = vmatpush1.bf16.msra.mxu0 %v2122
    %2136 = vmatprep.subr.bf16.mxu0 0
    %2137 = vmatpush1.bf16.msra.mxu0 0
    %2138 = vmatprep.subr.bf16.mxu0 0
    %2139 = vmatpush1.bf16.msra.mxu0 0
    %2140 = vmatprep.subr.bf16.mxu0 0
    %2141 = vmatpush1.bf16.msra.mxu0 0
    %2142 = vmatprep.subr.bf16.mxu0 0
    %2143 = vmatpush1.bf16.msra.mxu0 0
    %2144 = vmatprep.subr.bf16.mxu0 0
    %2145 = vmatpush1.bf16.msra.mxu0 0
    %2146 = vmatprep.subr.bf16.mxu0 0
    %2147 = vmatpush1.bf16.msra.mxu0 0
    %2148 = vmatprep.subr.bf16.mxu0 0
    %2149 = vmatpush1.bf16.msra.mxu0 0
    %2150 = vmatprep.subr.bf16.mxu0 0
    %2151 = vmatpush1.bf16.msra.mxu0 0
    %2152 = vmatprep.subr.bf16.mxu0 0
    %2153 = vmatpush1.bf16.msra.mxu0 0
    %2154 = vmatprep.subr.bf16.mxu0 0
    %2155 = vmatpush1.bf16.msra.mxu0 0
    %2156 = vmatprep.subr.bf16.mxu0 0
    %2157 = vmatpush1.bf16.msra.mxu0 0
    %2158 = vmatprep.subr.bf16.mxu0 0
    %2159 = vmatpush1.bf16.msra.mxu0 0
    %2160 = vmatprep.subr.bf16.mxu0 0
    %2161 = vmatpush1.bf16.msra.mxu0 0
    %2162 = vmatprep.subr.bf16.mxu0 0
    %2163 = vmatpush1.bf16.msra.mxu0 0
    %2164 = vmatprep.mubr.bf16.mxu0 0
    %2165 = vmatmul.mubr.bf16.gmra.mrb[0].mxu0 %v2130
    %v2166 = vpop.f32.mrb[0].mxu0
    %v2167 = vadd.f32 %v2101, %v2166
    %v2168 = vpop.f32.mrb[0].mxu0
    %v2169 = vadd.f32 %v2105, %v2168
    %v2170 = vpop.f32.mrb[0].mxu0
    %v2171 = vpop.f32.mrb[0].mxu0
    %2172 = vdwg.mxu0
    %v2173 = vpack.c.bf16 %v2167, %v2167
    %v2174 = vpack.c.bf16 %v2169, %v2169
    %v2175 = vld [vmem:[#allocation4] sm:$0xff]
    %v2176 = vld [vmem:[#allocation4 + $0x8] sm:$0xff]
    %v2177 = vld [vmem:[#allocation4 + $0x10] sm:$0xff]
    %v2178 = vld [vmem:[#allocation4 + $0x18] sm:$0xff]
    %v2179 = vld [vmem:[#allocation4 + $0x20] sm:$0xff]
    %v2180 = vld [vmem:[#allocation4 + $0x28] sm:$0xff]
    %v2181 = vld [vmem:[#allocation4 + $0x30] sm:$0xff]
    %v2182 = vld [vmem:[#allocation4 + $0x38] sm:$0xff]
    %v2183 = vld [vmem:[#allocation4 + $0x40] sm:$0xff]
    %v2184 = vld [vmem:[#allocation4 + $0x48] sm:$0xff]
    %v2185 = vld [vmem:[#allocation4 + $0x50] sm:$0xff]
    %v2186 = vld [vmem:[#allocation4 + $0x58] sm:$0xff]
    %v2187 = vld [vmem:[#allocation4 + $0x60] sm:$0xff]
    %v2188 = vld [vmem:[#allocation4 + $0x68] sm:$0xff]
    %v2189 = vld [vmem:[#allocation4 + $0x70] sm:$0xff]
    %v2190 = vld [vmem:[#allocation4 + $0x78] sm:$0xff]
    %v2191 = vld [vmem:[#allocation4 + $0x80] sm:$0xff]
    %v2192 = vld [vmem:[#allocation4 + $0x88] sm:$0xff]
    %v2193 = vld [vmem:[#allocation4 + $0x90] sm:$0xff]
    %v2194 = vld [vmem:[#allocation4 + $0x98] sm:$0xff]
    %v2195 = vld [vmem:[#allocation4 + $0xa0] sm:$0xff]
    %v2196 = vld [vmem:[#allocation4 + $0xa8] sm:$0xff]
    %v2197 = vld [vmem:[#allocation4 + $0xb0] sm:$0xff]
    %v2198 = vld [vmem:[#allocation4 + $0xb8] sm:$0xff]
    %v2199 = vld [vmem:[#allocation4 + $0xc0] sm:$0xff]
    %v2200 = vld [vmem:[#allocation4 + $0xc8] sm:$0xff]
    %v2201 = vld [vmem:[#allocation4 + $0xd0] sm:$0xff]
    %v2202 = vld [vmem:[#allocation4 + $0xd8] sm:$0xff]
    %v2203 = vld [vmem:[#allocation4 + $0xe0] sm:$0xff]
    %v2204 = vld [vmem:[#allocation4 + $0xe8] sm:$0xff]
    %v2205 = vld [vmem:[#allocation4 + $0xf0] sm:$0xff]
    %v2206 = vld [vmem:[#allocation4 + $0xf8] sm:$0xff]
    %v2207 = vld [vmem:[#allocation4 + $0x100] sm:$0xff]
    %v2208 = vld [vmem:[#allocation4 + $0x108] sm:$0xff]
    %v2209 = vld [vmem:[#allocation4 + $0x110] sm:$0xff]
    %v2210 = vld [vmem:[#allocation4 + $0x118] sm:$0xff]
    %v2211 = vld [vmem:[#allocation4 + $0x120] sm:$0xff]
    %v2212 = vld [vmem:[#allocation4 + $0x128] sm:$0xff]
    %v2213 = vld [vmem:[#allocation4 + $0x130] sm:$0xff]
    %v2214 = vld [vmem:[#allocation4 + $0x138] sm:$0xff]
    %v2215 = vld [vmem:[#allocation4 + $0x140] sm:$0xff]
    %v2216 = vld [vmem:[#allocation4 + $0x148] sm:$0xff]
    %v2217 = vld [vmem:[#allocation4 + $0x150] sm:$0xff]
    %v2218 = vld [vmem:[#allocation4 + $0x158] sm:$0xff]
    %v2219 = vld [vmem:[#allocation4 + $0x160] sm:$0xff]
    %v2220 = vld [vmem:[#allocation4 + $0x168] sm:$0xff]
    %v2221 = vld [vmem:[#allocation4 + $0x170] sm:$0xff]
    %v2222 = vld [vmem:[#allocation4 + $0x178] sm:$0xff]
    %v2223 = vld [vmem:[#allocation4 + $0x180] sm:$0xff]
    %v2224 = vld [vmem:[#allocation4 + $0x188] sm:$0xff]
    %v2225 = vld [vmem:[#allocation4 + $0x190] sm:$0xff]
    %v2226 = vld [vmem:[#allocation4 + $0x198] sm:$0xff]
    %v2227 = vld [vmem:[#allocation4 + $0x1a0] sm:$0xff]
    %v2228 = vld [vmem:[#allocation4 + $0x1a8] sm:$0xff]
    %v2229 = vld [vmem:[#allocation4 + $0x1b0] sm:$0xff]
    %v2230 = vld [vmem:[#allocation4 + $0x1b8] sm:$0xff]
    %v2231 = vld [vmem:[#allocation4 + $0x1c0] sm:$0xff]
    %v2232 = vld [vmem:[#allocation4 + $0x1c8] sm:$0xff]
    %v2233 = vld [vmem:[#allocation4 + $0x1d0] sm:$0xff]
    %v2234 = vld [vmem:[#allocation4 + $0x1d8] sm:$0xff]
    %v2235 = vld [vmem:[#allocation4 + $0x1e0] sm:$0xff]
    %v2236 = vld [vmem:[#allocation4 + $0x1e8] sm:$0xff]
    %v2237 = vld [vmem:[#allocation4 + $0x1f0] sm:$0xff]
    %v2238 = vld [vmem:[#allocation4 + $0x1f8] sm:$0xff]
    %s2239 = scalar_lea.vmem %s13, 32
    %v2240 = vld [vmem:[%s2239] ss:$8 sm:$0xf]
    %v2242 = vlaneseq
    %v2243 = vshrl.u32 %v2242, 7
    %v2244 = vsub.s32 0, %v2243
    %v2245 = vrot.slane %v2240, %v2244
    %v2246 = vlaneseq
    %v2247 = vshrl.u32 %v2246, 7
    %v2248 = vsub.s32 1, %v2247
    %v2249 = vrot.slane %v2240, %v2248
    %v2250 = vlaneseq
    %v2251 = vshrl.u32 %v2250, 7
    %v2252 = vsub.s32 2, %v2251
    %v2253 = vrot.slane %v2240, %v2252
    %v2254 = vlaneseq
    %v2255 = vshrl.u32 %v2254, 7
    %v2256 = vsub.s32 3, %v2255
    %v2257 = vrot.slane %v2240, %v2256
    %v2326 = vunpack.c.l.b16 %v2175
    %v2327 = vunpack.c.h.b16 %v2175
    %v2328 = vunpack.c.l.b16 %v2176
    %v2329 = vunpack.c.h.b16 %v2176
    %v2330 = vunpack.c.l.b16 %v2177
    %v2331 = vunpack.c.h.b16 %v2177
    %v2332 = vunpack.c.l.b16 %v2178
    %v2333 = vunpack.c.h.b16 %v2178
    %v2334 = vunpack.c.l.b16 %v2179
    %v2335 = vunpack.c.h.b16 %v2179
    %v2336 = vunpack.c.l.b16 %v2180
    %v2337 = vunpack.c.h.b16 %v2180
    %v2338 = vunpack.c.l.b16 %v2181
    %v2339 = vunpack.c.h.b16 %v2181
    %v2340 = vunpack.c.l.b16 %v2182
    %v2341 = vunpack.c.h.b16 %v2182
    %v2342 = vunpack.c.l.b16 %v2183
    %v2343 = vunpack.c.h.b16 %v2183
    %v2344 = vunpack.c.l.b16 %v2184
    %v2345 = vunpack.c.h.b16 %v2184
    %v2346 = vunpack.c.l.b16 %v2185
    %v2347 = vunpack.c.h.b16 %v2185
    %v2348 = vunpack.c.l.b16 %v2186
    %v2349 = vunpack.c.h.b16 %v2186
    %v2350 = vunpack.c.l.b16 %v2187
    %v2351 = vunpack.c.h.b16 %v2187
    %v2352 = vunpack.c.l.b16 %v2188
    %v2353 = vunpack.c.h.b16 %v2188
    %v2354 = vunpack.c.l.b16 %v2189
    %v2355 = vunpack.c.h.b16 %v2189
    %v2356 = vunpack.c.l.b16 %v2190
    %v2357 = vunpack.c.h.b16 %v2190
    %v2358 = vunpack.c.l.b16 %v2191
    %v2359 = vunpack.c.h.b16 %v2191
    %v2360 = vunpack.c.l.b16 %v2192
    %v2361 = vunpack.c.h.b16 %v2192
    %v2362 = vunpack.c.l.b16 %v2193
    %v2363 = vunpack.c.h.b16 %v2193
    %v2364 = vunpack.c.l.b16 %v2194
    %v2365 = vunpack.c.h.b16 %v2194
    %v2366 = vunpack.c.l.b16 %v2195
    %v2367 = vunpack.c.h.b16 %v2195
    %v2368 = vunpack.c.l.b16 %v2196
    %v2369 = vunpack.c.h.b16 %v2196
    %v2370 = vunpack.c.l.b16 %v2197
    %v2371 = vunpack.c.h.b16 %v2197
    %v2372 = vunpack.c.l.b16 %v2198
    %v2373 = vunpack.c.h.b16 %v2198
    %v2374 = vunpack.c.l.b16 %v2199
    %v2375 = vunpack.c.h.b16 %v2199
    %v2376 = vunpack.c.l.b16 %v2200
    %v2377 = vunpack.c.h.b16 %v2200
    %v2378 = vunpack.c.l.b16 %v2201
    %v2379 = vunpack.c.h.b16 %v2201
    %v2380 = vunpack.c.l.b16 %v2202
    %v2381 = vunpack.c.h.b16 %v2202
    %v2382 = vunpack.c.l.b16 %v2203
    %v2383 = vunpack.c.h.b16 %v2203
    %v2384 = vunpack.c.l.b16 %v2204
    %v2385 = vunpack.c.h.b16 %v2204
    %v2386 = vunpack.c.l.b16 %v2205
    %v2387 = vunpack.c.h.b16 %v2205
    %v2388 = vunpack.c.l.b16 %v2206
    %v2389 = vunpack.c.h.b16 %v2206
    %v2390 = vunpack.c.l.b16 %v2207
    %v2391 = vunpack.c.h.b16 %v2207
    %v2392 = vunpack.c.l.b16 %v2208
    %v2393 = vunpack.c.h.b16 %v2208
    %v2394 = vunpack.c.l.b16 %v2209
    %v2395 = vunpack.c.h.b16 %v2209
    %v2396 = vunpack.c.l.b16 %v2210
    %v2397 = vunpack.c.h.b16 %v2210
    %v2398 = vunpack.c.l.b16 %v2211
    %v2399 = vunpack.c.h.b16 %v2211
    %v2400 = vunpack.c.l.b16 %v2212
    %v2401 = vunpack.c.h.b16 %v2212
    %v2402 = vunpack.c.l.b16 %v2213
    %v2403 = vunpack.c.h.b16 %v2213
    %v2404 = vunpack.c.l.b16 %v2214
    %v2405 = vunpack.c.h.b16 %v2214
    %v2406 = vunpack.c.l.b16 %v2215
    %v2407 = vunpack.c.h.b16 %v2215
    %v2408 = vunpack.c.l.b16 %v2216
    %v2409 = vunpack.c.h.b16 %v2216
    %v2410 = vunpack.c.l.b16 %v2217
    %v2411 = vunpack.c.h.b16 %v2217
    %v2412 = vunpack.c.l.b16 %v2218
    %v2413 = vunpack.c.h.b16 %v2218
    %v2414 = vunpack.c.l.b16 %v2219
    %v2415 = vunpack.c.h.b16 %v2219
    %v2416 = vunpack.c.l.b16 %v2220
    %v2417 = vunpack.c.h.b16 %v2220
    %v2418 = vunpack.c.l.b16 %v2221
    %v2419 = vunpack.c.h.b16 %v2221
    %v2420 = vunpack.c.l.b16 %v2222
    %v2421 = vunpack.c.h.b16 %v2222
    %v2422 = vunpack.c.l.b16 %v2223
    %v2423 = vunpack.c.h.b16 %v2223
    %v2424 = vunpack.c.l.b16 %v2224
    %v2425 = vunpack.c.h.b16 %v2224
    %v2426 = vunpack.c.l.b16 %v2225
    %v2427 = vunpack.c.h.b16 %v2225
    %v2428 = vunpack.c.l.b16 %v2226
    %v2429 = vunpack.c.h.b16 %v2226
    %v2430 = vunpack.c.l.b16 %v2227
    %v2431 = vunpack.c.h.b16 %v2227
    %v2432 = vunpack.c.l.b16 %v2228
    %v2433 = vunpack.c.h.b16 %v2228
    %v2434 = vunpack.c.l.b16 %v2229
    %v2435 = vunpack.c.h.b16 %v2229
    %v2436 = vunpack.c.l.b16 %v2230
    %v2437 = vunpack.c.h.b16 %v2230
    %v2438 = vunpack.c.l.b16 %v2231
    %v2439 = vunpack.c.h.b16 %v2231
    %v2440 = vunpack.c.l.b16 %v2232
    %v2441 = vunpack.c.h.b16 %v2232
    %v2442 = vunpack.c.l.b16 %v2233
    %v2443 = vunpack.c.h.b16 %v2233
    %v2444 = vunpack.c.l.b16 %v2234
    %v2445 = vunpack.c.h.b16 %v2234
    %v2446 = vunpack.c.l.b16 %v2235
    %v2447 = vunpack.c.h.b16 %v2235
    %v2448 = vunpack.c.l.b16 %v2236
    %v2449 = vunpack.c.h.b16 %v2236
    %v2450 = vunpack.c.l.b16 %v2237
    %v2451 = vunpack.c.h.b16 %v2237
    %v2452 = vunpack.c.l.b16 %v2238
    %v2453 = vunpack.c.h.b16 %v2238
    %v2454 = vpack.c.b16 %v2330, %v2326
    %v2455 = vpack.c.b16 %v2331, %v2327
    %v2456 = vpack.c.b16 %v2332, %v2328
    %v2457 = vpack.c.b16 %v2333, %v2329
    %v2458 = vpack.c.b16 %v2338, %v2334
    %v2459 = vpack.c.b16 %v2339, %v2335
    %v2460 = vpack.c.b16 %v2340, %v2336
    %v2461 = vpack.c.b16 %v2341, %v2337
    %v2462 = vpack.c.b16 %v2346, %v2342
    %v2463 = vpack.c.b16 %v2347, %v2343
    %v2464 = vpack.c.b16 %v2348, %v2344
    %v2465 = vpack.c.b16 %v2349, %v2345
    %v2466 = vpack.c.b16 %v2354, %v2350
    %v2467 = vpack.c.b16 %v2355, %v2351
    %v2468 = vpack.c.b16 %v2356, %v2352
    %v2469 = vpack.c.b16 %v2357, %v2353
    %v2470 = vpack.c.b16 %v2362, %v2358
    %v2471 = vpack.c.b16 %v2363, %v2359
    %v2472 = vpack.c.b16 %v2364, %v2360
    %v2473 = vpack.c.b16 %v2365, %v2361
    %v2474 = vpack.c.b16 %v2370, %v2366
    %v2475 = vpack.c.b16 %v2371, %v2367
    %v2476 = vpack.c.b16 %v2372, %v2368
    %v2477 = vpack.c.b16 %v2373, %v2369
    %v2478 = vpack.c.b16 %v2378, %v2374
    %v2479 = vpack.c.b16 %v2379, %v2375
    %v2480 = vpack.c.b16 %v2380, %v2376
    %v2481 = vpack.c.b16 %v2381, %v2377
    %v2482 = vpack.c.b16 %v2386, %v2382
    %v2483 = vpack.c.b16 %v2387, %v2383
    %v2484 = vpack.c.b16 %v2388, %v2384
    %v2485 = vpack.c.b16 %v2389, %v2385
    %v2486 = vpack.c.b16 %v2394, %v2390
    %v2487 = vpack.c.b16 %v2395, %v2391
    %v2488 = vpack.c.b16 %v2396, %v2392
    %v2489 = vpack.c.b16 %v2397, %v2393
    %v2490 = vpack.c.b16 %v2402, %v2398
    %v2491 = vpack.c.b16 %v2403, %v2399
    %v2492 = vpack.c.b16 %v2404, %v2400
    %v2493 = vpack.c.b16 %v2405, %v2401
    %v2494 = vpack.c.b16 %v2410, %v2406
    %v2495 = vpack.c.b16 %v2411, %v2407
    %v2496 = vpack.c.b16 %v2412, %v2408
    %v2497 = vpack.c.b16 %v2413, %v2409
    %v2498 = vpack.c.b16 %v2418, %v2414
    %v2499 = vpack.c.b16 %v2419, %v2415
    %v2500 = vpack.c.b16 %v2420, %v2416
    %v2501 = vpack.c.b16 %v2421, %v2417
    %v2502 = vpack.c.b16 %v2426, %v2422
    %v2503 = vpack.c.b16 %v2427, %v2423
    %v2504 = vpack.c.b16 %v2428, %v2424
    %v2505 = vpack.c.b16 %v2429, %v2425
    %v2506 = vpack.c.b16 %v2434, %v2430
    %v2507 = vpack.c.b16 %v2435, %v2431
    %v2508 = vpack.c.b16 %v2436, %v2432
    %v2509 = vpack.c.b16 %v2437, %v2433
    %v2510 = vpack.c.b16 %v2442, %v2438
    %v2511 = vpack.c.b16 %v2443, %v2439
    %v2512 = vpack.c.b16 %v2444, %v2440
    %v2513 = vpack.c.b16 %v2445, %v2441
    %v2514 = vpack.c.b16 %v2450, %v2446
    %v2515 = vpack.c.b16 %v2451, %v2447
    %v2516 = vpack.c.b16 %v2452, %v2448
    %v2517 = vpack.c.b16 %v2453, %v2449
    %2582 = vmatprep.subr.bf16.mxu0 %v2455
    %2583 = vmatpush1.bf16.msra.mxu0 %v2454
    %2584 = vmatprep.subr.bf16.mxu0 %v2459
    %2585 = vmatpush1.bf16.msra.mxu0 %v2458
    %2586 = vmatprep.subr.bf16.mxu0 %v2463
    %2587 = vmatpush1.bf16.msra.mxu0 %v2462
    %2588 = vmatprep.subr.bf16.mxu0 %v2467
    %2589 = vmatpush1.bf16.msra.mxu0 %v2466
    %2590 = vmatprep.subr.bf16.mxu0 %v2471
    %2591 = vmatpush1.bf16.msra.mxu0 %v2470
    %2592 = vmatprep.subr.bf16.mxu0 %v2475
    %2593 = vmatpush1.bf16.msra.mxu0 %v2474
    %2594 = vmatprep.subr.bf16.mxu0 %v2479
    %2595 = vmatpush1.bf16.msra.mxu0 %v2478
    %2596 = vmatprep.subr.bf16.mxu0 %v2483
    %2597 = vmatpush1.bf16.msra.mxu0 %v2482
    %2598 = vmatprep.subr.bf16.mxu0 %v2487
    %2599 = vmatpush1.bf16.msra.mxu0 %v2486
    %2600 = vmatprep.subr.bf16.mxu0 %v2491
    %2601 = vmatpush1.bf16.msra.mxu0 %v2490
    %2602 = vmatprep.subr.bf16.mxu0 %v2495
    %2603 = vmatpush1.bf16.msra.mxu0 %v2494
    %2604 = vmatprep.subr.bf16.mxu0 %v2499
    %2605 = vmatpush1.bf16.msra.mxu0 %v2498
    %2606 = vmatprep.subr.bf16.mxu0 %v2503
    %2607 = vmatpush1.bf16.msra.mxu0 %v2502
    %2608 = vmatprep.subr.bf16.mxu0 %v2507
    %2609 = vmatpush1.bf16.msra.mxu0 %v2506
    %2610 = vmatprep.subr.bf16.mxu0 %v2511
    %2611 = vmatpush1.bf16.msra.mxu0 %v2510
    %2612 = vmatprep.subr.bf16.mxu0 %v2515
    %2613 = vmatpush1.bf16.msra.mxu0 %v2514
    %2614 = vmatprep.mubr.bf16.mxu0 %v2174
    %2615 = vmatmul.mubr.bf16.gmra.mrb[0].mxu0 %v2173
    %v2616 = vpop.f32.mrb[0].mxu0
    %v2617 = vadd.f32 %v2245, %v2616
    %v2618 = vpop.f32.mrb[0].mxu0
    %v2619 = vadd.f32 %v2249, %v2618
    %v2620 = vpop.f32.mrb[0].mxu0
    %v2621 = vpop.f32.mrb[0].mxu0
    %2622 = vdwg.mxu0
    %2623 = vmatprep.subr.bf16.mxu0 %v2457
    %2624 = vmatpush1.bf16.msra.mxu0 %v2456
    %2625 = vmatprep.subr.bf16.mxu0 %v2461
    %2626 = vmatpush1.bf16.msra.mxu0 %v2460
    %2627 = vmatprep.subr.bf16.mxu0 %v2465
    %2628 = vmatpush1.bf16.msra.mxu0 %v2464
    %2629 = vmatprep.subr.bf16.mxu0 %v2469
    %2630 = vmatpush1.bf16.msra.mxu0 %v2468
    %2631 = vmatprep.subr.bf16.mxu0 %v2473
    %2632 = vmatpush1.bf16.msra.mxu0 %v2472
    %2633 = vmatprep.subr.bf16.mxu0 %v2477
    %2634 = vmatpush1.bf16.msra.mxu0 %v2476
    %2635 = vmatprep.subr.bf16.mxu0 %v2481
    %2636 = vmatpush1.bf16.msra.mxu0 %v2480
    %2637 = vmatprep.subr.bf16.mxu0 %v2485
    %2638 = vmatpush1.bf16.msra.mxu0 %v2484
    %2639 = vmatprep.subr.bf16.mxu0 %v2489
    %2640 = vmatpush1.bf16.msra.mxu0 %v2488
    %2641 = vmatprep.subr.bf16.mxu0 %v2493
    %2642 = vmatpush1.bf16.msra.mxu0 %v2492
    %2643 = vmatprep.subr.bf16.mxu0 %v2497
    %2644 = vmatpush1.bf16.msra.mxu0 %v2496
    %2645 = vmatprep.subr.bf16.mxu0 %v2501
    %2646 = vmatpush1.bf16.msra.mxu0 %v2500
    %2647 = vmatprep.subr.bf16.mxu0 %v2505
    %2648 = vmatpush1.bf16.msra.mxu0 %v2504
    %2649 = vmatprep.subr.bf16.mxu0 %v2509
    %2650 = vmatpush1.bf16.msra.mxu0 %v2508
    %2651 = vmatprep.subr.bf16.mxu0 %v2513
    %2652 = vmatpush1.bf16.msra.mxu0 %v2512
    %2653 = vmatprep.subr.bf16.mxu0 %v2517
    %2654 = vmatpush1.bf16.msra.mxu0 %v2516
    %2655 = vmatprep.mubr.bf16.mxu0 %v2174
    %2656 = vmatmul.mubr.bf16.gmra.mrb[0].mxu0 %v2173
    %v2657 = vpop.f32.mrb[0].mxu0
    %v2658 = vadd.f32 %v2253, %v2657
    %v2659 = vpop.f32.mrb[0].mxu0
    %v2660 = vadd.f32 %v2257, %v2659
    %v2661 = vpop.f32.mrb[0].mxu0
    %v2662 = vpop.f32.mrb[0].mxu0
    %2663 = vdwg.mxu0
    %v2664 = vmax.f32 %v2617, 0.0
    %v2665 = vmax.f32 %v2619, 0.0
    %v2666 = vmax.f32 %v2658, 0.0
    %v2667 = vmax.f32 %v2660, 0.0
    %v2668 = vmul.f32 %v2664, %v98
    %v2669 = vmul.f32 %v2665, %v98
    %v2670 = vmul.f32 %v2666, %v98
    %v2671 = vmul.f32 %v2667, %v98
    %v2672 = vrot.slane %v2668, 4
    %v2673 = vadd.f32 %v2668, %v2672
    %v2674 = vrot.slane %v2673, 2
    %v2675 = vadd.f32 %v2673, %v2674
    %v2676 = vrot.slane %v2675, 1
    %v2677 = vadd.f32 %v2675, %v2676
    %v2678 = vrot.slane %v2669, 4
    %v2679 = vadd.f32 %v2669, %v2678
    %v2680 = vrot.slane %v2679, 2
    %v2681 = vadd.f32 %v2679, %v2680
    %v2682 = vrot.slane %v2681, 1
    %v2683 = vadd.f32 %v2681, %v2682
    %v2684 = vrot.slane %v2670, 4
    %v2685 = vadd.f32 %v2670, %v2684
    %v2686 = vrot.slane %v2685, 2
    %v2687 = vadd.f32 %v2685, %v2686
    %v2688 = vrot.slane %v2687, 1
    %v2689 = vadd.f32 %v2687, %v2688
    %v2690 = vrot.slane %v2671, 4
    %v2691 = vadd.f32 %v2671, %v2690
    %v2692 = vrot.slane %v2691, 2
    %v2693 = vadd.f32 %v2691, %v2692
    %v2694 = vrot.slane %v2693, 1
    %v2695 = vadd.f32 %v2693, %v2694
    %v2696 = vmul.f32 %v2668, %v2668
    %v2697 = vmul.f32 %v2669, %v2669
    %v2698 = vmul.f32 %v2670, %v2670
    %v2699 = vmul.f32 %v2671, %v2671
    %v2700 = vrot.slane %v2696, 4
    %v2701 = vadd.f32 %v2696, %v2700
    %v2702 = vrot.slane %v2701, 2
    %v2703 = vadd.f32 %v2701, %v2702
    %v2704 = vrot.slane %v2703, 1
    %v2705 = vadd.f32 %v2703, %v2704
    %v2706 = vrot.slane %v2697, 4
    %v2707 = vadd.f32 %v2697, %v2706
    %v2708 = vrot.slane %v2707, 2
    %v2709 = vadd.f32 %v2707, %v2708
    %v2710 = vrot.slane %v2709, 1
    %v2711 = vadd.f32 %v2709, %v2710
    %v2712 = vrot.slane %v2698, 4
    %v2713 = vadd.f32 %v2698, %v2712
    %v2714 = vrot.slane %v2713, 2
    %v2715 = vadd.f32 %v2713, %v2714
    %v2716 = vrot.slane %v2715, 1
    %v2717 = vadd.f32 %v2715, %v2716
    %v2718 = vrot.slane %v2699, 4
    %v2719 = vadd.f32 %v2699, %v2718
    %v2720 = vrot.slane %v2719, 2
    %v2721 = vadd.f32 %v2719, %v2720
    %v2722 = vrot.slane %v2721, 1
    %v2723 = vadd.f32 %v2721, %v2722
    %v2724 = vsel %vm652, %v2677, %v2705
    %v2725 = vsel %vm652, %v2683, %v2711
    %v2726 = vsel %vm652, %v2689, %v2717
    %v2727 = vsel %vm652, %v2695, %v2723
    %v2728 = vld [vmem:[%s10] sm:$0xf]
    %v2729 = vld [vmem:[%s10 + $0x4] sm:$0xf]
    %v2730 = vld [vmem:[%s10 + $0x8] sm:$0xf]
    %v2731 = vld [vmem:[%s10 + $0xc] sm:$0xf]
    %v2732 = vld [vmem:[%s10 + $0x10] sm:$0xf]
    %v2733 = vld [vmem:[%s10 + $0x14] sm:$0xf]
    %v2734 = vld [vmem:[%s10 + $0x18] sm:$0xf]
    %v2735 = vld [vmem:[%s10 + $0x1c] sm:$0xf]
    %v2736 = vld [vmem:[%s10 + $0x20] sm:$0xf]
    %v2737 = vld [vmem:[%s10 + $0x24] sm:$0xf]
    %v2738 = vld [vmem:[%s10 + $0x28] sm:$0xf]
    %v2739 = vld [vmem:[%s10 + $0x2c] sm:$0xf]
    %v2740 = vld [vmem:[%s10 + $0x30] sm:$0xf]
    %v2741 = vld [vmem:[%s10 + $0x34] sm:$0xf]
    %v2742 = vld [vmem:[%s10 + $0x38] sm:$0xf]
    %v2743 = vld [vmem:[%s10 + $0x3c] sm:$0xf]
    %v2744 = vld [vmem:[%s10 + $0x40] sm:$0xf]
    %v2745 = vld [vmem:[%s10 + $0x44] sm:$0xf]
    %v2746 = vld [vmem:[%s10 + $0x48] sm:$0xf]
    %v2747 = vld [vmem:[%s10 + $0x4c] sm:$0xf]
    %v2748 = vld [vmem:[%s10 + $0x50] sm:$0xf]
    %v2749 = vld [vmem:[%s10 + $0x54] sm:$0xf]
    %v2750 = vld [vmem:[%s10 + $0x58] sm:$0xf]
    %v2751 = vld [vmem:[%s10 + $0x5c] sm:$0xf]
    %v2752 = vld [vmem:[%s10 + $0x60] sm:$0xf]
    %v2753 = vld [vmem:[%s10 + $0x64] sm:$0xf]
    %v2754 = vld [vmem:[%s10 + $0x68] sm:$0xf]
    %v2755 = vld [vmem:[%s10 + $0x6c] sm:$0xf]
    %v2756 = vld [vmem:[%s10 + $0x70] sm:$0xf]
    %v2757 = vld [vmem:[%s10 + $0x74] sm:$0xf]
    %v2758 = vld [vmem:[%s10 + $0x78] sm:$0xf]
    %v2759 = vld [vmem:[%s10 + $0x7c] sm:$0xf]
    %v2760 = vld [vmem:[%s10 + $0x80] sm:$0xf]
    %v2761 = vld [vmem:[%s10 + $0x84] sm:$0xf]
    %v2762 = vld [vmem:[%s10 + $0x88] sm:$0xf]
    %v2763 = vld [vmem:[%s10 + $0x8c] sm:$0xf]
    %v2764 = vld [vmem:[%s10 + $0x90] sm:$0xf]
    %v2765 = vld [vmem:[%s10 + $0x94] sm:$0xf]
    %v2766 = vld [vmem:[%s10 + $0x98] sm:$0xf]
    %v2767 = vld [vmem:[%s10 + $0x9c] sm:$0xf]
    %v2768 = vld [vmem:[%s10 + $0xa0] sm:$0xf]
    %v2769 = vld [vmem:[%s10 + $0xa4] sm:$0xf]
    %v2770 = vld [vmem:[%s10 + $0xa8] sm:$0xf]
    %v2771 = vld [vmem:[%s10 + $0xac] sm:$0xf]
    %v2772 = vld [vmem:[%s10 + $0xb0] sm:$0xf]
    %v2773 = vld [vmem:[%s10 + $0xb4] sm:$0xf]
    %v2774 = vld [vmem:[%s10 + $0xb8] sm:$0xf]
    %v2775 = vld [vmem:[%s10 + $0xbc] sm:$0xf]
    %v2776 = vld [vmem:[%s10 + $0xc0] sm:$0xf]
    %v2777 = vld [vmem:[%s10 + $0xc4] sm:$0xf]
    %v2778 = vld [vmem:[%s10 + $0xc8] sm:$0xf]
    %v2779 = vld [vmem:[%s10 + $0xcc] sm:$0xf]
    %v2780 = vld [vmem:[%s10 + $0xd0] sm:$0xf]
    %v2781 = vld [vmem:[%s10 + $0xd4] sm:$0xf]
    %v2782 = vld [vmem:[%s10 + $0xd8] sm:$0xf]
    %v2783 = vld [vmem:[%s10 + $0xdc] sm:$0xf]
    %v2784 = vld [vmem:[%s10 + $0xe0] sm:$0xf]
    %v2785 = vld [vmem:[%s10 + $0xe4] sm:$0xf]
    %v2786 = vld [vmem:[%s10 + $0xe8] sm:$0xf]
    %v2787 = vld [vmem:[%s10 + $0xec] sm:$0xf]
    %v2788 = vld [vmem:[%s10 + $0xf0] sm:$0xf]
    %v2789 = vld [vmem:[%s10 + $0xf4] sm:$0xf]
    %v2790 = vld [vmem:[%s10 + $0xf8] sm:$0xf]
    %v2791 = vld [vmem:[%s10 + $0xfc] sm:$0xf]
    %v2792 = vunpack.c.l.bf16 %v2728
    %v2793 = vunpack.c.l.bf16 %v2729
    %v2794 = vunpack.c.l.bf16 %v2730
    %v2795 = vunpack.c.l.bf16 %v2731
    %v2796 = vunpack.c.l.bf16 %v2732
    %v2797 = vunpack.c.l.bf16 %v2733
    %v2798 = vunpack.c.l.bf16 %v2734
    %v2799 = vunpack.c.l.bf16 %v2735
    %v2800 = vunpack.c.l.bf16 %v2736
    %v2801 = vunpack.c.l.bf16 %v2737
    %v2802 = vunpack.c.l.bf16 %v2738
    %v2803 = vunpack.c.l.bf16 %v2739
    %v2804 = vunpack.c.l.bf16 %v2740
    %v2805 = vunpack.c.l.bf16 %v2741
    %v2806 = vunpack.c.l.bf16 %v2742
    %v2807 = vunpack.c.l.bf16 %v2743
    %v2808 = vunpack.c.l.bf16 %v2744
    %v2809 = vunpack.c.l.bf16 %v2745
    %v2810 = vunpack.c.l.bf16 %v2746
    %v2811 = vunpack.c.l.bf16 %v2747
    %v2812 = vunpack.c.l.bf16 %v2748
    %v2813 = vunpack.c.l.bf16 %v2749
    %v2814 = vunpack.c.l.bf16 %v2750
    %v2815 = vunpack.c.l.bf16 %v2751
    %v2816 = vunpack.c.l.bf16 %v2752
    %v2817 = vunpack.c.l.bf16 %v2753
    %v2818 = vunpack.c.l.bf16 %v2754
    %v2819 = vunpack.c.l.bf16 %v2755
    %v2820 = vunpack.c.l.bf16 %v2756
    %v2821 = vunpack.c.l.bf16 %v2757
    %v2822 = vunpack.c.l.bf16 %v2758
    %v2823 = vunpack.c.l.bf16 %v2759
    %v2824 = vunpack.c.l.bf16 %v2760
    %v2825 = vunpack.c.l.bf16 %v2761
    %v2826 = vunpack.c.l.bf16 %v2762
    %v2827 = vunpack.c.l.bf16 %v2763
    %v2828 = vunpack.c.l.bf16 %v2764
    %v2829 = vunpack.c.l.bf16 %v2765
    %v2830 = vunpack.c.l.bf16 %v2766
    %v2831 = vunpack.c.l.bf16 %v2767
    %v2832 = vunpack.c.l.bf16 %v2768
    %v2833 = vunpack.c.l.bf16 %v2769
    %v2834 = vunpack.c.l.bf16 %v2770
    %v2835 = vunpack.c.l.bf16 %v2771
    %v2836 = vunpack.c.l.bf16 %v2772
    %v2837 = vunpack.c.l.bf16 %v2773
    %v2838 = vunpack.c.l.bf16 %v2774
    %v2839 = vunpack.c.l.bf16 %v2775
    %v2840 = vunpack.c.l.bf16 %v2776
    %v2841 = vunpack.c.l.bf16 %v2777
    %v2842 = vunpack.c.l.bf16 %v2778
    %v2843 = vunpack.c.l.bf16 %v2779
    %v2844 = vunpack.c.l.bf16 %v2780
    %v2845 = vunpack.c.l.bf16 %v2781
    %v2846 = vunpack.c.l.bf16 %v2782
    %v2847 = vunpack.c.l.bf16 %v2783
    %v2848 = vunpack.c.l.bf16 %v2784
    %v2849 = vunpack.c.l.bf16 %v2785
    %v2850 = vunpack.c.l.bf16 %v2786
    %v2851 = vunpack.c.l.bf16 %v2787
    %v2852 = vunpack.c.l.bf16 %v2788
    %v2853 = vunpack.c.l.bf16 %v2789
    %v2854 = vunpack.c.l.bf16 %v2790
    %v2855 = vunpack.c.l.bf16 %v2791
    %2856 = vmatprep.subr.mxu0 0.0
    %2857 = vmatpush1.msra.mxu0 %v2792
    %2858 = vmatprep.subr.mxu0 0.0
    %2859 = vmatpush1.msra.mxu0 %v2793
    %2860 = vmatprep.subr.mxu0 0.0
    %2861 = vmatpush1.msra.mxu0 %v2794
    %2862 = vmatprep.subr.mxu0 0.0
    %2863 = vmatpush1.msra.mxu0 %v2795
    %2864 = vmatprep.subr.mxu0 0.0
    %2865 = vmatpush1.msra.mxu0 %v2796
    %2866 = vmatprep.subr.mxu0 0.0
    %2867 = vmatpush1.msra.mxu0 %v2797
    %2868 = vmatprep.subr.mxu0 0.0
    %2869 = vmatpush1.msra.mxu0 %v2798
    %2870 = vmatprep.subr.mxu0 0.0
    %2871 = vmatpush1.msra.mxu0 %v2799
    %2872 = vmatprep.subr.mxu0 0.0
    %2873 = vmatpush1.msra.mxu0 %v2800
    %2874 = vmatprep.subr.mxu0 0.0
    %2875 = vmatpush1.msra.mxu0 %v2801
    %2876 = vmatprep.subr.mxu0 0.0
    %2877 = vmatpush1.msra.mxu0 %v2802
    %2878 = vmatprep.subr.mxu0 0.0
    %2879 = vmatpush1.msra.mxu0 %v2803
    %2880 = vmatprep.subr.mxu0 0.0
    %2881 = vmatpush1.msra.mxu0 %v2804
    %2882 = vmatprep.subr.mxu0 0.0
    %2883 = vmatpush1.msra.mxu0 %v2805
    %2884 = vmatprep.subr.mxu0 0.0
    %2885 = vmatpush1.msra.mxu0 %v2806
    %2886 = vmatprep.subr.mxu0 0.0
    %2887 = vmatpush1.msra.mxu0 %v2807
    %2888 = vmatprep.subr.mxu0 0.0
    %2889 = vmatpush1.msra.mxu0 %v2808
    %2890 = vmatprep.subr.mxu0 0.0
    %2891 = vmatpush1.msra.mxu0 %v2809
    %2892 = vmatprep.subr.mxu0 0.0
    %2893 = vmatpush1.msra.mxu0 %v2810
    %2894 = vmatprep.subr.mxu0 0.0
    %2895 = vmatpush1.msra.mxu0 %v2811
    %2896 = vmatprep.subr.mxu0 0.0
    %2897 = vmatpush1.msra.mxu0 %v2812
    %2898 = vmatprep.subr.mxu0 0.0
    %2899 = vmatpush1.msra.mxu0 %v2813
    %2900 = vmatprep.subr.mxu0 0.0
    %2901 = vmatpush1.msra.mxu0 %v2814
    %2902 = vmatprep.subr.mxu0 0.0
    %2903 = vmatpush1.msra.mxu0 %v2815
    %2904 = vmatprep.subr.mxu0 0.0
    %2905 = vmatpush1.msra.mxu0 %v2816
    %2906 = vmatprep.subr.mxu0 0.0
    %2907 = vmatpush1.msra.mxu0 %v2817
    %2908 = vmatprep.subr.mxu0 0.0
    %2909 = vmatpush1.msra.mxu0 %v2818
    %2910 = vmatprep.subr.mxu0 0.0
    %2911 = vmatpush1.msra.mxu0 %v2819
    %2912 = vmatprep.subr.mxu0 0.0
    %2913 = vmatpush1.msra.mxu0 %v2820
    %2914 = vmatprep.subr.mxu0 0.0
    %2915 = vmatpush1.msra.mxu0 %v2821
    %2916 = vmatprep.subr.mxu0 0.0
    %2917 = vmatpush1.msra.mxu0 %v2822
    %2918 = vmatprep.subr.mxu0 0.0
    %2919 = vmatpush1.msra.mxu0 %v2823
    %2920 = vmatprep.mubr.f32.mxu0 %v2725
    %2921 = vmatmul.mubr.f32.gmra.mrb[0].mxu0 %v2724
    %v2922 = vpop.f32.mrb[0].mxu0
    %v2923 = vadd.f32 0.0, %v2922
    %v2924 = vpop.f32.mrb[0].mxu0
    %2925 = vdwg.mxu0
    %2926 = vmatprep.subr.mxu0 0.0
    %2927 = vmatpush1.msra.mxu0 %v2824
    %2928 = vmatprep.subr.mxu0 0.0
    %2929 = vmatpush1.msra.mxu0 %v2825
    %2930 = vmatprep.subr.mxu0 0.0
    %2931 = vmatpush1.msra.mxu0 %v2826
    %2932 = vmatprep.subr.mxu0 0.0
    %2933 = vmatpush1.msra.mxu0 %v2827
    %2934 = vmatprep.subr.mxu0 0.0
    %2935 = vmatpush1.msra.mxu0 %v2828
    %2936 = vmatprep.subr.mxu0 0.0
    %2937 = vmatpush1.msra.mxu0 %v2829
    %2938 = vmatprep.subr.mxu0 0.0
    %2939 = vmatpush1.msra.mxu0 %v2830
    %2940 = vmatprep.subr.mxu0 0.0
    %2941 = vmatpush1.msra.mxu0 %v2831
    %2942 = vmatprep.subr.mxu0 0.0
    %2943 = vmatpush1.msra.mxu0 %v2832
    %2944 = vmatprep.subr.mxu0 0.0
    %2945 = vmatpush1.msra.mxu0 %v2833
    %2946 = vmatprep.subr.mxu0 0.0
    %2947 = vmatpush1.msra.mxu0 %v2834
    %2948 = vmatprep.subr.mxu0 0.0
    %2949 = vmatpush1.msra.mxu0 %v2835
    %2950 = vmatprep.subr.mxu0 0.0
    %2951 = vmatpush1.msra.mxu0 %v2836
    %2952 = vmatprep.subr.mxu0 0.0
    %2953 = vmatpush1.msra.mxu0 %v2837
    %2954 = vmatprep.subr.mxu0 0.0
    %2955 = vmatpush1.msra.mxu0 %v2838
    %2956 = vmatprep.subr.mxu0 0.0
    %2957 = vmatpush1.msra.mxu0 %v2839
    %2958 = vmatprep.subr.mxu0 0.0
    %2959 = vmatpush1.msra.mxu0 %v2840
    %2960 = vmatprep.subr.mxu0 0.0
    %2961 = vmatpush1.msra.mxu0 %v2841
    %2962 = vmatprep.subr.mxu0 0.0
    %2963 = vmatpush1.msra.mxu0 %v2842
    %2964 = vmatprep.subr.mxu0 0.0
    %2965 = vmatpush1.msra.mxu0 %v2843
    %2966 = vmatprep.subr.mxu0 0.0
    %2967 = vmatpush1.msra.mxu0 %v2844
    %2968 = vmatprep.subr.mxu0 0.0
    %2969 = vmatpush1.msra.mxu0 %v2845
    %2970 = vmatprep.subr.mxu0 0.0
    %2971 = vmatpush1.msra.mxu0 %v2846
    %2972 = vmatprep.subr.mxu0 0.0
    %2973 = vmatpush1.msra.mxu0 %v2847
    %2974 = vmatprep.subr.mxu0 0.0
    %2975 = vmatpush1.msra.mxu0 %v2848
    %2976 = vmatprep.subr.mxu0 0.0
    %2977 = vmatpush1.msra.mxu0 %v2849
    %2978 = vmatprep.subr.mxu0 0.0
    %2979 = vmatpush1.msra.mxu0 %v2850
    %2980 = vmatprep.subr.mxu0 0.0
    %2981 = vmatpush1.msra.mxu0 %v2851
    %2982 = vmatprep.subr.mxu0 0.0
    %2983 = vmatpush1.msra.mxu0 %v2852
    %2984 = vmatprep.subr.mxu0 0.0
    %2985 = vmatpush1.msra.mxu0 %v2853
    %2986 = vmatprep.subr.mxu0 0.0
    %2987 = vmatpush1.msra.mxu0 %v2854
    %2988 = vmatprep.subr.mxu0 0.0
    %2989 = vmatpush1.msra.mxu0 %v2855
    %2990 = vmatprep.mubr.f32.mxu0 %v2727
    %2991 = vmatmul.mubr.f32.gmra.mrb[0].mxu0 %v2726
    %v2992 = vpop.f32.mrb[0].mxu0
    %v2993 = vadd.f32 %v2923, %v2992
    %v2994 = vpop.f32.mrb[0].mxu0
    %2995 = vdwg.mxu0
    %v2996 = vmul.f32 %v2993, %v929
    %v2997 = vmul.f32 %v2996, %v2996
    %v2999 = vrot.slane %v2997, 7
    %v3001 = vsub.f32 %v2996, %v2999
    %v3002 = vmax.f32 %v3001, 0.0
    %v3003 = vadd.f32 %v3002, 1e-05
    %v3004 = vrsqrt.pop %v3003
    %v3005 = vld [vmem:[%s13 + $0x21] ss:$0 sm:$0xff]
    %v3006 = vmul.f32 %v3005, %v3004
    %v3007 = vld [vmem:[%s13 + $0x22] ss:$0 sm:$0xff]
    %v3009 = vrot.slane %v3006, 1
    %v3011 = vmul.f32 %v2996, %v3009
    %v3012 = vsub.f32 %v3007, %v3011
    %v3014 = vrot.slane %v3012, 7
    %v3016 = vsel %vm652, %v3009, %v3014
    %v3017 = vld [vmem:[%s11] sm:$0xff]
    %v3018 = vld [vmem:[%s11 + $0x8] sm:$0xff]
    %v3019 = vunpack.c.l.bf16 %v3017
    %v3020 = vunpack.c.h.bf16 %v3017
    %v3021 = vunpack.c.l.bf16 %v3018
    %v3022 = vunpack.c.h.bf16 %v3018
    %v3024 = vsel %vm957, %v3016, 0
    %3026 = vmatprep.subr.mxu0 %v3020
    %3027 = vmatpush1.msra.mxu0 %v3019
    %3028 = vmatprep.subr.mxu0 0.0
    %3029 = vmatpush1.msra.mxu0 0.0
    %3030 = vmatprep.subr.mxu0 0.0
    %3031 = vmatpush1.msra.mxu0 0.0
    %3032 = vmatprep.subr.mxu0 0.0
    %3033 = vmatpush1.msra.mxu0 0.0
    %3034 = vmatprep.subr.mxu0 0.0
    %3035 = vmatpush1.msra.mxu0 0.0
    %3036 = vmatprep.subr.mxu0 0.0
    %3037 = vmatpush1.msra.mxu0 0.0
    %3038 = vmatprep.subr.mxu0 0.0
    %3039 = vmatpush1.msra.mxu0 0.0
    %3040 = vmatprep.subr.mxu0 0.0
    %3041 = vmatpush1.msra.mxu0 0.0
    %3042 = vmatprep.subr.mxu0 0.0
    %3043 = vmatpush1.msra.mxu0 0.0
    %3044 = vmatprep.subr.mxu0 0.0
    %3045 = vmatpush1.msra.mxu0 0.0
    %3046 = vmatprep.subr.mxu0 0.0
    %3047 = vmatpush1.msra.mxu0 0.0
    %3048 = vmatprep.subr.mxu0 0.0
    %3049 = vmatpush1.msra.mxu0 0.0
    %3050 = vmatprep.subr.mxu0 0.0
    %3051 = vmatpush1.msra.mxu0 0.0
    %3052 = vmatprep.subr.mxu0 0.0
    %3053 = vmatpush1.msra.mxu0 0.0
    %3054 = vmatprep.subr.mxu0 0.0
    %3055 = vmatpush1.msra.mxu0 0.0
    %3056 = vmatprep.subr.mxu0 0.0
    %3057 = vmatpush1.msra.mxu0 0.0
    %3058 = vmatprep.subr.mxu0 0.0
    %3059 = vmatpush1.msra.mxu0 0.0
    %3060 = vmatprep.subr.mxu0 0.0
    %3061 = vmatpush1.msra.mxu0 0.0
    %3062 = vmatprep.subr.mxu0 0.0
    %3063 = vmatpush1.msra.mxu0 0.0
    %3064 = vmatprep.subr.mxu0 0.0
    %3065 = vmatpush1.msra.mxu0 0.0
    %3066 = vmatprep.subr.mxu0 0.0
    %3067 = vmatpush1.msra.mxu0 0.0
    %3068 = vmatprep.subr.mxu0 0.0
    %3069 = vmatpush1.msra.mxu0 0.0
    %3070 = vmatprep.subr.mxu0 0.0
    %3071 = vmatpush1.msra.mxu0 0.0
    %3072 = vmatprep.subr.mxu0 0.0
    %3073 = vmatpush1.msra.mxu0 0.0
    %3074 = vmatprep.subr.mxu0 0.0
    %3075 = vmatpush1.msra.mxu0 0.0
    %3076 = vmatprep.subr.mxu0 0.0
    %3077 = vmatpush1.msra.mxu0 0.0
    %3078 = vmatprep.subr.mxu0 0.0
    %3079 = vmatpush1.msra.mxu0 0.0
    %3080 = vmatprep.subr.mxu0 0.0
    %3081 = vmatpush1.msra.mxu0 0.0
    %3082 = vmatprep.subr.mxu0 0.0
    %3083 = vmatpush1.msra.mxu0 0.0
    %3084 = vmatprep.subr.mxu0 0.0
    %3085 = vmatpush1.msra.mxu0 0.0
    %3086 = vmatprep.subr.mxu0 0.0
    %3087 = vmatpush1.msra.mxu0 0.0
    %3088 = vmatprep.subr.mxu0 0.0
    %3089 = vmatpush1.msra.mxu0 0.0
    %3090 = vmatprep.mubr.f32.mxu0 0.0
    %3091 = vmatmul.mubr.f32.gmra.mrb[0].mxu0 %v3024
    %v3092 = vpop.f32.mrb[0].mxu0
    %v3093 = vadd.f32 0.0, %v3092
    %v3094 = vpop.f32.mrb[0].mxu0
    %v3095 = vadd.f32 0.0, %v3094
    %3096 = vdwg.mxu0
    %3097 = vmatprep.subr.mxu0 %v3022
    %3098 = vmatpush1.msra.mxu0 %v3021
    %3099 = vmatprep.subr.mxu0 0.0
    %3100 = vmatpush1.msra.mxu0 0.0
    %3101 = vmatprep.subr.mxu0 0.0
    %3102 = vmatpush1.msra.mxu0 0.0
    %3103 = vmatprep.subr.mxu0 0.0
    %3104 = vmatpush1.msra.mxu0 0.0
    %3105 = vmatprep.subr.mxu0 0.0
    %3106 = vmatpush1.msra.mxu0 0.0
    %3107 = vmatprep.subr.mxu0 0.0
    %3108 = vmatpush1.msra.mxu0 0.0
    %3109 = vmatprep.subr.mxu0 0.0
    %3110 = vmatpush1.msra.mxu0 0.0
    %3111 = vmatprep.subr.mxu0 0.0
    %3112 = vmatpush1.msra.mxu0 0.0
    %3113 = vmatprep.subr.mxu0 0.0
    %3114 = vmatpush1.msra.mxu0 0.0
    %3115 = vmatprep.subr.mxu0 0.0
    %3116 = vmatpush1.msra.mxu0 0.0
    %3117 = vmatprep.subr.mxu0 0.0
    %3118 = vmatpush1.msra.mxu0 0.0
    %3119 = vmatprep.subr.mxu0 0.0
    %3120 = vmatpush1.msra.mxu0 0.0
    %3121 = vmatprep.subr.mxu0 0.0
    %3122 = vmatpush1.msra.mxu0 0.0
    %3123 = vmatprep.subr.mxu0 0.0
    %3124 = vmatpush1.msra.mxu0 0.0
    %3125 = vmatprep.subr.mxu0 0.0
    %3126 = vmatpush1.msra.mxu0 0.0
    %3127 = vmatprep.subr.mxu0 0.0
    %3128 = vmatpush1.msra.mxu0 0.0
    %3129 = vmatprep.subr.mxu0 0.0
    %3130 = vmatpush1.msra.mxu0 0.0
    %3131 = vmatprep.subr.mxu0 0.0
    %3132 = vmatpush1.msra.mxu0 0.0
    %3133 = vmatprep.subr.mxu0 0.0
    %3134 = vmatpush1.msra.mxu0 0.0
    %3135 = vmatprep.subr.mxu0 0.0
    %3136 = vmatpush1.msra.mxu0 0.0
    %3137 = vmatprep.subr.mxu0 0.0
    %3138 = vmatpush1.msra.mxu0 0.0
    %3139 = vmatprep.subr.mxu0 0.0
    %3140 = vmatpush1.msra.mxu0 0.0
    %3141 = vmatprep.subr.mxu0 0.0
    %3142 = vmatpush1.msra.mxu0 0.0
    %3143 = vmatprep.subr.mxu0 0.0
    %3144 = vmatpush1.msra.mxu0 0.0
    %3145 = vmatprep.subr.mxu0 0.0
    %3146 = vmatpush1.msra.mxu0 0.0
    %3147 = vmatprep.subr.mxu0 0.0
    %3148 = vmatpush1.msra.mxu0 0.0
    %3149 = vmatprep.subr.mxu0 0.0
    %3150 = vmatpush1.msra.mxu0 0.0
    %3151 = vmatprep.subr.mxu0 0.0
    %3152 = vmatpush1.msra.mxu0 0.0
    %3153 = vmatprep.subr.mxu0 0.0
    %3154 = vmatpush1.msra.mxu0 0.0
    %3155 = vmatprep.subr.mxu0 0.0
    %3156 = vmatpush1.msra.mxu0 0.0
    %3157 = vmatprep.subr.mxu0 0.0
    %3158 = vmatpush1.msra.mxu0 0.0
    %3159 = vmatprep.subr.mxu0 0.0
    %3160 = vmatpush1.msra.mxu0 0.0
    %3161 = vmatprep.mubr.f32.mxu0 0.0
    %3162 = vmatmul.mubr.f32.gmra.mrb[0].mxu0 %v3024
    %v3163 = vpop.f32.mrb[0].mxu0
    %v3164 = vadd.f32 0.0, %v3163
    %v3165 = vpop.f32.mrb[0].mxu0
    %v3166 = vadd.f32 0.0, %v3165
    %3167 = vdwg.mxu0
    %v3168 = vlaneseq
    %v3169 = vshrl.u32 %v3168, 7
    %v3170 = vsub.s32 0, %v3169
    %v3171 = vrot.slane %v3093, %v3170
    %v3172 = vlaneseq
    %v3173 = vshrl.u32 %v3172, 7
    %v3174 = vsub.s32 0, %v3173
    %v3175 = vrot.slane %v3095, %v3174
    %v3176 = vlaneseq
    %v3177 = vshrl.u32 %v3176, 7
    %v3178 = vsub.s32 0, %v3177
    %v3179 = vrot.slane %v3164, %v3178
    %v3180 = vlaneseq
    %v3181 = vshrl.u32 %v3180, 7
    %v3182 = vsub.s32 0, %v3181
    %v3183 = vrot.slane %v3166, %v3182
    %v3184 = vmul.f32 %v2664, %v3171
    %v3185 = vmul.f32 %v2665, %v3175
    %v3186 = vmul.f32 %v2666, %v3179
    %v3187 = vmul.f32 %v2667, %v3183
    %v3188 = vlaneseq
    %v3189 = vshrl.u32 %v3188, 7
    %v3190 = vsub.s32 1, %v3189
    %v3191 = vrot.slane %v3093, %v3190
    %v3192 = vlaneseq
    %v3193 = vshrl.u32 %v3192, 7
    %v3194 = vsub.s32 1, %v3193
    %v3195 = vrot.slane %v3095, %v3194
    %v3196 = vlaneseq
    %v3197 = vshrl.u32 %v3196, 7
    %v3198 = vsub.s32 1, %v3197
    %v3199 = vrot.slane %v3164, %v3198
    %v3200 = vlaneseq
    %v3201 = vshrl.u32 %v3200, 7
    %v3202 = vsub.s32 1, %v3201
    %v3203 = vrot.slane %v3166, %v3202
    %v3204 = vadd.f32 %v3184, %v3191
    %v3205 = vadd.f32 %v3185, %v3195
    %v3206 = vadd.f32 %v3186, %v3199
    %v3207 = vadd.f32 %v3187, %v3203
    %v3208 = vpack.c.bf16 %v3204, %v3204
    %v3209 = vpack.c.bf16 %v3205, %v3205
    %v3210 = vpack.c.bf16 %v3206, %v3206
    %v3211 = vpack.c.bf16 %v3207, %v3207
    %v3212 = vld [vmem:[#allocation6] sm:$0xff]
    %v3213 = vld [vmem:[#allocation6 + $0x8] sm:$0xff]
    %v3214 = vld [vmem:[#allocation6 + $0x10] sm:$0xff]
    %v3215 = vld [vmem:[#allocation6 + $0x18] sm:$0xff]
    %v3216 = vld [vmem:[#allocation6 + $0x20] sm:$0xff]
    %v3217 = vld [vmem:[#allocation6 + $0x28] sm:$0xff]
    %v3218 = vld [vmem:[#allocation6 + $0x30] sm:$0xff]
    %v3219 = vld [vmem:[#allocation6 + $0x38] sm:$0xff]
    %v3220 = vld [vmem:[#allocation6 + $0x40] sm:$0xff]
    %v3221 = vld [vmem:[#allocation6 + $0x48] sm:$0xff]
    %v3222 = vld [vmem:[#allocation6 + $0x50] sm:$0xff]
    %v3223 = vld [vmem:[#allocation6 + $0x58] sm:$0xff]
    %v3224 = vld [vmem:[#allocation6 + $0x60] sm:$0xff]
    %v3225 = vld [vmem:[#allocation6 + $0x68] sm:$0xff]
    %v3226 = vld [vmem:[#allocation6 + $0x70] sm:$0xff]
    %v3227 = vld [vmem:[#allocation6 + $0x78] sm:$0xff]
    %v3228 = vld [vmem:[#allocation6 + $0x80] sm:$0xff]
    %v3229 = vld [vmem:[#allocation6 + $0x88] sm:$0xff]
    %v3230 = vld [vmem:[#allocation6 + $0x90] sm:$0xff]
    %v3231 = vld [vmem:[#allocation6 + $0x98] sm:$0xff]
    %v3232 = vld [vmem:[#allocation6 + $0xa0] sm:$0xff]
    %v3233 = vld [vmem:[#allocation6 + $0xa8] sm:$0xff]
    %v3234 = vld [vmem:[#allocation6 + $0xb0] sm:$0xff]
    %v3235 = vld [vmem:[#allocation6 + $0xb8] sm:$0xff]
    %v3236 = vld [vmem:[#allocation6 + $0xc0] sm:$0xff]
    %v3237 = vld [vmem:[#allocation6 + $0xc8] sm:$0xff]
    %v3238 = vld [vmem:[#allocation6 + $0xd0] sm:$0xff]
    %v3239 = vld [vmem:[#allocation6 + $0xd8] sm:$0xff]
    %v3240 = vld [vmem:[#allocation6 + $0xe0] sm:$0xff]
    %v3241 = vld [vmem:[#allocation6 + $0xe8] sm:$0xff]
    %v3242 = vld [vmem:[#allocation6 + $0xf0] sm:$0xff]
    %v3243 = vld [vmem:[#allocation6 + $0xf8] sm:$0xff]
    %v3244 = vld [vmem:[#allocation6 + $0x100] sm:$0xff]
    %v3245 = vld [vmem:[#allocation6 + $0x108] sm:$0xff]
    %v3246 = vld [vmem:[#allocation6 + $0x110] sm:$0xff]
    %v3247 = vld [vmem:[#allocation6 + $0x118] sm:$0xff]
    %v3248 = vld [vmem:[#allocation6 + $0x120] sm:$0xff]
    %v3249 = vld [vmem:[#allocation6 + $0x128] sm:$0xff]
    %v3250 = vld [vmem:[#allocation6 + $0x130] sm:$0xff]
    %v3251 = vld [vmem:[#allocation6 + $0x138] sm:$0xff]
    %v3252 = vld [vmem:[#allocation6 + $0x140] sm:$0xff]
    %v3253 = vld [vmem:[#allocation6 + $0x148] sm:$0xff]
    %v3254 = vld [vmem:[#allocation6 + $0x150] sm:$0xff]
    %v3255 = vld [vmem:[#allocation6 + $0x158] sm:$0xff]
    %v3256 = vld [vmem:[#allocation6 + $0x160] sm:$0xff]
    %v3257 = vld [vmem:[#allocation6 + $0x168] sm:$0xff]
    %v3258 = vld [vmem:[#allocation6 + $0x170] sm:$0xff]
    %v3259 = vld [vmem:[#allocation6 + $0x178] sm:$0xff]
    %v3260 = vld [vmem:[#allocation6 + $0x180] sm:$0xff]
    %v3261 = vld [vmem:[#allocation6 + $0x188] sm:$0xff]
    %v3262 = vld [vmem:[#allocation6 + $0x190] sm:$0xff]
    %v3263 = vld [vmem:[#allocation6 + $0x198] sm:$0xff]
    %v3264 = vld [vmem:[#allocation6 + $0x1a0] sm:$0xff]
    %v3265 = vld [vmem:[#allocation6 + $0x1a8] sm:$0xff]
    %v3266 = vld [vmem:[#allocation6 + $0x1b0] sm:$0xff]
    %v3267 = vld [vmem:[#allocation6 + $0x1b8] sm:$0xff]
    %v3268 = vld [vmem:[#allocation6 + $0x1c0] sm:$0xff]
    %v3269 = vld [vmem:[#allocation6 + $0x1c8] sm:$0xff]
    %v3270 = vld [vmem:[#allocation6 + $0x1d0] sm:$0xff]
    %v3271 = vld [vmem:[#allocation6 + $0x1d8] sm:$0xff]
    %v3272 = vld [vmem:[#allocation6 + $0x1e0] sm:$0xff]
    %v3273 = vld [vmem:[#allocation6 + $0x1e8] sm:$0xff]
    %v3274 = vld [vmem:[#allocation6 + $0x1f0] sm:$0xff]
    %v3275 = vld [vmem:[#allocation6 + $0x1f8] sm:$0xff]
    %s3276 = scalar_lea.vmem %s13, 35
    %v3277 = vld [vmem:[%s3276] ss:$8 sm:$0x3]
    %v3279 = vlaneseq
    %v3280 = vshrl.u32 %v3279, 7
    %v3281 = vsub.s32 0, %v3280
    %v3282 = vrot.slane %v3277, %v3281
    %v3283 = vlaneseq
    %v3284 = vshrl.u32 %v3283, 7
    %v3285 = vsub.s32 1, %v3284
    %v3286 = vrot.slane %v3277, %v3285
    %v3353 = vunpack.c.l.b16 %v3212
    %v3354 = vunpack.c.h.b16 %v3212
    %v3355 = vunpack.c.l.b16 %v3213
    %v3356 = vunpack.c.h.b16 %v3213
    %v3357 = vunpack.c.l.b16 %v3214
    %v3358 = vunpack.c.h.b16 %v3214
    %v3359 = vunpack.c.l.b16 %v3215
    %v3360 = vunpack.c.h.b16 %v3215
    %v3361 = vunpack.c.l.b16 %v3216
    %v3362 = vunpack.c.h.b16 %v3216
    %v3363 = vunpack.c.l.b16 %v3217
    %v3364 = vunpack.c.h.b16 %v3217
    %v3365 = vunpack.c.l.b16 %v3218
    %v3366 = vunpack.c.h.b16 %v3218
    %v3367 = vunpack.c.l.b16 %v3219
    %v3368 = vunpack.c.h.b16 %v3219
    %v3369 = vunpack.c.l.b16 %v3220
    %v3370 = vunpack.c.h.b16 %v3220
    %v3371 = vunpack.c.l.b16 %v3221
    %v3372 = vunpack.c.h.b16 %v3221
    %v3373 = vunpack.c.l.b16 %v3222
    %v3374 = vunpack.c.h.b16 %v3222
    %v3375 = vunpack.c.l.b16 %v3223
    %v3376 = vunpack.c.h.b16 %v3223
    %v3377 = vunpack.c.l.b16 %v3224
    %v3378 = vunpack.c.h.b16 %v3224
    %v3379 = vunpack.c.l.b16 %v3225
    %v3380 = vunpack.c.h.b16 %v3225
    %v3381 = vunpack.c.l.b16 %v3226
    %v3382 = vunpack.c.h.b16 %v3226
    %v3383 = vunpack.c.l.b16 %v3227
    %v3384 = vunpack.c.h.b16 %v3227
    %v3385 = vunpack.c.l.b16 %v3228
    %v3386 = vunpack.c.h.b16 %v3228
    %v3387 = vunpack.c.l.b16 %v3229
    %v3388 = vunpack.c.h.b16 %v3229
    %v3389 = vunpack.c.l.b16 %v3230
    %v3390 = vunpack.c.h.b16 %v3230
    %v3391 = vunpack.c.l.b16 %v3231
    %v3392 = vunpack.c.h.b16 %v3231
    %v3393 = vunpack.c.l.b16 %v3232
    %v3394 = vunpack.c.h.b16 %v3232
    %v3395 = vunpack.c.l.b16 %v3233
    %v3396 = vunpack.c.h.b16 %v3233
    %v3397 = vunpack.c.l.b16 %v3234
    %v3398 = vunpack.c.h.b16 %v3234
    %v3399 = vunpack.c.l.b16 %v3235
    %v3400 = vunpack.c.h.b16 %v3235
    %v3401 = vunpack.c.l.b16 %v3236
    %v3402 = vunpack.c.h.b16 %v3236
    %v3403 = vunpack.c.l.b16 %v3237
    %v3404 = vunpack.c.h.b16 %v3237
    %v3405 = vunpack.c.l.b16 %v3238
    %v3406 = vunpack.c.h.b16 %v3238
    %v3407 = vunpack.c.l.b16 %v3239
    %v3408 = vunpack.c.h.b16 %v3239
    %v3409 = vunpack.c.l.b16 %v3240
    %v3410 = vunpack.c.h.b16 %v3240
    %v3411 = vunpack.c.l.b16 %v3241
    %v3412 = vunpack.c.h.b16 %v3241
    %v3413 = vunpack.c.l.b16 %v3242
    %v3414 = vunpack.c.h.b16 %v3242
    %v3415 = vunpack.c.l.b16 %v3243
    %v3416 = vunpack.c.h.b16 %v3243
    %v3417 = vunpack.c.l.b16 %v3244
    %v3418 = vunpack.c.h.b16 %v3244
    %v3419 = vunpack.c.l.b16 %v3245
    %v3420 = vunpack.c.h.b16 %v3245
    %v3421 = vunpack.c.l.b16 %v3246
    %v3422 = vunpack.c.h.b16 %v3246
    %v3423 = vunpack.c.l.b16 %v3247
    %v3424 = vunpack.c.h.b16 %v3247
    %v3425 = vunpack.c.l.b16 %v3248
    %v3426 = vunpack.c.h.b16 %v3248
    %v3427 = vunpack.c.l.b16 %v3249
    %v3428 = vunpack.c.h.b16 %v3249
    %v3429 = vunpack.c.l.b16 %v3250
    %v3430 = vunpack.c.h.b16 %v3250
    %v3431 = vunpack.c.l.b16 %v3251
    %v3432 = vunpack.c.h.b16 %v3251
    %v3433 = vunpack.c.l.b16 %v3252
    %v3434 = vunpack.c.h.b16 %v3252
    %v3435 = vunpack.c.l.b16 %v3253
    %v3436 = vunpack.c.h.b16 %v3253
    %v3437 = vunpack.c.l.b16 %v3254
    %v3438 = vunpack.c.h.b16 %v3254
    %v3439 = vunpack.c.l.b16 %v3255
    %v3440 = vunpack.c.h.b16 %v3255
    %v3441 = vunpack.c.l.b16 %v3256
    %v3442 = vunpack.c.h.b16 %v3256
    %v3443 = vunpack.c.l.b16 %v3257
    %v3444 = vunpack.c.h.b16 %v3257
    %v3445 = vunpack.c.l.b16 %v3258
    %v3446 = vunpack.c.h.b16 %v3258
    %v3447 = vunpack.c.l.b16 %v3259
    %v3448 = vunpack.c.h.b16 %v3259
    %v3449 = vunpack.c.l.b16 %v3260
    %v3450 = vunpack.c.h.b16 %v3260
    %v3451 = vunpack.c.l.b16 %v3261
    %v3452 = vunpack.c.h.b16 %v3261
    %v3453 = vunpack.c.l.b16 %v3262
    %v3454 = vunpack.c.h.b16 %v3262
    %v3455 = vunpack.c.l.b16 %v3263
    %v3456 = vunpack.c.h.b16 %v3263
    %v3457 = vunpack.c.l.b16 %v3264
    %v3458 = vunpack.c.h.b16 %v3264
    %v3459 = vunpack.c.l.b16 %v3265
    %v3460 = vunpack.c.h.b16 %v3265
    %v3461 = vunpack.c.l.b16 %v3266
    %v3462 = vunpack.c.h.b16 %v3266
    %v3463 = vunpack.c.l.b16 %v3267
    %v3464 = vunpack.c.h.b16 %v3267
    %v3465 = vunpack.c.l.b16 %v3268
    %v3466 = vunpack.c.h.b16 %v3268
    %v3467 = vunpack.c.l.b16 %v3269
    %v3468 = vunpack.c.h.b16 %v3269
    %v3469 = vunpack.c.l.b16 %v3270
    %v3470 = vunpack.c.h.b16 %v3270
    %v3471 = vunpack.c.l.b16 %v3271
    %v3472 = vunpack.c.h.b16 %v3271
    %v3473 = vunpack.c.l.b16 %v3272
    %v3474 = vunpack.c.h.b16 %v3272
    %v3475 = vunpack.c.l.b16 %v3273
    %v3476 = vunpack.c.h.b16 %v3273
    %v3477 = vunpack.c.l.b16 %v3274
    %v3478 = vunpack.c.h.b16 %v3274
    %v3479 = vunpack.c.l.b16 %v3275
    %v3480 = vunpack.c.h.b16 %v3275
    %v3481 = vpack.c.b16 %v3355, %v3353
    %v3482 = vpack.c.b16 %v3356, %v3354
    %v3483 = vpack.c.b16 %v3359, %v3357
    %v3484 = vpack.c.b16 %v3360, %v3358
    %v3485 = vpack.c.b16 %v3363, %v3361
    %v3486 = vpack.c.b16 %v3364, %v3362
    %v3487 = vpack.c.b16 %v3367, %v3365
    %v3488 = vpack.c.b16 %v3368, %v3366
    %v3489 = vpack.c.b16 %v3371, %v3369
    %v3490 = vpack.c.b16 %v3372, %v3370
    %v3491 = vpack.c.b16 %v3375, %v3373
    %v3492 = vpack.c.b16 %v3376, %v3374
    %v3493 = vpack.c.b16 %v3379, %v3377
    %v3494 = vpack.c.b16 %v3380, %v3378
    %v3495 = vpack.c.b16 %v3383, %v3381
    %v3496 = vpack.c.b16 %v3384, %v3382
    %v3497 = vpack.c.b16 %v3387, %v3385
    %v3498 = vpack.c.b16 %v3388, %v3386
    %v3499 = vpack.c.b16 %v3391, %v3389
    %v3500 = vpack.c.b16 %v3392, %v3390
    %v3501 = vpack.c.b16 %v3395, %v3393
    %v3502 = vpack.c.b16 %v3396, %v3394
    %v3503 = vpack.c.b16 %v3399, %v3397
    %v3504 = vpack.c.b16 %v3400, %v3398
    %v3505 = vpack.c.b16 %v3403, %v3401
    %v3506 = vpack.c.b16 %v3404, %v3402
    %v3507 = vpack.c.b16 %v3407, %v3405
    %v3508 = vpack.c.b16 %v3408, %v3406
    %v3509 = vpack.c.b16 %v3411, %v3409
    %v3510 = vpack.c.b16 %v3412, %v3410
    %v3511 = vpack.c.b16 %v3415, %v3413
    %v3512 = vpack.c.b16 %v3416, %v3414
    %v3513 = vpack.c.b16 %v3419, %v3417
    %v3514 = vpack.c.b16 %v3420, %v3418
    %v3515 = vpack.c.b16 %v3423, %v3421
    %v3516 = vpack.c.b16 %v3424, %v3422
    %v3517 = vpack.c.b16 %v3427, %v3425
    %v3518 = vpack.c.b16 %v3428, %v3426
    %v3519 = vpack.c.b16 %v3431, %v3429
    %v3520 = vpack.c.b16 %v3432, %v3430
    %v3521 = vpack.c.b16 %v3435, %v3433
    %v3522 = vpack.c.b16 %v3436, %v3434
    %v3523 = vpack.c.b16 %v3439, %v3437
    %v3524 = vpack.c.b16 %v3440, %v3438
    %v3525 = vpack.c.b16 %v3443, %v3441
    %v3526 = vpack.c.b16 %v3444, %v3442
    %v3527 = vpack.c.b16 %v3447, %v3445
    %v3528 = vpack.c.b16 %v3448, %v3446
    %v3529 = vpack.c.b16 %v3451, %v3449
    %v3530 = vpack.c.b16 %v3452, %v3450
    %v3531 = vpack.c.b16 %v3455, %v3453
    %v3532 = vpack.c.b16 %v3456, %v3454
    %v3533 = vpack.c.b16 %v3459, %v3457
    %v3534 = vpack.c.b16 %v3460, %v3458
    %v3535 = vpack.c.b16 %v3463, %v3461
    %v3536 = vpack.c.b16 %v3464, %v3462
    %v3537 = vpack.c.b16 %v3467, %v3465
    %v3538 = vpack.c.b16 %v3468, %v3466
    %v3539 = vpack.c.b16 %v3471, %v3469
    %v3540 = vpack.c.b16 %v3472, %v3470
    %v3541 = vpack.c.b16 %v3475, %v3473
    %v3542 = vpack.c.b16 %v3476, %v3474
    %v3543 = vpack.c.b16 %v3479, %v3477
    %v3544 = vpack.c.b16 %v3480, %v3478
    %3609 = vmatprep.subr.bf16.mxu0 %v3482
    %3610 = vmatpush1.bf16.msra.mxu0 %v3481
    %3611 = vmatprep.subr.bf16.mxu0 %v3484
    %3612 = vmatpush1.bf16.msra.mxu0 %v3483
    %3613 = vmatprep.subr.bf16.mxu0 %v3486
    %3614 = vmatpush1.bf16.msra.mxu0 %v3485
    %3615 = vmatprep.subr.bf16.mxu0 %v3488
    %3616 = vmatpush1.bf16.msra.mxu0 %v3487
    %3617 = vmatprep.subr.bf16.mxu0 %v3490
    %3618 = vmatpush1.bf16.msra.mxu0 %v3489
    %3619 = vmatprep.subr.bf16.mxu0 %v3492
    %3620 = vmatpush1.bf16.msra.mxu0 %v3491
    %3621 = vmatprep.subr.bf16.mxu0 %v3494
    %3622 = vmatpush1.bf16.msra.mxu0 %v3493
    %3623 = vmatprep.subr.bf16.mxu0 %v3496
    %3624 = vmatpush1.bf16.msra.mxu0 %v3495
    %3625 = vmatprep.subr.bf16.mxu0 %v3498
    %3626 = vmatpush1.bf16.msra.mxu0 %v3497
    %3627 = vmatprep.subr.bf16.mxu0 %v3500
    %3628 = vmatpush1.bf16.msra.mxu0 %v3499
    %3629 = vmatprep.subr.bf16.mxu0 %v3502
    %3630 = vmatpush1.bf16.msra.mxu0 %v3501
    %3631 = vmatprep.subr.bf16.mxu0 %v3504
    %3632 = vmatpush1.bf16.msra.mxu0 %v3503
    %3633 = vmatprep.subr.bf16.mxu0 %v3506
    %3634 = vmatpush1.bf16.msra.mxu0 %v3505
    %3635 = vmatprep.subr.bf16.mxu0 %v3508
    %3636 = vmatpush1.bf16.msra.mxu0 %v3507
    %3637 = vmatprep.subr.bf16.mxu0 %v3510
    %3638 = vmatpush1.bf16.msra.mxu0 %v3509
    %3639 = vmatprep.subr.bf16.mxu0 %v3512
    %3640 = vmatpush1.bf16.msra.mxu0 %v3511
    %3641 = vmatprep.mubr.bf16.mxu0 %v3209
    %3642 = vmatmul.mubr.bf16.gmra.mrb[0].mxu0 %v3208
    %v3643 = vpop.f32.mrb[0].mxu0
    %v3644 = vadd.f32 %v3282, %v3643
    %v3645 = vpop.f32.mrb[0].mxu0
    %v3646 = vadd.f32 %v3286, %v3645
    %v3647 = vpop.f32.mrb[0].mxu0
    %v3648 = vpop.f32.mrb[0].mxu0
    %3649 = vdwg.mxu0
    %3650 = vmatprep.subr.bf16.mxu0 %v3514
    %3651 = vmatpush1.bf16.msra.mxu0 %v3513
    %3652 = vmatprep.subr.bf16.mxu0 %v3516
    %3653 = vmatpush1.bf16.msra.mxu0 %v3515
    %3654 = vmatprep.subr.bf16.mxu0 %v3518
    %3655 = vmatpush1.bf16.msra.mxu0 %v3517
    %3656 = vmatprep.subr.bf16.mxu0 %v3520
    %3657 = vmatpush1.bf16.msra.mxu0 %v3519
    %3658 = vmatprep.subr.bf16.mxu0 %v3522
    %3659 = vmatpush1.bf16.msra.mxu0 %v3521
    %3660 = vmatprep.subr.bf16.mxu0 %v3524
    %3661 = vmatpush1.bf16.msra.mxu0 %v3523
    %3662 = vmatprep.subr.bf16.mxu0 %v3526
    %3663 = vmatpush1.bf16.msra.mxu0 %v3525
    %3664 = vmatprep.subr.bf16.mxu0 %v3528
    %3665 = vmatpush1.bf16.msra.mxu0 %v3527
    %3666 = vmatprep.subr.bf16.mxu0 %v3530
    %3667 = vmatpush1.bf16.msra.mxu0 %v3529
    %3668 = vmatprep.subr.bf16.mxu0 %v3532
    %3669 = vmatpush1.bf16.msra.mxu0 %v3531
    %3670 = vmatprep.subr.bf16.mxu0 %v3534
    %3671 = vmatpush1.bf16.msra.mxu0 %v3533
    %3672 = vmatprep.subr.bf16.mxu0 %v3536
    %3673 = vmatpush1.bf16.msra.mxu0 %v3535
    %3674 = vmatprep.subr.bf16.mxu0 %v3538
    %3675 = vmatpush1.bf16.msra.mxu0 %v3537
    %3676 = vmatprep.subr.bf16.mxu0 %v3540
    %3677 = vmatpush1.bf16.msra.mxu0 %v3539
    %3678 = vmatprep.subr.bf16.mxu0 %v3542
    %3679 = vmatpush1.bf16.msra.mxu0 %v3541
    %3680 = vmatprep.subr.bf16.mxu0 %v3544
    %3681 = vmatpush1.bf16.msra.mxu0 %v3543
    %3682 = vmatprep.mubr.bf16.mxu0 %v3211
    %3683 = vmatmul.mubr.bf16.gmra.mrb[0].mxu0 %v3210
    %v3684 = vpop.f32.mrb[0].mxu0
    %v3685 = vadd.f32 %v3644, %v3684
    %v3686 = vpop.f32.mrb[0].mxu0
    %v3687 = vadd.f32 %v3646, %v3686
    %v3688 = vpop.f32.mrb[0].mxu0
    %v3689 = vpop.f32.mrb[0].mxu0
    %3690 = vdwg.mxu0
    %v3691 = vmul.f32 %v3685, 0.5
    %v3692 = vmul.f32 %v3687, 0.5
    %v3693 = vtanh.pop %v3691
    %v3694 = vtanh.pop %v3692
    %v3695 = vadd.f32 %v3693, 1.0
    %v3696 = vadd.f32 %v3694, 1.0
    %v3697 = vmul.f32 %v3695, 0.5
    %v3698 = vmul.f32 %v3696, 0.5
    %3699 = vst [vmem:[%s14] sm:$0xff] %v3697
    %3700 = vst [vmem:[%s14 + $0x8] sm:$0xff] %v3698
    // Predicated region
    $region70: #{autoencoder_forward.1} parent=1 // pred_check
      _
    $region71: #{autoencoder_forward.1} parent=1 // pred_check_branch
      %3702 = sbr.rel (0) target = $region73
    $region72: #{autoencoder_forward.1} parent=1 // pred_region
      _
    $region73: #{autoencoder_forward.1} parent=1 // pred_fallthru
      _
    // Predicated region
    $region74: #{autoencoder_forward.1} parent=1 // pred_check
      _
    $region75: #{autoencoder_forward.1} parent=1 // pred_check_branch
      %3704 = sbr.rel (0) target = $region77
    $region76: #{autoencoder_forward.1} parent=1 // pred_region
      _
    $region77: #{autoencoder_forward.1} parent=1 // pred_fallthru
      _
    %3705 = vsyncpa [#allocation3], 1
    %3706 = vsyncpa [#allocation5], 1

</llo_original>
